<compile_context>
chip_gen: v7x
topology: tpu7x:2x2x1
jax: 0.10.0
libtpu: 0.0.40
codegen_flags: <defaults>
</compile_context>

<pallas_src>
from functools import partial

import jax
import jax.numpy as jnp
from jax import lax
from jax.experimental import pallas as pl
from jax.experimental.pallas import tpu as pltpu


def attention_kernel(x_ref, wqkv_ref, wout_ref, bout_ref, o_ref, *,
                     heads, dim_head, q_tile, kv_tile):
    # x_ref    : (1, C, HW)      f32, one batch element, channels-first
    # wqkv_ref : (3*hidden, C)   bf16, to_qkv 1x1-conv weight (scale folded into Q rows)
    # wout_ref : (C, hidden)     bf16, to_out 1x1-conv weight
    # bout_ref : (C, 1)          f32, to_out bias
    # o_ref    : (1, C, HW)      f32
    hidden = heads * dim_head
    hw = x_ref.shape[-1]
    n_q = hw // q_tile
    n_kv = hw // kv_tile

    # to_qkv: 1x1 conv == channel matmul in channels-first layout (bf16 MXU,
    # f32 accumulate).  ONE bf16 cast covers q, k and v together.
    x = x_ref[0].astype(jnp.bfloat16)                                # (C, HW)
    qkv = jnp.dot(wqkv_ref[...], x, preferred_element_type=jnp.float32)
    qkv = qkv.astype(jnp.bfloat16)                                   # (3*hidden, HW)

    # Row slices at multiples of `hidden` and (hidden, HW) -> (heads, D, HW)
    # reshapes are sublane-aligned (hidden, dim_head multiples of 8).
    q = qkv[0 * hidden:1 * hidden].reshape(heads, dim_head, hw)      # scale pre-folded
    k = qkv[1 * hidden:2 * hidden].reshape(heads, dim_head, hw)
    v = qkv[2 * hidden:3 * hidden].reshape(heads, dim_head, hw)

    # Flash-style streaming.  Trip counts are static, so these are plain
    # Python loops; at HW=256 both are single-iteration straight-line code.
    for qi in range(n_q):
        q_blk = q[:, :, qi * q_tile:(qi + 1) * q_tile]               # (H, D, TQ)

        m = None    # running row-max  (H, TQ, 1) f32
        l = None    # running row-sum  (H, TQ, 1) f32
        acc = None  # running PV accum (H, D, TQ) f32
        for kj in range(n_kv):
            k_blk = k[:, :, kj * kv_tile:(kj + 1) * kv_tile]         # (H, D, TKV)
            v_blk = v[:, :, kj * kv_tile:(kj + 1) * kv_tile]         # (H, D, TKV)

            # sim[h, i, j] = sum_d q[h, d, i] * k[h, d, j]
            # (transposed-LHS MXU feed: no vxpose of q, k is never transposed)
            sim = lax.dot_general(
                q_blk, k_blk,
                dimension_numbers=(((1,), (1,)), ((0,), (0,))),
                preferred_element_type=jnp.float32)                  # (H, TQ, TKV)

            m_blk = jnp.max(sim, axis=-1, keepdims=True)             # (H, TQ, 1)
            m_new = m_blk if kj == 0 else jnp.maximum(m, m_blk)

            # Single-expression softmax numerator, all-f32 (v5e-safe);
            # max-subtracted so values are in (0, 1] and bf16-safe.
            p = jnp.exp(sim - m_new)                                 # (H, TQ, TKV)
            l_blk = jnp.sum(p, axis=-1, keepdims=True)               # (H, TQ, 1)

            # Deferred normalization: UN-normalized p goes into the PV matmul.
            # pv[h, d, i] = sum_j v[h, d, j] * p[h, i, j]  (batched NT form)
            pv = lax.dot_general(
                v_blk, p.astype(jnp.bfloat16),
                dimension_numbers=(((2,), (2,)), ((0,), (0,))),
                preferred_element_type=jnp.float32)                  # (H, D, TQ)

            if kj == 0:
                l, acc = l_blk, pv
            else:
                alpha = jnp.exp(m - m_new)                           # (H, TQ, 1)
                l = alpha * l + l_blk
                # (H, TQ, 1) -> (H, 1, TQ): tiny per-head XLU transpose.
                acc = jnp.swapaxes(alpha, -1, -2) * acc + pv
            m = m_new

        # Apply 1/l to the (H, D, TQ) output, not the (H, TQ, TKV) probs.
        # TODO(synk): switch to approx=False (or one Newton step) if tighter
        #   accuracy vs the f32 reference is ever required.
        inv_l = pl.reciprocal(l, approx=True)                        # (H, TQ, 1)
        out_blk = (acc * jnp.swapaxes(inv_l, -1, -2)).astype(jnp.bfloat16)
        out_blk = out_blk.reshape(hidden, q_tile)                    # head-major channels

        # to_out: 1x1 conv with bias (bf16 MXU, f32 acc); lane-dense store.
        y = jnp.dot(wout_ref[...], out_blk, preferred_element_type=jnp.float32)
        if n_q == 1:
            o_ref[0] = y + bout_ref[...]
        else:
            o_ref[0, :, qi * q_tile:(qi + 1) * q_tile] = y + bout_ref[...]


def _pick_tiles(hw):
    """Flash tile sizes: q_tile=256 / kv_tile=512 when they divide HW; fall
    back to untiled for small or non-128-multiple spatial sizes."""
    if hw % 128 != 0:
        return hw, hw
    q_tile = 256 if hw % 256 == 0 else 128
    kv_tile = 512 if hw % 512 == 0 else q_tile
    # TODO(synk): halve kv_tile on v7x (64 MiB VMEM) for very large HW.
    return min(q_tile, hw), min(kv_tile, hw)


def attention_pallas(x_nchw, wqkv, wout, bout, *, heads, dim_head):
    """x_nchw: (B, C, H, W) f32.  wqkv: (3*hidden, C, 1, 1), wout: (C, hidden, 1, 1), bout: (C,)."""
    b, c, h, w = x_nchw.shape
    hw = h * w
    hidden = heads * dim_head
    scale = float(dim_head) ** (-0.5)

    # Layout guards: the in-kernel slices/reshapes are relayout-free only when
    # these hold (HW a multiple of 128 additionally gives fully lane-dense stores).
    assert hidden % 8 == 0 and dim_head % 8 == 0, "hidden/dim_head must be multiples of 8"
    assert hw % 8 == 0, "H*W must be a multiple of 8"

    q_tile, kv_tile = _pick_tiles(hw)

    # Glue: NCHW -> (B, C, HW) is a pure reshape (no transpose in / out).
    x = x_nchw.reshape(b, c, hw)

    # Parameter-only preprocessing: conv weights -> matmul weights, fold the
    # softmax scale into the Q rows, pre-cast weights to bf16 for the MXU.
    wqkv_m = wqkv.reshape(3 * hidden, c)
    wqkv_m = wqkv_m.at[:hidden].multiply(scale).astype(jnp.bfloat16)
    wout_m = wout.reshape(c, hidden).astype(jnp.bfloat16)
    bout_m = bout.reshape(c, 1).astype(jnp.float32)

    kernel = partial(attention_kernel, heads=heads, dim_head=dim_head,
                     q_tile=q_tile, kv_tile=kv_tile)

    flops = 2 * b * (hw * c * 3 * hidden                    # to_qkv
                     + heads * 2 * hw * hw * dim_head       # QK^T + PV
                     + hw * hidden * c)                     # to_out
    transcendentals = b * heads * hw * hw                   # exp
    bytes_accessed = (4 * (x.size + b * c * hw)
                      + 2 * (wqkv_m.size + wout_m.size) + 4 * bout_m.size)

    # Shape-derived VMEM budget, clamped to 48 MiB (headroom on v7x's 64 MiB).
    vmem_bytes = (
        2 * 2 * c * hw * 4                               # double-buffered x / o blocks
        + 3 * hidden * hw * (4 + 2 + 2)                  # qkv f32 + bf16 + q/k/v views
        + heads * q_tile * kv_tile * (4 + 2)             # p (f32) + p (bf16)
        + 2 * heads * dim_head * q_tile * 4              # acc + pv
        + (3 * hidden * c + c * hidden) * 2 + c * 4      # weights + bias
    )
    vmem_limit = int(min(max(2 * vmem_bytes, 16 << 20), 48 << 20))

    out = pl.pallas_call(
        kernel,
        out_shape=jax.ShapeDtypeStruct((b, c, hw), jnp.float32),
        grid=(b,),
        in_specs=[
            pl.BlockSpec((1, c, hw), lambda i: (i, 0, 0)),
            pl.BlockSpec((3 * hidden, c), lambda i: (0, 0)),
            pl.BlockSpec((c, hidden), lambda i: (0, 0)),
            pl.BlockSpec((c, 1), lambda i: (0, 0)),
        ],
        out_specs=pl.BlockSpec((1, c, hw), lambda i: (i, 0, 0)),
        compiler_params=pltpu.CompilerParams(
            dimension_semantics=("parallel",),
            vmem_limit_bytes=vmem_limit,
        ),
        cost_estimate=pl.CostEstimate(
            flops=flops,
            transcendentals=transcendentals,
            bytes_accessed=bytes_accessed,
        ),
    )(x, wqkv_m, wout_m, bout_m)

    # TODO(synk): on single-TC chips (v5e/v6e), fold the batch into one grid
    #   step (8-sublane-aligned x/o DMA, no per-step overhead); on v7x add a
    #   parallel heads grid axis when B == 1 so both TensorCores get work.
    # TODO(synk): optional fp8 (e4m3) PV matmul on v7x, gated on accuracy.
    # Glue: (B, C, HW) -> NCHW is a pure reshape again.
    return out.reshape(b, c, h, w)


def attention_ref(x, wqkv, wout, bout, *, heads, dim_head):
    """Pure-JAX f32 reference mirroring the PyTorch forward exactly."""
    b, c, h, w = x.shape
    hidden = heads * dim_head
    scale = float(dim_head) ** (-0.5)

    qkv = jnp.einsum('bchw,oc->bohw', x, wqkv.reshape(3 * hidden, c))
    q, k, v = jnp.split(qkv, 3, axis=1)                     # each (B, hidden, H, W)

    def resh(t):  # 'b (h c) x y -> b h c (x y)'
        return t.reshape(b, heads, dim_head, h * w)

    q = resh(q) * scale
    k = resh(k)
    v = resh(v)
    sim = jnp.einsum('bhdi,bhdj->bhij', q, k)
    sim = sim - jnp.max(sim, axis=-1, keepdims=True)
    attn = jax.nn.softmax(sim, axis=-1)
    out = jnp.einsum('bhij,bhdj->bhid', attn, v)            # (B, heads, HW, D)
    out = jnp.transpose(out, (0, 1, 3, 2)).reshape(b, hidden, h, w)
    return jnp.einsum('bchw,oc->bohw', out, wout.reshape(c, hidden)) + bout.reshape(1, c, 1, 1)


if __name__ == "__main__":
    # Module defaults: dim=4, heads=4, dim_head=32 -> hidden=128; 16x16 spatial.
    B, DIM, H, W = 2, 4, 16, 16
    HEADS, DIM_HEAD = 4, 32
    HIDDEN = HEADS * DIM_HEAD

    key = jax.random.PRNGKey(0)
    kx, kq, kw, kb = jax.random.split(key, 4)

    x = jax.random.normal(kx, (B, DIM, H, W), dtype=jnp.float32)
    # Conv2d(dim, hidden*3, 1, bias=False) weight: (3*hidden, dim, 1, 1)
    wqkv = jax.random.normal(kq, (3 * HIDDEN, DIM, 1, 1), dtype=jnp.float32) * 0.1
    # Conv2d(hidden, dim, 1) weight: (dim, hidden, 1, 1), bias: (dim,)
    wout = jax.random.normal(kw, (DIM, HIDDEN, 1, 1), dtype=jnp.float32) * 0.1
    bout = jax.random.normal(kb, (DIM,), dtype=jnp.float32) * 0.1

    y = attention_pallas(x, wqkv, wout, bout, heads=HEADS, dim_head=DIM_HEAD)
    y = jax.block_until_ready(y)

    y_ref = attention_ref(x, wqkv, wout, bout, heads=HEADS, dim_head=DIM_HEAD)
    assert y.shape == (B, DIM, H, W)
    # bf16 MXU inputs (f32 accumulation / f32 softmax) -> relaxed tolerance.
    assert jnp.allclose(y, y_ref, atol=1e-2, rtol=1e-2), "Pallas output mismatch vs reference"

    print("KERNEL_OK")
</pallas_src>

<mosaic_0001>
module attributes {stable_mosaic.version = 11 : i64} {
  func.func @attention_kernel(%arg0: i32, %arg1: memref<1x4x256xf32, #tpu.memory_space<vmem>>, %arg2: memref<384x4xbf16, #tpu.memory_space<vmem>>, %arg3: memref<4x128xbf16, #tpu.memory_space<vmem>>, %arg4: memref<4x1xf32, #tpu.memory_space<vmem>>, %arg5: memref<1x4x256xf32, #tpu.memory_space<vmem>>) attributes {dimension_semantics = [#tpu.dimension_semantics<parallel>], iteration_bounds = array<i64: 2>, scalar_prefetch = 0 : i64, scratch_operands = 0 : i64, tpu.core_type = #tpu.core_type<tc>, window_params = [{transform_indices = @transform_0, window_bounds = array<i64: 1, 4, 256>}, {pipeline_mode = #tpu.pipeline_mode<synchronous>, transform_indices = @transform_1, window_bounds = array<i64: 384, 4>}, {pipeline_mode = #tpu.pipeline_mode<synchronous>, transform_indices = @transform_2, window_bounds = array<i64: 4, 128>}, {pipeline_mode = #tpu.pipeline_mode<synchronous>, transform_indices = @transform_3, window_bounds = array<i64: 4, 1>}, {transform_indices = @transform_4, window_bounds = array<i64: 1, 4, 256>}]} {
    %c0 = arith.constant 0 : index
    %c0_0 = arith.constant 0 : index
    %c0_1 = arith.constant 0 : index
    %0 = vector.load %arg1[%c0, %c0_0, %c0_1] : memref<1x4x256xf32, #tpu.memory_space<vmem>>, vector<1x4x256xf32>
    %1 = vector.shape_cast %0 : vector<1x4x256xf32> to vector<4x256xf32>
    %2 = arith.truncf %1 : vector<4x256xf32> to vector<4x256xbf16>
    %c0_2 = arith.constant 0 : index
    %c0_3 = arith.constant 0 : index
    %3 = vector.load %arg2[%c0_2, %c0_3] : memref<384x4xbf16, #tpu.memory_space<vmem>>, vector<384x4xbf16>
    %cst = arith.constant dense<0.000000e+00> : vector<384x256xf32>
    %4 = tpu.matmul %3, %2, %cst {dimension_numbers = #tpu.dot_dimension_numbers<[1], [0], [0], [1], [0, 0, 1, 1], [], []>} : vector<384x4xbf16>, vector<4x256xbf16>, vector<384x256xf32> -> vector<384x256xf32>
    %5 = arith.truncf %4 : vector<384x256xf32> to vector<384x256xbf16>
    %6 = vector.extract_strided_slice %5 {offsets = [0, 0], sizes = [128, 256], strides = [1, 1]} : vector<384x256xbf16> to vector<128x256xbf16>
    %7 = vector.shape_cast %6 : vector<128x256xbf16> to vector<4x32x256xbf16>
    %8 = vector.extract_strided_slice %5 {offsets = [128, 0], sizes = [128, 256], strides = [1, 1]} : vector<384x256xbf16> to vector<128x256xbf16>
    %9 = vector.shape_cast %8 : vector<128x256xbf16> to vector<4x32x256xbf16>
    %10 = vector.extract_strided_slice %5 {offsets = [256, 0], sizes = [128, 256], strides = [1, 1]} : vector<384x256xbf16> to vector<128x256xbf16>
    %11 = vector.shape_cast %10 : vector<128x256xbf16> to vector<4x32x256xbf16>
    %cst_4 = arith.constant dense<0.000000e+00> : vector<4x256x256xf32>
    %12 = tpu.matmul %7, %9, %cst_4 {dimension_numbers = #tpu.dot_dimension_numbers<[1], [1], [2], [2], [0, 0, 0, 2, 1, 2], [0], [0]>} : vector<4x32x256xbf16>, vector<4x32x256xbf16>, vector<4x256x256xf32> -> vector<4x256x256xf32>
    %cst_5 = arith.constant dense<0xFF800000> : vector<4x256xf32>
    %13 = vector.multi_reduction <maximumf>, %12, %cst_5 [2] : vector<4x256x256xf32> to vector<4x256xf32>
    %14 = vector.shape_cast %13 : vector<4x256xf32> to vector<4x256x1xf32>
    %15 = vector.broadcast %14 : vector<4x256x1xf32> to vector<4x256x256xf32>
    %16 = arith.subf %12, %15 : vector<4x256x256xf32>
    %17 = math.exp %16 : vector<4x256x256xf32>
    %cst_6 = arith.constant dense<0.000000e+00> : vector<4x256xf32>
    %18 = vector.multi_reduction <add>, %17, %cst_6 [2] : vector<4x256x256xf32> to vector<4x256xf32>
    %19 = vector.shape_cast %18 : vector<4x256xf32> to vector<4x256x1xf32>
    %20 = arith.truncf %17 : vector<4x256x256xf32> to vector<4x256x256xbf16>
    %cst_7 = arith.constant dense<0.000000e+00> : vector<4x32x256xf32>
    %21 = tpu.matmul %11, %20, %cst_7 {dimension_numbers = #tpu.dot_dimension_numbers<[2], [2], [1], [1], [0, 0, 0, 1, 1, 1], [0], [0]>} : vector<4x32x256xbf16>, vector<4x256x256xbf16>, vector<4x32x256xf32> -> vector<4x32x256xf32>
    %22 = tpu.reciprocal %19 {approx = true} : vector<4x256x1xf32> -> vector<4x256x1xf32>
    %23 = tpu.transpose %22, [0, 2, 1] : vector<4x256x1xf32> -> vector<4x1x256xf32>
    %24 = vector.broadcast %23 : vector<4x1x256xf32> to vector<4x32x256xf32>
    %25 = arith.mulf %21, %24 : vector<4x32x256xf32>
    %26 = arith.truncf %25 : vector<4x32x256xf32> to vector<4x32x256xbf16>
    %27 = vector.shape_cast %26 : vector<4x32x256xbf16> to vector<128x256xbf16>
    %c0_8 = arith.constant 0 : index
    %c0_9 = arith.constant 0 : index
    %28 = vector.load %arg3[%c0_8, %c0_9] : memref<4x128xbf16, #tpu.memory_space<vmem>>, vector<4x128xbf16>
    %cst_10 = arith.constant dense<0.000000e+00> : vector<4x256xf32>
    %29 = tpu.matmul %28, %27, %cst_10 {dimension_numbers = #tpu.dot_dimension_numbers<[1], [0], [0], [1], [0, 0, 1, 1], [], []>} : vector<4x128xbf16>, vector<128x256xbf16>, vector<4x256xf32> -> vector<4x256xf32>
    %c0_11 = arith.constant 0 : index
    %c0_12 = arith.constant 0 : index
    %30 = vector.load %arg4[%c0_11, %c0_12] : memref<4x1xf32, #tpu.memory_space<vmem>>, vector<4x1xf32>
    %31 = vector.broadcast %30 : vector<4x1xf32> to vector<4x256xf32>
    %32 = arith.addf %29, %31 : vector<4x256xf32>
    %c0_13 = arith.constant 0 : index
    %c0_14 = arith.constant 0 : index
    %c0_15 = arith.constant 0 : index
    %33 = vector.load %arg5[%c0_13, %c0_14, %c0_15] : memref<1x4x256xf32, #tpu.memory_space<vmem>>, vector<1x4x256xf32>
    %34 = vector.shape_cast %33 : vector<1x4x256xf32> to vector<4x256xf32>
    %35 = vector.shape_cast %32 : vector<4x256xf32> to vector<1x4x256xf32>
    tpu.vector_store %arg5[%c0_13, %c0_14, %c0_15], %35 {strides = array<i32>} : memref<1x4x256xf32, #tpu.memory_space<vmem>>, vector<1x4x256xf32>,
    return
  }
  func.func @transform_0(%arg0: i32) -> (i32, i32, i32) {
    %c0_i32 = arith.constant 0 : i32
    %c0_i32_0 = arith.constant 0 : i32
    %c0_i32_1 = arith.constant 0 : i32
    return %arg0, %c0_i32, %c0_i32_0 : i32, i32, i32
  }
  func.func @transform_1(%arg0: i32) -> (i32, i32) {
    %c0_i32 = arith.constant 0 : i32
    %c0_i32_0 = arith.constant 0 : i32
    %c0_i32_1 = arith.constant 0 : i32
    return %c0_i32, %c0_i32_0 : i32, i32
  }
  func.func @transform_2(%arg0: i32) -> (i32, i32) {
    %c0_i32 = arith.constant 0 : i32
    %c0_i32_0 = arith.constant 0 : i32
    %c0_i32_1 = arith.constant 0 : i32
    return %c0_i32, %c0_i32_0 : i32, i32
  }
  func.func @transform_3(%arg0: i32) -> (i32, i32) {
    %c0_i32 = arith.constant 0 : i32
    %c0_i32_0 = arith.constant 0 : i32
    %c0_i32_1 = arith.constant 0 : i32
    return %c0_i32, %c0_i32_0 : i32, i32
  }
  func.func @transform_4(%arg0: i32) -> (i32, i32, i32) {
    %c0_i32 = arith.constant 0 : i32
    %c0_i32_0 = arith.constant 0 : i32
    %c0_i32_1 = arith.constant 0 : i32
    return %arg0, %c0_i32, %c0_i32_0 : i32, i32, i32
  }
}

</mosaic_0001>

<llo_original>
// kernel: tpu_custom_call.1
$region0: #{tpu_custom_call.1}
  #allocation0 [shape = 'u32[]', space=smem, size = 0x4, offset = 0x4, fixed_abs, tag = 'smem constant byte address 0x4 - core index']
  #allocation1 [shape = 'u32[144,128]{1,0:T(1,128)}', space=vmem, size = 0x12000, scoped, tag = 'internal scratch']
  %s0 = inlined_call_operand.vmem [shape: f32[2,4,256], index: 0, kind: input, shape index: {}]
  %s1 = inlined_call_operand.vmem [shape: bf16[384,4], index: 1, kind: input, shape index: {}]
  %s2 = inlined_call_operand.vmem [shape: bf16[4,128], index: 2, kind: input, shape index: {}]
  %s3 = inlined_call_operand.vmem [shape: f32[4,1], index: 3, kind: input, shape index: {}]
  %s4 = inlined_call_operand.hbm [shape: f32[2,4,256], index: 4, kind: output, shape index: {}]
  %s5 = sld [smem:[#allocation0]]
  $region49: #{tpu_custom_call.1} parent=0
    _
  %s7 = ssub.s32 1, %s5
  %s8 = scalar_select 0, %s7, %s5
  $region1: #{tpu_custom_call.1} parent=0
    #allocation2 [shape = 'u8[8192]{0}', space=vmem, size = 0x2000, scoped, tag = 'output window, operand 0']
    #allocation3 [shape = 's32[2]{0}', space=sflag, size = 0x8, scoped, tag = 'scoped memory for tpu_custom_call.1']
    %9 = vsyncpa [#allocation3], 0
    %s10 = scalar_lea.sflag [#allocation3], 1
    %11 = vsyncpa %s10, 0
    loop: start=0, step=1, limit=4
    $region2: #{tpu_custom_call.1} parent=1 // loop_pre_header
      _
    $region3: #{tpu_custom_call.1} parent=1 // loop_header
      %s13 = sphi 0, %s17
      %p14 = scmp.ge.s32.totalorder %s13, 4
      %s23 = sphi 0, %s25
      %s26 = sphi 0, %s23
      %s27 = sphi 0, %s26
      %s43 = sphi 0, %s27
      %s47 = sphi 0, %s47
      %s49 = sphi 0, %s47
      %s50 = sphi 0, %s49
      %s64 = sphi 0, %s50
      %s68 = sphi 0, %s68
      %s70 = sphi 0, %s68
      %s71 = sphi 0, %s70
      %s85 = sphi 0, %s71
      %s89 = sphi 0, %s89
      %s91 = sphi 0, %s89
      %s92 = sphi 0, %s91
      %s106 = sphi 0, %s92
      %s112 = sphi 0, %s114
      %s115 = sphi 0, %s112
      %s116 = sphi 0, %s115
      %s132 = sphi 0, %s116
    $region4: #{tpu_custom_call.1} parent=1 // loop_header_branch
      %16 = sbr.rel (%p14) target = $region8
    $region5: #{tpu_custom_call.1} parent=1 // loop_body
      %s18 = ssub.s32 %s13, 1
      %s19 = ssub.s32 %s13, 2
      %s20 = sadd.s32 %s13, 1
      %s21 = ssub.s32 %s13, %s20
      %p22 = scmp.eq.s32.totalorder %s21, 0
      %s24 = sadd.s32 %s23, 1
      %s25 = scalar_select %p22, %s23, %s24
      %p28 = pneg %p22
      %p29 = scmp.eq.s32.totalorder %s13, 1
      %p30 = por %p28, %p29
      %p31 = scmp.ne.s32.totalorder %s23, %s26
      %p32 = scmp.eq.s32.totalorder %s13, 0
      %p33 = por %p31, %p32
      %p34 = scmp.ne.s32.totalorder %s23, %s26
      %p35 = scmp.eq.s32.totalorder %s18, 1
      %p36 = por %p34, %p35
      %p37 = scmp.ne.s32.totalorder %s26, %s27
      %p38 = scmp.eq.s32.totalorder %s18, 0
      %p39 = por %p37, %p38
      %p40 = scmp.ne.s32.totalorder %s26, %s27
      %p41 = scmp.eq.s32.totalorder %s19, 1
      %p42 = por %p40, %p41
      %p44 = scmp.ne.s32.totalorder %s27, %s43
      %p45 = scmp.eq.s32.totalorder %s19, 0
      %p46 = por %p44, %p45
      %s48 = sadd.s32 %s47, 1
      %p51 = scmp.eq.s32.totalorder %s13, 1
      %p52 = scmp.ne.s32.totalorder %s47, %s49
      %p53 = scmp.eq.s32.totalorder %s13, 0
      %p54 = por %p52, %p53
      %p55 = scmp.ne.s32.totalorder %s47, %s49
      %p56 = scmp.eq.s32.totalorder %s18, 1
      %p57 = por %p55, %p56
      %p58 = scmp.ne.s32.totalorder %s49, %s50
      %p59 = scmp.eq.s32.totalorder %s18, 0
      %p60 = por %p58, %p59
      %p61 = scmp.ne.s32.totalorder %s49, %s50
      %p62 = scmp.eq.s32.totalorder %s19, 1
      %p63 = por %p61, %p62
      %p65 = scmp.ne.s32.totalorder %s50, %s64
      %p66 = scmp.eq.s32.totalorder %s19, 0
      %p67 = por %p65, %p66
      %s69 = sadd.s32 %s68, 1
      %p72 = scmp.eq.s32.totalorder %s13, 1
      %p73 = scmp.ne.s32.totalorder %s68, %s70
      %p74 = scmp.eq.s32.totalorder %s13, 0
      %p75 = por %p73, %p74
      %p76 = scmp.ne.s32.totalorder %s68, %s70
      %p77 = scmp.eq.s32.totalorder %s18, 1
      %p78 = por %p76, %p77
      %p79 = scmp.ne.s32.totalorder %s70, %s71
      %p80 = scmp.eq.s32.totalorder %s18, 0
      %p81 = por %p79, %p80
      %p82 = scmp.ne.s32.totalorder %s70, %s71
      %p83 = scmp.eq.s32.totalorder %s19, 1
      %p84 = por %p82, %p83
      %p86 = scmp.ne.s32.totalorder %s71, %s85
      %p87 = scmp.eq.s32.totalorder %s19, 0
      %p88 = por %p86, %p87
      %s90 = sadd.s32 %s89, 1
      %p93 = scmp.eq.s32.totalorder %s13, 1
      %p94 = scmp.ne.s32.totalorder %s89, %s91
      %p95 = scmp.eq.s32.totalorder %s13, 0
      %p96 = por %p94, %p95
      %p97 = scmp.ne.s32.totalorder %s89, %s91
      %p98 = scmp.eq.s32.totalorder %s18, 1
      %p99 = por %p97, %p98
      %p100 = scmp.ne.s32.totalorder %s91, %s92
      %p101 = scmp.eq.s32.totalorder %s18, 0
      %p102 = por %p100, %p101
      %p103 = scmp.ne.s32.totalorder %s91, %s92
      %p104 = scmp.eq.s32.totalorder %s19, 1
      %p105 = por %p103, %p104
      %p107 = scmp.ne.s32.totalorder %s92, %s106
      %p108 = scmp.eq.s32.totalorder %s19, 0
      %p109 = por %p107, %p108
      %s110 = ssub.s32 %s13, %s20
      %p111 = scmp.eq.s32.totalorder %s110, 0
      %s113 = sadd.s32 %s112, 1
      %s114 = scalar_select %p111, %s112, %s113
      %p117 = pneg %p111
      %p118 = scmp.eq.s32.totalorder %s13, 1
      %p119 = por %p117, %p118
      %p120 = scmp.ne.s32.totalorder %s112, %s115
      %p121 = scmp.eq.s32.totalorder %s13, 0
      %p122 = por %p120, %p121
      %p123 = scmp.ne.s32.totalorder %s112, %s115
      %p124 = scmp.eq.s32.totalorder %s18, 1
      %p125 = por %p123, %p124
      %p126 = scmp.ne.s32.totalorder %s115, %s116
      %p127 = scmp.eq.s32.totalorder %s18, 0
      %p128 = por %p126, %p127
      %p129 = scmp.ne.s32.totalorder %s115, %s116
      %p130 = scmp.eq.s32.totalorder %s19, 1
      %p131 = por %p129, %p130
      %p133 = scmp.ne.s32.totalorder %s116, %s132
      %p134 = scmp.eq.s32.totalorder %s19, 0
      %p135 = por %p133, %p134
      %p136 = scmp.le.s32.totalorder 1, %s13
      %p137 = scmp.lt.s32.totalorder %s13, 3
      %p138 = pnand %p136, %p137
      %p139 = pneg %p138
      // Predicated region
      $region9: #{tpu_custom_call.1} parent=5 // pred_check
        _
      $region10: #{tpu_custom_call.1} parent=5 // pred_check_branch
        %141 = sbr.rel (%p138) target = $region12
      $region11: #{tpu_custom_call.1} parent=5 // pred_region
        %s142 = ssub.s32 %s13, 1
        // Predicated region
        $region13: #{tpu_custom_call.1} parent=11 // pred_check
          %p143 = pneg %p60
        $region14: #{tpu_custom_call.1} parent=11 // pred_check_branch
          %145 = sbr.rel (%p143) target = $region16
        $region15: #{tpu_custom_call.1} parent=11 // pred_region
          _
        $region16: #{tpu_custom_call.1} parent=11 // pred_fallthru
          _
        // Predicated region
        $region17: #{tpu_custom_call.1} parent=11 // pred_check
          %p146 = pneg %p81
        $region18: #{tpu_custom_call.1} parent=11 // pred_check_branch
          %148 = sbr.rel (%p146) target = $region20
        $region19: #{tpu_custom_call.1} parent=11 // pred_region
          _
        $region20: #{tpu_custom_call.1} parent=11 // pred_fallthru
          _
        // Predicated region
        $region21: #{tpu_custom_call.1} parent=11 // pred_check
          %p149 = pneg %p102
        $region22: #{tpu_custom_call.1} parent=11 // pred_check_branch
          %151 = sbr.rel (%p149) target = $region24
        $region23: #{tpu_custom_call.1} parent=11 // pred_region
          _
        $region24: #{tpu_custom_call.1} parent=11 // pred_fallthru
          _
      $region12: #{tpu_custom_call.1} parent=5 // pred_fallthru
        _
      %p152 = scmp.lt.s32.totalorder %s13, 2
      // Predicated region
      $region25: #{tpu_custom_call.1} parent=5 // pred_check
        %p153 = pneg %p152
      $region26: #{tpu_custom_call.1} parent=5 // pred_check_branch
        %155 = sbr.rel (%p153) target = $region28
      $region27: #{tpu_custom_call.1} parent=5 // pred_region
        // Predicated region
        $region29: #{tpu_custom_call.1} parent=27 // pred_check
          %p156 = pneg %p33
        $region30: #{tpu_custom_call.1} parent=27 // pred_check_branch
          %158 = sbr.rel (%p156) target = $region32
        $region31: #{tpu_custom_call.1} parent=27 // pred_region
          %p159 = scmp.lt.s32.totalorder %s13, 1
          %s160 = scalar_select %p159, %s13, 1
          %s161 = smul.addr %s160, 2
          %s162 = smul.addr %s161, 4
          %s163 = scalar_lea.vmem %s0, %s162
        $region32: #{tpu_custom_call.1} parent=27 // pred_fallthru
          _
      $region28: #{tpu_custom_call.1} parent=5 // pred_fallthru
        _
      %p164 = scmp.le.s32.totalorder 1, %s13
      %p165 = scmp.lt.s32.totalorder %s13, 3
      %p166 = pnand %p164, %p165
      %p167 = pneg %p166
      // Predicated region
      $region33: #{tpu_custom_call.1} parent=5 // pred_check
        _
      $region34: #{tpu_custom_call.1} parent=5 // pred_check_branch
        %169 = sbr.rel (%p166) target = $region36
      $region35: #{tpu_custom_call.1} parent=5 // pred_region
        %s170 = ssub.s32 %s13, 1
        %p171 = scmp.lt.s32.totalorder %s18, 1
        %s172 = scalar_select %p171, %s18, 1
        %s173 = smul.addr %s172, 2
        %s174 = smul.addr %s173, 4
        %s175 = scalar_lea.vmem %s0, %s174
        %p176 = pneg %p39
        %p177 = pneg %p36
        %p178 = pneg %p60
        %p179 = pneg %p57
        %p180 = pneg %p81
        %p181 = pneg %p78
        %p182 = pneg %p102
        %p183 = pneg %p99
        %p184 = pneg %p128
        %p185 = pneg %p125
        %s186 = sand.u32 %s115, 1
        %s187 = scalar_lea.sflag [#allocation3], %s186
        %s188 = sand.u32 %s115, 1
        %s189 = smul.addr %s188, 8
        %s190 = scalar_lea.vmem [#allocation2], %s189
        %p191 = scmp.lt.s32.totalorder %s18, 1
        %s192 = scalar_select %p191, %s18, 1
        %s193 = smul.addr %s192, 2
        %s194 = smul.addr %s193, 4
        %s195 = scalar_lea.vmem %s0, %s194
        %v197 = vld [vmem:[%s195] sm:$0xff]
        %v199 = vcombine.high %v197, %v197
        %v201 = vpack.c.bf16 %v197, %v197
        %v202 = vpack.c.bf16 %v199, %v199
        %v203 = vld [vmem:[%s1] sm:$0xf]
        %v204 = vld [vmem:[%s1 + $0x4] sm:$0xf]
        %v205 = vld [vmem:[%s1 + $0x8] sm:$0xf]
        %v206 = vld [vmem:[%s1 + $0xc] sm:$0xf]
        %v207 = vld [vmem:[%s1 + $0x10] sm:$0xf]
        %v208 = vld [vmem:[%s1 + $0x14] sm:$0xf]
        %v209 = vld [vmem:[%s1 + $0x18] sm:$0xf]
        %v210 = vld [vmem:[%s1 + $0x1c] sm:$0xf]
        %v211 = vld [vmem:[%s1 + $0x20] sm:$0xf]
        %v212 = vld [vmem:[%s1 + $0x24] sm:$0xf]
        %v213 = vld [vmem:[%s1 + $0x28] sm:$0xf]
        %v214 = vld [vmem:[%s1 + $0x2c] sm:$0xf]
        %v215 = vld [vmem:[%s1 + $0x30] sm:$0xf]
        %v216 = vld [vmem:[%s1 + $0x34] sm:$0xf]
        %v217 = vld [vmem:[%s1 + $0x38] sm:$0xf]
        %v218 = vld [vmem:[%s1 + $0x3c] sm:$0xf]
        %v219 = vld [vmem:[%s1 + $0x40] sm:$0xf]
        %v220 = vld [vmem:[%s1 + $0x44] sm:$0xf]
        %v221 = vld [vmem:[%s1 + $0x48] sm:$0xf]
        %v222 = vld [vmem:[%s1 + $0x4c] sm:$0xf]
        %v223 = vld [vmem:[%s1 + $0x50] sm:$0xf]
        %v224 = vld [vmem:[%s1 + $0x54] sm:$0xf]
        %v225 = vld [vmem:[%s1 + $0x58] sm:$0xf]
        %v226 = vld [vmem:[%s1 + $0x5c] sm:$0xf]
        %v227 = vld [vmem:[%s1 + $0x60] sm:$0xf]
        %v228 = vld [vmem:[%s1 + $0x64] sm:$0xf]
        %v229 = vld [vmem:[%s1 + $0x68] sm:$0xf]
        %v230 = vld [vmem:[%s1 + $0x6c] sm:$0xf]
        %v231 = vld [vmem:[%s1 + $0x70] sm:$0xf]
        %v232 = vld [vmem:[%s1 + $0x74] sm:$0xf]
        %v233 = vld [vmem:[%s1 + $0x78] sm:$0xf]
        %v234 = vld [vmem:[%s1 + $0x7c] sm:$0xf]
        %v235 = vld [vmem:[%s1 + $0x80] sm:$0xf]
        %v236 = vld [vmem:[%s1 + $0x84] sm:$0xf]
        %v237 = vld [vmem:[%s1 + $0x88] sm:$0xf]
        %v238 = vld [vmem:[%s1 + $0x8c] sm:$0xf]
        %v239 = vld [vmem:[%s1 + $0x90] sm:$0xf]
        %v240 = vld [vmem:[%s1 + $0x94] sm:$0xf]
        %v241 = vld [vmem:[%s1 + $0x98] sm:$0xf]
        %v242 = vld [vmem:[%s1 + $0x9c] sm:$0xf]
        %v243 = vld [vmem:[%s1 + $0xa0] sm:$0xf]
        %v244 = vld [vmem:[%s1 + $0xa4] sm:$0xf]
        %v245 = vld [vmem:[%s1 + $0xa8] sm:$0xf]
        %v246 = vld [vmem:[%s1 + $0xac] sm:$0xf]
        %v247 = vld [vmem:[%s1 + $0xb0] sm:$0xf]
        %v248 = vld [vmem:[%s1 + $0xb4] sm:$0xf]
        %v249 = vld [vmem:[%s1 + $0xb8] sm:$0xf]
        %v250 = vld [vmem:[%s1 + $0xbc] sm:$0xf]
        %v299 = vunpack.c.l.b16 %v203
        %v300 = vunpack.c.l.b16 %v204
        %v301 = vunpack.c.l.b16 %v205
        %v302 = vunpack.c.l.b16 %v206
        %v303 = vunpack.c.l.b16 %v207
        %v304 = vunpack.c.l.b16 %v208
        %v305 = vunpack.c.l.b16 %v209
        %v306 = vunpack.c.l.b16 %v210
        %v307 = vunpack.c.l.b16 %v211
        %v308 = vunpack.c.l.b16 %v212
        %v309 = vunpack.c.l.b16 %v213
        %v310 = vunpack.c.l.b16 %v214
        %v311 = vunpack.c.l.b16 %v215
        %v312 = vunpack.c.l.b16 %v216
        %v313 = vunpack.c.l.b16 %v217
        %v314 = vunpack.c.l.b16 %v218
        %v315 = vunpack.c.l.b16 %v219
        %v316 = vunpack.c.l.b16 %v220
        %v317 = vunpack.c.l.b16 %v221
        %v318 = vunpack.c.l.b16 %v222
        %v319 = vunpack.c.l.b16 %v223
        %v320 = vunpack.c.l.b16 %v224
        %v321 = vunpack.c.l.b16 %v225
        %v322 = vunpack.c.l.b16 %v226
        %v323 = vunpack.c.l.b16 %v227
        %v324 = vunpack.c.l.b16 %v228
        %v325 = vunpack.c.l.b16 %v229
        %v326 = vunpack.c.l.b16 %v230
        %v327 = vunpack.c.l.b16 %v231
        %v328 = vunpack.c.l.b16 %v232
        %v329 = vunpack.c.l.b16 %v233
        %v330 = vunpack.c.l.b16 %v234
        %v331 = vunpack.c.l.b16 %v235
        %v332 = vunpack.c.l.b16 %v236
        %v333 = vunpack.c.l.b16 %v237
        %v334 = vunpack.c.l.b16 %v238
        %v335 = vunpack.c.l.b16 %v239
        %v336 = vunpack.c.l.b16 %v240
        %v337 = vunpack.c.l.b16 %v241
        %v338 = vunpack.c.l.b16 %v242
        %v339 = vunpack.c.l.b16 %v243
        %v340 = vunpack.c.l.b16 %v244
        %v341 = vunpack.c.l.b16 %v245
        %v342 = vunpack.c.l.b16 %v246
        %v343 = vunpack.c.l.b16 %v247
        %v344 = vunpack.c.l.b16 %v248
        %v345 = vunpack.c.l.b16 %v249
        %v346 = vunpack.c.l.b16 %v250
        %v347 = vpack.c.b16 %v300, %v299
        %v348 = vpack.c.b16 %v302, %v301
        %v349 = vpack.c.b16 %v304, %v303
        %v350 = vpack.c.b16 %v306, %v305
        %v351 = vpack.c.b16 %v308, %v307
        %v352 = vpack.c.b16 %v310, %v309
        %v353 = vpack.c.b16 %v312, %v311
        %v354 = vpack.c.b16 %v314, %v313
        %v355 = vpack.c.b16 %v316, %v315
        %v356 = vpack.c.b16 %v318, %v317
        %v357 = vpack.c.b16 %v320, %v319
        %v358 = vpack.c.b16 %v322, %v321
        %v359 = vpack.c.b16 %v324, %v323
        %v360 = vpack.c.b16 %v326, %v325
        %v361 = vpack.c.b16 %v328, %v327
        %v362 = vpack.c.b16 %v330, %v329
        %v363 = vpack.c.b16 %v332, %v331
        %v364 = vpack.c.b16 %v334, %v333
        %v365 = vpack.c.b16 %v336, %v335
        %v366 = vpack.c.b16 %v338, %v337
        %v367 = vpack.c.b16 %v340, %v339
        %v368 = vpack.c.b16 %v342, %v341
        %v369 = vpack.c.b16 %v344, %v343
        %v370 = vpack.c.b16 %v346, %v345
        %vm371 = vcmask 31744
        %v373 = vsel %vm371, %v347, 0
        %v376 = vsel %vm371, %v348, 0
        %v379 = vsel %vm371, %v349, 0
        %v382 = vsel %vm371, %v350, 0
        %v385 = vsel %vm371, %v351, 0
        %v388 = vsel %vm371, %v352, 0
        %v391 = vsel %vm371, %v353, 0
        %v394 = vsel %vm371, %v354, 0
        %v397 = vsel %vm371, %v355, 0
        %v400 = vsel %vm371, %v356, 0
        %v403 = vsel %vm371, %v357, 0
        %v406 = vsel %vm371, %v358, 0
        %v409 = vsel %vm371, %v359, 0
        %v412 = vsel %vm371, %v360, 0
        %v415 = vsel %vm371, %v361, 0
        %v418 = vsel %vm371, %v362, 0
        %v421 = vsel %vm371, %v363, 0
        %v424 = vsel %vm371, %v364, 0
        %v427 = vsel %vm371, %v365, 0
        %v430 = vsel %vm371, %v366, 0
        %v433 = vsel %vm371, %v367, 0
        %v436 = vsel %vm371, %v368, 0
        %v439 = vsel %vm371, %v369, 0
        %v442 = vsel %vm371, %v370, 0
        %vm444 = vcmask 1041408
        %v446 = vsel %vm444, %v201, 0
        %v449 = vsel %vm444, %v202, 0
        %451 = vmatprep.subr.bf16.mxu0 %v449
        %452 = vmatpush1.bf16.msra.mxu0 %v446
        %453 = vmatprep.subr.bf16.mxu0 0
        %454 = vmatpush1.bf16.msra.mxu0 0
        %455 = vmatprep.subr.bf16.mxu0 0
        %456 = vmatpush1.bf16.msra.mxu0 0
        %457 = vmatprep.subr.bf16.mxu0 0
        %458 = vmatpush1.bf16.msra.mxu0 0
        %459 = vmatprep.subr.bf16.mxu0 0
        %460 = vmatpush1.bf16.msra.mxu0 0
        %461 = vmatprep.subr.bf16.mxu0 0
        %462 = vmatpush1.bf16.msra.mxu0 0
        %463 = vmatprep.subr.bf16.mxu0 0
        %464 = vmatpush1.bf16.msra.mxu0 0
        %465 = vmatprep.subr.bf16.mxu0 0
        %466 = vmatpush1.bf16.msra.mxu0 0
        %467 = vmatprep.subr.bf16.mxu0 0
        %468 = vmatpush1.bf16.msra.mxu0 0
        %469 = vmatprep.subr.bf16.mxu0 0
        %470 = vmatpush1.bf16.msra.mxu0 0
        %471 = vmatprep.subr.bf16.mxu0 0
        %472 = vmatpush1.bf16.msra.mxu0 0
        %473 = vmatprep.subr.bf16.mxu0 0
        %474 = vmatpush1.bf16.msra.mxu0 0
        %475 = vmatprep.subr.bf16.mxu0 0
        %476 = vmatpush1.bf16.msra.mxu0 0
        %477 = vmatprep.subr.bf16.mxu0 0
        %478 = vmatpush1.bf16.msra.mxu0 0
        %479 = vmatprep.subr.bf16.mxu0 0
        %480 = vmatpush1.bf16.msra.mxu0 0
        %481 = vmatprep.subr.bf16.mxu0 0
        %482 = vmatpush1.bf16.msra.mxu0 0
        %483 = vmatprep.mubr.bf16.mxu0 0
        %484 = vmatmul.mubr.bf16.gmra.mrb[0].mxu0 %v373
        %v485 = vpop.f32.mrb[0].mxu0
        %v486 = vadd.f32 0.0, %v485
        %v487 = vpop.f32.mrb[0].mxu0
        %v488 = vadd.f32 0.0, %v487
        %v489 = vpop.f32.mrb[0].mxu0
        %v490 = vadd.f32 0.0, %v489
        %v491 = vpop.f32.mrb[0].mxu0
        %v492 = vadd.f32 0.0, %v491
        %493 = vmatprep.mubr.bf16.mxu0 0
        %494 = vmatmul.mubr.bf16.gmra.mrb[0].mxu0 %v376
        %v495 = vpop.f32.mrb[0].mxu0
        %v496 = vadd.f32 0.0, %v495
        %v497 = vpop.f32.mrb[0].mxu0
        %v498 = vadd.f32 0.0, %v497
        %v499 = vpop.f32.mrb[0].mxu0
        %v500 = vadd.f32 0.0, %v499
        %v501 = vpop.f32.mrb[0].mxu0
        %v502 = vadd.f32 0.0, %v501
        %503 = vmatprep.mubr.bf16.mxu0 0
        %504 = vmatmul.mubr.bf16.gmra.mrb[0].mxu0 %v379
        %v505 = vpop.f32.mrb[0].mxu0
        %v506 = vadd.f32 0.0, %v505
        %v507 = vpop.f32.mrb[0].mxu0
        %v508 = vadd.f32 0.0, %v507
        %v509 = vpop.f32.mrb[0].mxu0
        %v510 = vadd.f32 0.0, %v509
        %v511 = vpop.f32.mrb[0].mxu0
        %v512 = vadd.f32 0.0, %v511
        %513 = vmatprep.mubr.bf16.mxu0 0
        %514 = vmatmul.mubr.bf16.gmra.mrb[0].mxu0 %v382
        %v515 = vpop.f32.mrb[0].mxu0
        %v516 = vadd.f32 0.0, %v515
        %v517 = vpop.f32.mrb[0].mxu0
        %v518 = vadd.f32 0.0, %v517
        %v519 = vpop.f32.mrb[0].mxu0
        %v520 = vadd.f32 0.0, %v519
        %v521 = vpop.f32.mrb[0].mxu0
        %v522 = vadd.f32 0.0, %v521
        %523 = vmatprep.mubr.bf16.mxu0 0
        %524 = vmatmul.mubr.bf16.gmra.mrb[0].mxu0 %v385
        %v525 = vpop.f32.mrb[0].mxu0
        %v526 = vadd.f32 0.0, %v525
        %v527 = vpop.f32.mrb[0].mxu0
        %v528 = vadd.f32 0.0, %v527
        %v529 = vpop.f32.mrb[0].mxu0
        %v530 = vadd.f32 0.0, %v529
        %v531 = vpop.f32.mrb[0].mxu0
        %v532 = vadd.f32 0.0, %v531
        %533 = vmatprep.mubr.bf16.mxu0 0
        %534 = vmatmul.mubr.bf16.gmra.mrb[0].mxu0 %v388
        %v535 = vpop.f32.mrb[0].mxu0
        %v536 = vadd.f32 0.0, %v535
        %v537 = vpop.f32.mrb[0].mxu0
        %v538 = vadd.f32 0.0, %v537
        %v539 = vpop.f32.mrb[0].mxu0
        %v540 = vadd.f32 0.0, %v539
        %v541 = vpop.f32.mrb[0].mxu0
        %v542 = vadd.f32 0.0, %v541
        %543 = vmatprep.mubr.bf16.mxu0 0
        %544 = vmatmul.mubr.bf16.gmra.mrb[0].mxu0 %v391
        %v545 = vpop.f32.mrb[0].mxu0
        %v546 = vadd.f32 0.0, %v545
        %v547 = vpop.f32.mrb[0].mxu0
        %v548 = vadd.f32 0.0, %v547
        %v549 = vpop.f32.mrb[0].mxu0
        %v550 = vadd.f32 0.0, %v549
        %v551 = vpop.f32.mrb[0].mxu0
        %v552 = vadd.f32 0.0, %v551
        %553 = vmatprep.mubr.bf16.mxu0 0
        %554 = vmatmul.mubr.bf16.gmra.mrb[0].mxu0 %v394
        %v555 = vpop.f32.mrb[0].mxu0
        %v556 = vadd.f32 0.0, %v555
        %v557 = vpop.f32.mrb[0].mxu0
        %v558 = vadd.f32 0.0, %v557
        %v559 = vpop.f32.mrb[0].mxu0
        %v560 = vadd.f32 0.0, %v559
        %v561 = vpop.f32.mrb[0].mxu0
        %v562 = vadd.f32 0.0, %v561
        %563 = vmatprep.mubr.bf16.mxu0 0
        %564 = vmatmul.mubr.bf16.gmra.mrb[0].mxu0 %v397
        %v565 = vpop.f32.mrb[0].mxu0
        %v566 = vadd.f32 0.0, %v565
        %v567 = vpop.f32.mrb[0].mxu0
        %v568 = vadd.f32 0.0, %v567
        %v569 = vpop.f32.mrb[0].mxu0
        %v570 = vadd.f32 0.0, %v569
        %v571 = vpop.f32.mrb[0].mxu0
        %v572 = vadd.f32 0.0, %v571
        %573 = vmatprep.mubr.bf16.mxu0 0
        %574 = vmatmul.mubr.bf16.gmra.mrb[0].mxu0 %v400
        %v575 = vpop.f32.mrb[0].mxu0
        %v576 = vadd.f32 0.0, %v575
        %v577 = vpop.f32.mrb[0].mxu0
        %v578 = vadd.f32 0.0, %v577
        %v579 = vpop.f32.mrb[0].mxu0
        %v580 = vadd.f32 0.0, %v579
        %v581 = vpop.f32.mrb[0].mxu0
        %v582 = vadd.f32 0.0, %v581
        %583 = vmatprep.mubr.bf16.mxu0 0
        %584 = vmatmul.mubr.bf16.gmra.mrb[0].mxu0 %v403
        %v585 = vpop.f32.mrb[0].mxu0
        %v586 = vadd.f32 0.0, %v585
        %v587 = vpop.f32.mrb[0].mxu0
        %v588 = vadd.f32 0.0, %v587
        %v589 = vpop.f32.mrb[0].mxu0
        %v590 = vadd.f32 0.0, %v589
        %v591 = vpop.f32.mrb[0].mxu0
        %v592 = vadd.f32 0.0, %v591
        %593 = vmatprep.mubr.bf16.mxu0 0
        %594 = vmatmul.mubr.bf16.gmra.mrb[0].mxu0 %v406
        %v595 = vpop.f32.mrb[0].mxu0
        %v596 = vadd.f32 0.0, %v595
        %v597 = vpop.f32.mrb[0].mxu0
        %v598 = vadd.f32 0.0, %v597
        %v599 = vpop.f32.mrb[0].mxu0
        %v600 = vadd.f32 0.0, %v599
        %v601 = vpop.f32.mrb[0].mxu0
        %v602 = vadd.f32 0.0, %v601
        %603 = vmatprep.mubr.bf16.mxu0 0
        %604 = vmatmul.mubr.bf16.gmra.mrb[0].mxu0 %v409
        %v605 = vpop.f32.mrb[0].mxu0
        %v606 = vadd.f32 0.0, %v605
        %v607 = vpop.f32.mrb[0].mxu0
        %v608 = vadd.f32 0.0, %v607
        %v609 = vpop.f32.mrb[0].mxu0
        %v610 = vadd.f32 0.0, %v609
        %v611 = vpop.f32.mrb[0].mxu0
        %v612 = vadd.f32 0.0, %v611
        %613 = vmatprep.mubr.bf16.mxu0 0
        %614 = vmatmul.mubr.bf16.gmra.mrb[0].mxu0 %v412
        %v615 = vpop.f32.mrb[0].mxu0
        %v616 = vadd.f32 0.0, %v615
        %v617 = vpop.f32.mrb[0].mxu0
        %v618 = vadd.f32 0.0, %v617
        %v619 = vpop.f32.mrb[0].mxu0
        %v620 = vadd.f32 0.0, %v619
        %v621 = vpop.f32.mrb[0].mxu0
        %v622 = vadd.f32 0.0, %v621
        %623 = vmatprep.mubr.bf16.mxu0 0
        %624 = vmatmul.mubr.bf16.gmra.mrb[0].mxu0 %v415
        %v625 = vpop.f32.mrb[0].mxu0
        %v626 = vadd.f32 0.0, %v625
        %v627 = vpop.f32.mrb[0].mxu0
        %v628 = vadd.f32 0.0, %v627
        %v629 = vpop.f32.mrb[0].mxu0
        %v630 = vadd.f32 0.0, %v629
        %v631 = vpop.f32.mrb[0].mxu0
        %v632 = vadd.f32 0.0, %v631
        %633 = vmatprep.mubr.bf16.mxu0 0
        %634 = vmatmul.mubr.bf16.gmra.mrb[0].mxu0 %v418
        %v635 = vpop.f32.mrb[0].mxu0
        %v636 = vadd.f32 0.0, %v635
        %v637 = vpop.f32.mrb[0].mxu0
        %v638 = vadd.f32 0.0, %v637
        %v639 = vpop.f32.mrb[0].mxu0
        %v640 = vadd.f32 0.0, %v639
        %v641 = vpop.f32.mrb[0].mxu0
        %v642 = vadd.f32 0.0, %v641
        %643 = vmatprep.mubr.bf16.mxu0 0
        %644 = vmatmul.mubr.bf16.gmra.mrb[0].mxu0 %v421
        %v645 = vpop.f32.mrb[0].mxu0
        %v646 = vadd.f32 0.0, %v645
        %v647 = vpop.f32.mrb[0].mxu0
        %v648 = vadd.f32 0.0, %v647
        %v649 = vpop.f32.mrb[0].mxu0
        %v650 = vadd.f32 0.0, %v649
        %v651 = vpop.f32.mrb[0].mxu0
        %v652 = vadd.f32 0.0, %v651
        %653 = vmatprep.mubr.bf16.mxu0 0
        %654 = vmatmul.mubr.bf16.gmra.mrb[0].mxu0 %v424
        %v655 = vpop.f32.mrb[0].mxu0
        %v656 = vadd.f32 0.0, %v655
        %v657 = vpop.f32.mrb[0].mxu0
        %v658 = vadd.f32 0.0, %v657
        %v659 = vpop.f32.mrb[0].mxu0
        %v660 = vadd.f32 0.0, %v659
        %v661 = vpop.f32.mrb[0].mxu0
        %v662 = vadd.f32 0.0, %v661
        %663 = vmatprep.mubr.bf16.mxu0 0
        %664 = vmatmul.mubr.bf16.gmra.mrb[0].mxu0 %v427
        %v665 = vpop.f32.mrb[0].mxu0
        %v666 = vadd.f32 0.0, %v665
        %v667 = vpop.f32.mrb[0].mxu0
        %v668 = vadd.f32 0.0, %v667
        %v669 = vpop.f32.mrb[0].mxu0
        %v670 = vadd.f32 0.0, %v669
        %v671 = vpop.f32.mrb[0].mxu0
        %v672 = vadd.f32 0.0, %v671
        %673 = vmatprep.mubr.bf16.mxu0 0
        %674 = vmatmul.mubr.bf16.gmra.mrb[0].mxu0 %v430
        %v675 = vpop.f32.mrb[0].mxu0
        %v676 = vadd.f32 0.0, %v675
        %v677 = vpop.f32.mrb[0].mxu0
        %v678 = vadd.f32 0.0, %v677
        %v679 = vpop.f32.mrb[0].mxu0
        %v680 = vadd.f32 0.0, %v679
        %v681 = vpop.f32.mrb[0].mxu0
        %v682 = vadd.f32 0.0, %v681
        %683 = vmatprep.mubr.bf16.mxu0 0
        %684 = vmatmul.mubr.bf16.gmra.mrb[0].mxu0 %v433
        %v685 = vpop.f32.mrb[0].mxu0
        %v686 = vadd.f32 0.0, %v685
        %v687 = vpop.f32.mrb[0].mxu0
        %v688 = vadd.f32 0.0, %v687
        %v689 = vpop.f32.mrb[0].mxu0
        %v690 = vadd.f32 0.0, %v689
        %v691 = vpop.f32.mrb[0].mxu0
        %v692 = vadd.f32 0.0, %v691
        %693 = vmatprep.mubr.bf16.mxu0 0
        %694 = vmatmul.mubr.bf16.gmra.mrb[0].mxu0 %v436
        %v695 = vpop.f32.mrb[0].mxu0
        %v696 = vadd.f32 0.0, %v695
        %v697 = vpop.f32.mrb[0].mxu0
        %v698 = vadd.f32 0.0, %v697
        %v699 = vpop.f32.mrb[0].mxu0
        %v700 = vadd.f32 0.0, %v699
        %v701 = vpop.f32.mrb[0].mxu0
        %v702 = vadd.f32 0.0, %v701
        %703 = vmatprep.mubr.bf16.mxu0 0
        %704 = vmatmul.mubr.bf16.gmra.mrb[0].mxu0 %v439
        %v705 = vpop.f32.mrb[0].mxu0
        %v706 = vadd.f32 0.0, %v705
        %v707 = vpop.f32.mrb[0].mxu0
        %v708 = vadd.f32 0.0, %v707
        %v709 = vpop.f32.mrb[0].mxu0
        %v710 = vadd.f32 0.0, %v709
        %v711 = vpop.f32.mrb[0].mxu0
        %v712 = vadd.f32 0.0, %v711
        %713 = vmatprep.mubr.bf16.mxu0 0
        %714 = vmatmul.mubr.bf16.gmra.mrb[0].mxu0 %v442
        %v715 = vpop.f32.mrb[0].mxu0
        %v716 = vadd.f32 0.0, %v715
        %v717 = vpop.f32.mrb[0].mxu0
        %v718 = vadd.f32 0.0, %v717
        %v719 = vpop.f32.mrb[0].mxu0
        %v720 = vadd.f32 0.0, %v719
        %v721 = vpop.f32.mrb[0].mxu0
        %v722 = vadd.f32 0.0, %v721
        %723 = vdwg.mxu0
        %v724 = vpack.c.bf16 %v490, %v486
        %v725 = vpack.c.bf16 %v492, %v488
        %v726 = vpack.c.bf16 %v500, %v496
        %v727 = vpack.c.bf16 %v502, %v498
        %v728 = vpack.c.bf16 %v510, %v506
        %v729 = vpack.c.bf16 %v512, %v508
        %v730 = vpack.c.bf16 %v520, %v516
        %v731 = vpack.c.bf16 %v522, %v518
        %v732 = vpack.c.bf16 %v530, %v526
        %v733 = vpack.c.bf16 %v532, %v528
        %v734 = vpack.c.bf16 %v540, %v536
        %v735 = vpack.c.bf16 %v542, %v538
        %v736 = vpack.c.bf16 %v550, %v546
        %v737 = vpack.c.bf16 %v552, %v548
        %v738 = vpack.c.bf16 %v560, %v556
        %v739 = vpack.c.bf16 %v562, %v558
        %v740 = vpack.c.bf16 %v570, %v566
        %v741 = vpack.c.bf16 %v572, %v568
        %v742 = vpack.c.bf16 %v580, %v576
        %v743 = vpack.c.bf16 %v582, %v578
        %v744 = vpack.c.bf16 %v590, %v586
        %v745 = vpack.c.bf16 %v592, %v588
        %v746 = vpack.c.bf16 %v600, %v596
        %v747 = vpack.c.bf16 %v602, %v598
        %v748 = vpack.c.bf16 %v610, %v606
        %v749 = vpack.c.bf16 %v612, %v608
        %v750 = vpack.c.bf16 %v620, %v616
        %v751 = vpack.c.bf16 %v622, %v618
        %v752 = vpack.c.bf16 %v630, %v626
        %v753 = vpack.c.bf16 %v632, %v628
        %v754 = vpack.c.bf16 %v640, %v636
        %v755 = vpack.c.bf16 %v642, %v638
        %v756 = vpack.c.bf16 %v650, %v646
        %v757 = vpack.c.bf16 %v652, %v648
        %v758 = vpack.c.bf16 %v660, %v656
        %v759 = vpack.c.bf16 %v662, %v658
        %v760 = vpack.c.bf16 %v670, %v666
        %v761 = vpack.c.bf16 %v672, %v668
        %v762 = vpack.c.bf16 %v680, %v676
        %v763 = vpack.c.bf16 %v682, %v678
        %v764 = vpack.c.bf16 %v690, %v686
        %v765 = vpack.c.bf16 %v692, %v688
        %v766 = vpack.c.bf16 %v700, %v696
        %v767 = vpack.c.bf16 %v702, %v698
        %v768 = vpack.c.bf16 %v710, %v706
        %v769 = vpack.c.bf16 %v712, %v708
        %v770 = vpack.c.bf16 %v720, %v716
        %v771 = vpack.c.bf16 %v722, %v718
        %772 = vxpose.xlu0.c.b16.start [1/8] %v724, 128
        %773 = vxpose.xlu0.c.b16.cont [2/8] %v726, 128
        %774 = vxpose.xlu0.c.b16.cont [3/8] 0, 128
        %775 = vxpose.xlu0.c.b16.cont [4/8] 0, 128
        %776 = vxpose.xlu0.c.b16.cont [5/8] 0, 128
        %777 = vxpose.xlu0.c.b16.cont [6/8] 0, 128
        %778 = vxpose.xlu0.c.b16.cont [7/8] 0, 128
        %779 = vxpose.xlu0.c.b16.end [8/8] 0, 128
        %v780 = vpop.trf.xlu0
        %v781 = vpop.trf.xlu0
        %v782 = vpop.trf.xlu0
        %v783 = vpop.trf.xlu0
        %v784 = vpop.trf.xlu0
        %v785 = vpop.trf.xlu0
        %v786 = vpop.trf.xlu0
        %v787 = vpop.trf.xlu0
        %788 = vxpose.xlu0.c.b16.start [1/8] %v725, 128
        %789 = vxpose.xlu0.c.b16.cont [2/8] %v727, 128
        %790 = vxpose.xlu0.c.b16.cont [3/8] 0, 128
        %791 = vxpose.xlu0.c.b16.cont [4/8] 0, 128
        %792 = vxpose.xlu0.c.b16.cont [5/8] 0, 128
        %793 = vxpose.xlu0.c.b16.cont [6/8] 0, 128
        %794 = vxpose.xlu0.c.b16.cont [7/8] 0, 128
        %795 = vxpose.xlu0.c.b16.end [8/8] 0, 128
        %v796 = vpop.trf.xlu0
        %v797 = vpop.trf.xlu0
        %v798 = vpop.trf.xlu0
        %v799 = vpop.trf.xlu0
        %v800 = vpop.trf.xlu0
        %v801 = vpop.trf.xlu0
        %v802 = vpop.trf.xlu0
        %v803 = vpop.trf.xlu0
        %vm804 = vcmask 261120
        %v806 = vsel %vm804, %v780, 0
        %v809 = vsel %vm804, %v781, 0
        %v812 = vsel %vm804, %v782, 0
        %v815 = vsel %vm804, %v783, 0
        %v818 = vsel %vm804, %v784, 0
        %v821 = vsel %vm804, %v785, 0
        %v824 = vsel %vm804, %v786, 0
        %v827 = vsel %vm804, %v787, 0
        %v830 = vsel %vm804, %v796, 0
        %v833 = vsel %vm804, %v797, 0
        %v836 = vsel %vm804, %v798, 0
        %v839 = vsel %vm804, %v799, 0
        %v842 = vsel %vm804, %v800, 0
        %v845 = vsel %vm804, %v801, 0
        %v848 = vsel %vm804, %v802, 0
        %v851 = vsel %vm804, %v803, 0
        %853 = vmatprep.subr.bf16.mxu0 %v741
        %854 = vmatpush1.bf16.msra.mxu0 %v740
        %855 = vmatprep.subr.bf16.mxu0 %v743
        %856 = vmatpush1.bf16.msra.mxu0 %v742
        %857 = vmatprep.subr.bf16.mxu0 0
        %858 = vmatpush1.bf16.msra.mxu0 0
        %859 = vmatprep.subr.bf16.mxu0 0
        %860 = vmatpush1.bf16.msra.mxu0 0
        %861 = vmatprep.subr.bf16.mxu0 0
        %862 = vmatpush1.bf16.msra.mxu0 0
        %863 = vmatprep.subr.bf16.mxu0 0
        %864 = vmatpush1.bf16.msra.mxu0 0
        %865 = vmatprep.subr.bf16.mxu0 0
        %866 = vmatpush1.bf16.msra.mxu0 0
        %867 = vmatprep.subr.bf16.mxu0 0
        %868 = vmatpush1.bf16.msra.mxu0 0
        %869 = vmatprep.subr.bf16.mxu0 0
        %870 = vmatpush1.bf16.msra.mxu0 0
        %871 = vmatprep.subr.bf16.mxu0 0
        %872 = vmatpush1.bf16.msra.mxu0 0
        %873 = vmatprep.subr.bf16.mxu0 0
        %874 = vmatpush1.bf16.msra.mxu0 0
        %875 = vmatprep.subr.bf16.mxu0 0
        %876 = vmatpush1.bf16.msra.mxu0 0
        %877 = vmatprep.subr.bf16.mxu0 0
        %878 = vmatpush1.bf16.msra.mxu0 0
        %879 = vmatprep.subr.bf16.mxu0 0
        %880 = vmatpush1.bf16.msra.mxu0 0
        %881 = vmatprep.subr.bf16.mxu0 0
        %882 = vmatpush1.bf16.msra.mxu0 0
        %883 = vmatprep.subr.bf16.mxu0 0
        %884 = vmatpush1.bf16.msra.mxu0 0
        %885 = vmatprep.mubr.bf16.mxu0 0
        %886 = vmatmul.mubr.bf16.gmra.mrb[0].mxu0 %v806
        %v887 = vpop.f32.mrb[0].mxu0
        %v888 = vadd.f32 0.0, %v887
        %v889 = vpop.f32.mrb[0].mxu0
        %v890 = vadd.f32 0.0, %v889
        %v891 = vpop.f32.mrb[0].mxu0
        %v892 = vadd.f32 0.0, %v891
        %v893 = vpop.f32.mrb[0].mxu0
        %v894 = vadd.f32 0.0, %v893
        %895 = vmatprep.mubr.bf16.mxu0 0
        %896 = vmatmul.mubr.bf16.gmra.mrb[0].mxu0 %v809
        %v897 = vpop.f32.mrb[0].mxu0
        %v898 = vadd.f32 0.0, %v897
        %v899 = vpop.f32.mrb[0].mxu0
        %v900 = vadd.f32 0.0, %v899
        %v901 = vpop.f32.mrb[0].mxu0
        %v902 = vadd.f32 0.0, %v901
        %v903 = vpop.f32.mrb[0].mxu0
        %v904 = vadd.f32 0.0, %v903
        %905 = vmatprep.mubr.bf16.mxu0 0
        %906 = vmatmul.mubr.bf16.gmra.mrb[0].mxu0 %v812
        %v907 = vpop.f32.mrb[0].mxu0
        %v908 = vadd.f32 0.0, %v907
        %v909 = vpop.f32.mrb[0].mxu0
        %v910 = vadd.f32 0.0, %v909
        %v911 = vpop.f32.mrb[0].mxu0
        %v912 = vadd.f32 0.0, %v911
        %v913 = vpop.f32.mrb[0].mxu0
        %v914 = vadd.f32 0.0, %v913
        %915 = vmatprep.mubr.bf16.mxu0 0
        %916 = vmatmul.mubr.bf16.gmra.mrb[0].mxu0 %v815
        %v917 = vpop.f32.mrb[0].mxu0
        %v918 = vadd.f32 0.0, %v917
        %v919 = vpop.f32.mrb[0].mxu0
        %v920 = vadd.f32 0.0, %v919
        %v921 = vpop.f32.mrb[0].mxu0
        %v922 = vadd.f32 0.0, %v921
        %v923 = vpop.f32.mrb[0].mxu0
        %v924 = vadd.f32 0.0, %v923
        %925 = vmatprep.mubr.bf16.mxu0 0
        %926 = vmatmul.mubr.bf16.gmra.mrb[0].mxu0 %v818
        %v927 = vpop.f32.mrb[0].mxu0
        %v928 = vadd.f32 0.0, %v927
        %v929 = vpop.f32.mrb[0].mxu0
        %v930 = vadd.f32 0.0, %v929
        %v931 = vpop.f32.mrb[0].mxu0
        %v932 = vadd.f32 0.0, %v931
        %v933 = vpop.f32.mrb[0].mxu0
        %v934 = vadd.f32 0.0, %v933
        %935 = vmatprep.mubr.bf16.mxu0 0
        %936 = vmatmul.mubr.bf16.gmra.mrb[0].mxu0 %v821
        %v937 = vpop.f32.mrb[0].mxu0
        %v938 = vadd.f32 0.0, %v937
        %v939 = vpop.f32.mrb[0].mxu0
        %v940 = vadd.f32 0.0, %v939
        %v941 = vpop.f32.mrb[0].mxu0
        %v942 = vadd.f32 0.0, %v941
        %v943 = vpop.f32.mrb[0].mxu0
        %v944 = vadd.f32 0.0, %v943
        %945 = vmatprep.mubr.bf16.mxu0 0
        %946 = vmatmul.mubr.bf16.gmra.mrb[0].mxu0 %v824
        %v947 = vpop.f32.mrb[0].mxu0
        %v948 = vadd.f32 0.0, %v947
        %v949 = vpop.f32.mrb[0].mxu0
        %v950 = vadd.f32 0.0, %v949
        %v951 = vpop.f32.mrb[0].mxu0
        %v952 = vadd.f32 0.0, %v951
        %v953 = vpop.f32.mrb[0].mxu0
        %v954 = vadd.f32 0.0, %v953
        %955 = vmatprep.mubr.bf16.mxu0 0
        %956 = vmatmul.mubr.bf16.gmra.mrb[0].mxu0 %v827
        %v957 = vpop.f32.mrb[0].mxu0
        %v958 = vadd.f32 0.0, %v957
        %v959 = vpop.f32.mrb[0].mxu0
        %v960 = vadd.f32 0.0, %v959
        %v961 = vpop.f32.mrb[0].mxu0
        %v962 = vadd.f32 0.0, %v961
        %v963 = vpop.f32.mrb[0].mxu0
        %v964 = vadd.f32 0.0, %v963
        %965 = vmatprep.mubr.bf16.mxu0 0
        %966 = vmatmul.mubr.bf16.gmra.mrb[0].mxu0 %v830
        %v967 = vpop.f32.mrb[0].mxu0
        %v968 = vadd.f32 0.0, %v967
        %v969 = vpop.f32.mrb[0].mxu0
        %v970 = vadd.f32 0.0, %v969
        %v971 = vpop.f32.mrb[0].mxu0
        %v972 = vadd.f32 0.0, %v971
        %v973 = vpop.f32.mrb[0].mxu0
        %v974 = vadd.f32 0.0, %v973
        %975 = vmatprep.mubr.bf16.mxu0 0
        %976 = vmatmul.mubr.bf16.gmra.mrb[0].mxu0 %v833
        %v977 = vpop.f32.mrb[0].mxu0
        %v978 = vadd.f32 0.0, %v977
        %v979 = vpop.f32.mrb[0].mxu0
        %v980 = vadd.f32 0.0, %v979
        %v981 = vpop.f32.mrb[0].mxu0
        %v982 = vadd.f32 0.0, %v981
        %v983 = vpop.f32.mrb[0].mxu0
        %v984 = vadd.f32 0.0, %v983
        %985 = vmatprep.mubr.bf16.mxu0 0
        %986 = vmatmul.mubr.bf16.gmra.mrb[0].mxu0 %v836
        %v987 = vpop.f32.mrb[0].mxu0
        %v988 = vadd.f32 0.0, %v987
        %v989 = vpop.f32.mrb[0].mxu0
        %v990 = vadd.f32 0.0, %v989
        %v991 = vpop.f32.mrb[0].mxu0
        %v992 = vadd.f32 0.0, %v991
        %v993 = vpop.f32.mrb[0].mxu0
        %v994 = vadd.f32 0.0, %v993
        %995 = vmatprep.mubr.bf16.mxu0 0
        %996 = vmatmul.mubr.bf16.gmra.mrb[0].mxu0 %v839
        %v997 = vpop.f32.mrb[0].mxu0
        %v998 = vadd.f32 0.0, %v997
        %v999 = vpop.f32.mrb[0].mxu0
        %v1000 = vadd.f32 0.0, %v999
        %v1001 = vpop.f32.mrb[0].mxu0
        %v1002 = vadd.f32 0.0, %v1001
        %v1003 = vpop.f32.mrb[0].mxu0
        %v1004 = vadd.f32 0.0, %v1003
        %1005 = vmatprep.mubr.bf16.mxu0 0
        %1006 = vmatmul.mubr.bf16.gmra.mrb[0].mxu0 %v842
        %v1007 = vpop.f32.mrb[0].mxu0
        %v1008 = vadd.f32 0.0, %v1007
        %v1009 = vpop.f32.mrb[0].mxu0
        %v1010 = vadd.f32 0.0, %v1009
        %v1011 = vpop.f32.mrb[0].mxu0
        %v1012 = vadd.f32 0.0, %v1011
        %v1013 = vpop.f32.mrb[0].mxu0
        %v1014 = vadd.f32 0.0, %v1013
        %1015 = vmatprep.mubr.bf16.mxu0 0
        %1016 = vmatmul.mubr.bf16.gmra.mrb[0].mxu0 %v845
        %v1017 = vpop.f32.mrb[0].mxu0
        %v1018 = vadd.f32 0.0, %v1017
        %v1019 = vpop.f32.mrb[0].mxu0
        %v1020 = vadd.f32 0.0, %v1019
        %v1021 = vpop.f32.mrb[0].mxu0
        %v1022 = vadd.f32 0.0, %v1021
        %v1023 = vpop.f32.mrb[0].mxu0
        %v1024 = vadd.f32 0.0, %v1023
        %1025 = vmatprep.mubr.bf16.mxu0 0
        %1026 = vmatmul.mubr.bf16.gmra.mrb[0].mxu0 %v848
        %v1027 = vpop.f32.mrb[0].mxu0
        %v1028 = vadd.f32 0.0, %v1027
        %v1029 = vpop.f32.mrb[0].mxu0
        %v1030 = vadd.f32 0.0, %v1029
        %v1031 = vpop.f32.mrb[0].mxu0
        %v1032 = vadd.f32 0.0, %v1031
        %v1033 = vpop.f32.mrb[0].mxu0
        %v1034 = vadd.f32 0.0, %v1033
        %1035 = vmatprep.mubr.bf16.mxu0 0
        %1036 = vmatmul.mubr.bf16.gmra.mrb[0].mxu0 %v851
        %v1037 = vpop.f32.mrb[0].mxu0
        %v1038 = vadd.f32 0.0, %v1037
        %v1039 = vpop.f32.mrb[0].mxu0
        %v1040 = vadd.f32 0.0, %v1039
        %v1041 = vpop.f32.mrb[0].mxu0
        %v1042 = vadd.f32 0.0, %v1041
        %v1043 = vpop.f32.mrb[0].mxu0
        %v1044 = vadd.f32 0.0, %v1043
        %1045 = vdwg.mxu0
        %1046 = vxpose.xlu0.c.b16.start [1/8] %v728, 128
        %1047 = vxpose.xlu0.c.b16.cont [2/8] %v730, 128
        %1048 = vxpose.xlu0.c.b16.cont [3/8] 0, 128
        %1049 = vxpose.xlu0.c.b16.cont [4/8] 0, 128
        %1050 = vxpose.xlu0.c.b16.cont [5/8] 0, 128
        %1051 = vxpose.xlu0.c.b16.cont [6/8] 0, 128
        %1052 = vxpose.xlu0.c.b16.cont [7/8] 0, 128
        %1053 = vxpose.xlu0.c.b16.end [8/8] 0, 128
        %v1054 = vpop.trf.xlu0
        %v1055 = vpop.trf.xlu0
        %v1056 = vpop.trf.xlu0
        %v1057 = vpop.trf.xlu0
        %v1058 = vpop.trf.xlu0
        %v1059 = vpop.trf.xlu0
        %v1060 = vpop.trf.xlu0
        %v1061 = vpop.trf.xlu0
        %1062 = vxpose.xlu0.c.b16.start [1/8] %v729, 128
        %1063 = vxpose.xlu0.c.b16.cont [2/8] %v731, 128
        %1064 = vxpose.xlu0.c.b16.cont [3/8] 0, 128
        %1065 = vxpose.xlu0.c.b16.cont [4/8] 0, 128
        %1066 = vxpose.xlu0.c.b16.cont [5/8] 0, 128
        %1067 = vxpose.xlu0.c.b16.cont [6/8] 0, 128
        %1068 = vxpose.xlu0.c.b16.cont [7/8] 0, 128
        %1069 = vxpose.xlu0.c.b16.end [8/8] 0, 128
        %v1070 = vpop.trf.xlu0
        %v1071 = vpop.trf.xlu0
        %v1072 = vpop.trf.xlu0
        %v1073 = vpop.trf.xlu0
        %v1074 = vpop.trf.xlu0
        %v1075 = vpop.trf.xlu0
        %v1076 = vpop.trf.xlu0
        %v1077 = vpop.trf.xlu0
        %v1079 = vsel %vm804, %v1054, 0
        %v1082 = vsel %vm804, %v1055, 0
        %v1085 = vsel %vm804, %v1056, 0
        %v1088 = vsel %vm804, %v1057, 0
        %v1091 = vsel %vm804, %v1058, 0
        %v1094 = vsel %vm804, %v1059, 0
        %v1097 = vsel %vm804, %v1060, 0
        %v1100 = vsel %vm804, %v1061, 0
        %v1103 = vsel %vm804, %v1070, 0
        %v1106 = vsel %vm804, %v1071, 0
        %v1109 = vsel %vm804, %v1072, 0
        %v1112 = vsel %vm804, %v1073, 0
        %v1115 = vsel %vm804, %v1074, 0
        %v1118 = vsel %vm804, %v1075, 0
        %v1121 = vsel %vm804, %v1076, 0
        %v1124 = vsel %vm804, %v1077, 0
        %1126 = vmatprep.subr.bf16.mxu0 %v745
        %1127 = vmatpush1.bf16.msra.mxu0 %v744
        %1128 = vmatprep.subr.bf16.mxu0 %v747
        %1129 = vmatpush1.bf16.msra.mxu0 %v746
        %1130 = vmatprep.subr.bf16.mxu0 0
        %1131 = vmatpush1.bf16.msra.mxu0 0
        %1132 = vmatprep.subr.bf16.mxu0 0
        %1133 = vmatpush1.bf16.msra.mxu0 0
        %1134 = vmatprep.subr.bf16.mxu0 0
        %1135 = vmatpush1.bf16.msra.mxu0 0
        %1136 = vmatprep.subr.bf16.mxu0 0
        %1137 = vmatpush1.bf16.msra.mxu0 0
        %1138 = vmatprep.subr.bf16.mxu0 0
        %1139 = vmatpush1.bf16.msra.mxu0 0
        %1140 = vmatprep.subr.bf16.mxu0 0
        %1141 = vmatpush1.bf16.msra.mxu0 0
        %1142 = vmatprep.subr.bf16.mxu0 0
        %1143 = vmatpush1.bf16.msra.mxu0 0
        %1144 = vmatprep.subr.bf16.mxu0 0
        %1145 = vmatpush1.bf16.msra.mxu0 0
        %1146 = vmatprep.subr.bf16.mxu0 0
        %1147 = vmatpush1.bf16.msra.mxu0 0
        %1148 = vmatprep.subr.bf16.mxu0 0
        %1149 = vmatpush1.bf16.msra.mxu0 0
        %1150 = vmatprep.subr.bf16.mxu0 0
        %1151 = vmatpush1.bf16.msra.mxu0 0
        %1152 = vmatprep.subr.bf16.mxu0 0
        %1153 = vmatpush1.bf16.msra.mxu0 0
        %1154 = vmatprep.subr.bf16.mxu0 0
        %1155 = vmatpush1.bf16.msra.mxu0 0
        %1156 = vmatprep.subr.bf16.mxu0 0
        %1157 = vmatpush1.bf16.msra.mxu0 0
        %1158 = vmatprep.mubr.bf16.mxu0 0
        %1159 = vmatmul.mubr.bf16.gmra.mrb[0].mxu0 %v1079
        %v1160 = vpop.f32.mrb[0].mxu0
        %v1161 = vadd.f32 0.0, %v1160
        %v1162 = vpop.f32.mrb[0].mxu0
        %v1163 = vadd.f32 0.0, %v1162
        %v1164 = vpop.f32.mrb[0].mxu0
        %v1165 = vadd.f32 0.0, %v1164
        %v1166 = vpop.f32.mrb[0].mxu0
        %v1167 = vadd.f32 0.0, %v1166
        %1168 = vmatprep.mubr.bf16.mxu0 0
        %1169 = vmatmul.mubr.bf16.gmra.mrb[0].mxu0 %v1082
        %v1170 = vpop.f32.mrb[0].mxu0
        %v1171 = vadd.f32 0.0, %v1170
        %v1172 = vpop.f32.mrb[0].mxu0
        %v1173 = vadd.f32 0.0, %v1172
        %v1174 = vpop.f32.mrb[0].mxu0
        %v1175 = vadd.f32 0.0, %v1174
        %v1176 = vpop.f32.mrb[0].mxu0
        %v1177 = vadd.f32 0.0, %v1176
        %1178 = vmatprep.mubr.bf16.mxu0 0
        %1179 = vmatmul.mubr.bf16.gmra.mrb[0].mxu0 %v1085
        %v1180 = vpop.f32.mrb[0].mxu0
        %v1181 = vadd.f32 0.0, %v1180
        %v1182 = vpop.f32.mrb[0].mxu0
        %v1183 = vadd.f32 0.0, %v1182
        %v1184 = vpop.f32.mrb[0].mxu0
        %v1185 = vadd.f32 0.0, %v1184
        %v1186 = vpop.f32.mrb[0].mxu0
        %v1187 = vadd.f32 0.0, %v1186
        %1188 = vmatprep.mubr.bf16.mxu0 0
        %1189 = vmatmul.mubr.bf16.gmra.mrb[0].mxu0 %v1088
        %v1190 = vpop.f32.mrb[0].mxu0
        %v1191 = vadd.f32 0.0, %v1190
        %v1192 = vpop.f32.mrb[0].mxu0
        %v1193 = vadd.f32 0.0, %v1192
        %v1194 = vpop.f32.mrb[0].mxu0
        %v1195 = vadd.f32 0.0, %v1194
        %v1196 = vpop.f32.mrb[0].mxu0
        %v1197 = vadd.f32 0.0, %v1196
        %1198 = vmatprep.mubr.bf16.mxu0 0
        %1199 = vmatmul.mubr.bf16.gmra.mrb[0].mxu0 %v1091
        %v1200 = vpop.f32.mrb[0].mxu0
        %v1201 = vadd.f32 0.0, %v1200
        %v1202 = vpop.f32.mrb[0].mxu0
        %v1203 = vadd.f32 0.0, %v1202
        %v1204 = vpop.f32.mrb[0].mxu0
        %v1205 = vadd.f32 0.0, %v1204
        %v1206 = vpop.f32.mrb[0].mxu0
        %v1207 = vadd.f32 0.0, %v1206
        %1208 = vmatprep.mubr.bf16.mxu0 0
        %1209 = vmatmul.mubr.bf16.gmra.mrb[0].mxu0 %v1094
        %v1210 = vpop.f32.mrb[0].mxu0
        %v1211 = vadd.f32 0.0, %v1210
        %v1212 = vpop.f32.mrb[0].mxu0
        %v1213 = vadd.f32 0.0, %v1212
        %v1214 = vpop.f32.mrb[0].mxu0
        %v1215 = vadd.f32 0.0, %v1214
        %v1216 = vpop.f32.mrb[0].mxu0
        %v1217 = vadd.f32 0.0, %v1216
        %1218 = vmatprep.mubr.bf16.mxu0 0
        %1219 = vmatmul.mubr.bf16.gmra.mrb[0].mxu0 %v1097
        %v1220 = vpop.f32.mrb[0].mxu0
        %v1221 = vadd.f32 0.0, %v1220
        %v1222 = vpop.f32.mrb[0].mxu0
        %v1223 = vadd.f32 0.0, %v1222
        %v1224 = vpop.f32.mrb[0].mxu0
        %v1225 = vadd.f32 0.0, %v1224
        %v1226 = vpop.f32.mrb[0].mxu0
        %v1227 = vadd.f32 0.0, %v1226
        %1228 = vmatprep.mubr.bf16.mxu0 0
        %1229 = vmatmul.mubr.bf16.gmra.mrb[0].mxu0 %v1100
        %v1230 = vpop.f32.mrb[0].mxu0
        %v1231 = vadd.f32 0.0, %v1230
        %v1232 = vpop.f32.mrb[0].mxu0
        %v1233 = vadd.f32 0.0, %v1232
        %v1234 = vpop.f32.mrb[0].mxu0
        %v1235 = vadd.f32 0.0, %v1234
        %v1236 = vpop.f32.mrb[0].mxu0
        %v1237 = vadd.f32 0.0, %v1236
        %1238 = vmatprep.mubr.bf16.mxu0 0
        %1239 = vmatmul.mubr.bf16.gmra.mrb[0].mxu0 %v1103
        %v1240 = vpop.f32.mrb[0].mxu0
        %v1241 = vadd.f32 0.0, %v1240
        %v1242 = vpop.f32.mrb[0].mxu0
        %v1243 = vadd.f32 0.0, %v1242
        %v1244 = vpop.f32.mrb[0].mxu0
        %v1245 = vadd.f32 0.0, %v1244
        %v1246 = vpop.f32.mrb[0].mxu0
        %v1247 = vadd.f32 0.0, %v1246
        %1248 = vmatprep.mubr.bf16.mxu0 0
        %1249 = vmatmul.mubr.bf16.gmra.mrb[0].mxu0 %v1106
        %v1250 = vpop.f32.mrb[0].mxu0
        %v1251 = vadd.f32 0.0, %v1250
        %v1252 = vpop.f32.mrb[0].mxu0
        %v1253 = vadd.f32 0.0, %v1252
        %v1254 = vpop.f32.mrb[0].mxu0
        %v1255 = vadd.f32 0.0, %v1254
        %v1256 = vpop.f32.mrb[0].mxu0
        %v1257 = vadd.f32 0.0, %v1256
        %1258 = vmatprep.mubr.bf16.mxu0 0
        %1259 = vmatmul.mubr.bf16.gmra.mrb[0].mxu0 %v1109
        %v1260 = vpop.f32.mrb[0].mxu0
        %v1261 = vadd.f32 0.0, %v1260
        %v1262 = vpop.f32.mrb[0].mxu0
        %v1263 = vadd.f32 0.0, %v1262
        %v1264 = vpop.f32.mrb[0].mxu0
        %v1265 = vadd.f32 0.0, %v1264
        %v1266 = vpop.f32.mrb[0].mxu0
        %v1267 = vadd.f32 0.0, %v1266
        %1268 = vmatprep.mubr.bf16.mxu0 0
        %1269 = vmatmul.mubr.bf16.gmra.mrb[0].mxu0 %v1112
        %v1270 = vpop.f32.mrb[0].mxu0
        %v1271 = vadd.f32 0.0, %v1270
        %v1272 = vpop.f32.mrb[0].mxu0
        %v1273 = vadd.f32 0.0, %v1272
        %v1274 = vpop.f32.mrb[0].mxu0
        %v1275 = vadd.f32 0.0, %v1274
        %v1276 = vpop.f32.mrb[0].mxu0
        %v1277 = vadd.f32 0.0, %v1276
        %1278 = vmatprep.mubr.bf16.mxu0 0
        %1279 = vmatmul.mubr.bf16.gmra.mrb[0].mxu0 %v1115
        %v1280 = vpop.f32.mrb[0].mxu0
        %v1281 = vadd.f32 0.0, %v1280
        %v1282 = vpop.f32.mrb[0].mxu0
        %v1283 = vadd.f32 0.0, %v1282
        %v1284 = vpop.f32.mrb[0].mxu0
        %v1285 = vadd.f32 0.0, %v1284
        %v1286 = vpop.f32.mrb[0].mxu0
        %v1287 = vadd.f32 0.0, %v1286
        %1288 = vmatprep.mubr.bf16.mxu0 0
        %1289 = vmatmul.mubr.bf16.gmra.mrb[0].mxu0 %v1118
        %v1290 = vpop.f32.mrb[0].mxu0
        %v1291 = vadd.f32 0.0, %v1290
        %v1292 = vpop.f32.mrb[0].mxu0
        %v1293 = vadd.f32 0.0, %v1292
        %v1294 = vpop.f32.mrb[0].mxu0
        %v1295 = vadd.f32 0.0, %v1294
        %v1296 = vpop.f32.mrb[0].mxu0
        %v1297 = vadd.f32 0.0, %v1296
        %1298 = vmatprep.mubr.bf16.mxu0 0
        %1299 = vmatmul.mubr.bf16.gmra.mrb[0].mxu0 %v1121
        %v1300 = vpop.f32.mrb[0].mxu0
        %v1301 = vadd.f32 0.0, %v1300
        %v1302 = vpop.f32.mrb[0].mxu0
        %v1303 = vadd.f32 0.0, %v1302
        %v1304 = vpop.f32.mrb[0].mxu0
        %v1305 = vadd.f32 0.0, %v1304
        %v1306 = vpop.f32.mrb[0].mxu0
        %v1307 = vadd.f32 0.0, %v1306
        %1308 = vmatprep.mubr.bf16.mxu0 0
        %1309 = vmatmul.mubr.bf16.gmra.mrb[0].mxu0 %v1124
        %v1310 = vpop.f32.mrb[0].mxu0
        %v1311 = vadd.f32 0.0, %v1310
        %v1312 = vpop.f32.mrb[0].mxu0
        %v1313 = vadd.f32 0.0, %v1312
        %v1314 = vpop.f32.mrb[0].mxu0
        %v1315 = vadd.f32 0.0, %v1314
        %v1316 = vpop.f32.mrb[0].mxu0
        %v1317 = vadd.f32 0.0, %v1316
        %1318 = vdwg.mxu0
        %1319 = vxpose.xlu0.c.b16.start [1/8] %v732, 128
        %1320 = vxpose.xlu0.c.b16.cont [2/8] %v734, 128
        %1321 = vxpose.xlu0.c.b16.cont [3/8] 0, 128
        %1322 = vxpose.xlu0.c.b16.cont [4/8] 0, 128
        %1323 = vxpose.xlu0.c.b16.cont [5/8] 0, 128
        %1324 = vxpose.xlu0.c.b16.cont [6/8] 0, 128
        %1325 = vxpose.xlu0.c.b16.cont [7/8] 0, 128
        %1326 = vxpose.xlu0.c.b16.end [8/8] 0, 128
        %v1327 = vpop.trf.xlu0
        %v1328 = vpop.trf.xlu0
        %v1329 = vpop.trf.xlu0
        %v1330 = vpop.trf.xlu0
        %v1331 = vpop.trf.xlu0
        %v1332 = vpop.trf.xlu0
        %v1333 = vpop.trf.xlu0
        %v1334 = vpop.trf.xlu0
        %1335 = vxpose.xlu0.c.b16.start [1/8] %v733, 128
        %1336 = vxpose.xlu0.c.b16.cont [2/8] %v735, 128
        %1337 = vxpose.xlu0.c.b16.cont [3/8] 0, 128
        %1338 = vxpose.xlu0.c.b16.cont [4/8] 0, 128
        %1339 = vxpose.xlu0.c.b16.cont [5/8] 0, 128
        %1340 = vxpose.xlu0.c.b16.cont [6/8] 0, 128
        %1341 = vxpose.xlu0.c.b16.cont [7/8] 0, 128
        %1342 = vxpose.xlu0.c.b16.end [8/8] 0, 128
        %v1343 = vpop.trf.xlu0
        %v1344 = vpop.trf.xlu0
        %v1345 = vpop.trf.xlu0
        %v1346 = vpop.trf.xlu0
        %v1347 = vpop.trf.xlu0
        %v1348 = vpop.trf.xlu0
        %v1349 = vpop.trf.xlu0
        %v1350 = vpop.trf.xlu0
        %v1352 = vsel %vm804, %v1327, 0
        %v1355 = vsel %vm804, %v1328, 0
        %v1358 = vsel %vm804, %v1329, 0
        %v1361 = vsel %vm804, %v1330, 0
        %v1364 = vsel %vm804, %v1331, 0
        %v1367 = vsel %vm804, %v1332, 0
        %v1370 = vsel %vm804, %v1333, 0
        %v1373 = vsel %vm804, %v1334, 0
        %v1376 = vsel %vm804, %v1343, 0
        %v1379 = vsel %vm804, %v1344, 0
        %v1382 = vsel %vm804, %v1345, 0
        %v1385 = vsel %vm804, %v1346, 0
        %v1388 = vsel %vm804, %v1347, 0
        %v1391 = vsel %vm804, %v1348, 0
        %v1394 = vsel %vm804, %v1349, 0
        %v1397 = vsel %vm804, %v1350, 0
        %1399 = vmatprep.subr.bf16.mxu0 %v749
        %1400 = vmatpush1.bf16.msra.mxu0 %v748
        %1401 = vmatprep.subr.bf16.mxu0 %v751
        %1402 = vmatpush1.bf16.msra.mxu0 %v750
        %1403 = vmatprep.subr.bf16.mxu0 0
        %1404 = vmatpush1.bf16.msra.mxu0 0
        %1405 = vmatprep.subr.bf16.mxu0 0
        %1406 = vmatpush1.bf16.msra.mxu0 0
        %1407 = vmatprep.subr.bf16.mxu0 0
        %1408 = vmatpush1.bf16.msra.mxu0 0
        %1409 = vmatprep.subr.bf16.mxu0 0
        %1410 = vmatpush1.bf16.msra.mxu0 0
        %1411 = vmatprep.subr.bf16.mxu0 0
        %1412 = vmatpush1.bf16.msra.mxu0 0
        %1413 = vmatprep.subr.bf16.mxu0 0
        %1414 = vmatpush1.bf16.msra.mxu0 0
        %1415 = vmatprep.subr.bf16.mxu0 0
        %1416 = vmatpush1.bf16.msra.mxu0 0
        %1417 = vmatprep.subr.bf16.mxu0 0
        %1418 = vmatpush1.bf16.msra.mxu0 0
        %1419 = vmatprep.subr.bf16.mxu0 0
        %1420 = vmatpush1.bf16.msra.mxu0 0
        %1421 = vmatprep.subr.bf16.mxu0 0
        %1422 = vmatpush1.bf16.msra.mxu0 0
        %1423 = vmatprep.subr.bf16.mxu0 0
        %1424 = vmatpush1.bf16.msra.mxu0 0
        %1425 = vmatprep.subr.bf16.mxu0 0
        %1426 = vmatpush1.bf16.msra.mxu0 0
        %1427 = vmatprep.subr.bf16.mxu0 0
        %1428 = vmatpush1.bf16.msra.mxu0 0
        %1429 = vmatprep.subr.bf16.mxu0 0
        %1430 = vmatpush1.bf16.msra.mxu0 0
        %1431 = vmatprep.mubr.bf16.mxu0 0
        %1432 = vmatmul.mubr.bf16.gmra.mrb[0].mxu0 %v1352
        %v1433 = vpop.f32.mrb[0].mxu0
        %v1434 = vadd.f32 0.0, %v1433
        %v1435 = vpop.f32.mrb[0].mxu0
        %v1436 = vadd.f32 0.0, %v1435
        %v1437 = vpop.f32.mrb[0].mxu0
        %v1438 = vadd.f32 0.0, %v1437
        %v1439 = vpop.f32.mrb[0].mxu0
        %v1440 = vadd.f32 0.0, %v1439
        %1441 = vmatprep.mubr.bf16.mxu0 0
        %1442 = vmatmul.mubr.bf16.gmra.mrb[0].mxu0 %v1355
        %v1443 = vpop.f32.mrb[0].mxu0
        %v1444 = vadd.f32 0.0, %v1443
        %v1445 = vpop.f32.mrb[0].mxu0
        %v1446 = vadd.f32 0.0, %v1445
        %v1447 = vpop.f32.mrb[0].mxu0
        %v1448 = vadd.f32 0.0, %v1447
        %v1449 = vpop.f32.mrb[0].mxu0
        %v1450 = vadd.f32 0.0, %v1449
        %1451 = vmatprep.mubr.bf16.mxu0 0
        %1452 = vmatmul.mubr.bf16.gmra.mrb[0].mxu0 %v1358
        %v1453 = vpop.f32.mrb[0].mxu0
        %v1454 = vadd.f32 0.0, %v1453
        %v1455 = vpop.f32.mrb[0].mxu0
        %v1456 = vadd.f32 0.0, %v1455
        %v1457 = vpop.f32.mrb[0].mxu0
        %v1458 = vadd.f32 0.0, %v1457
        %v1459 = vpop.f32.mrb[0].mxu0
        %v1460 = vadd.f32 0.0, %v1459
        %1461 = vmatprep.mubr.bf16.mxu0 0
        %1462 = vmatmul.mubr.bf16.gmra.mrb[0].mxu0 %v1361
        %v1463 = vpop.f32.mrb[0].mxu0
        %v1464 = vadd.f32 0.0, %v1463
        %v1465 = vpop.f32.mrb[0].mxu0
        %v1466 = vadd.f32 0.0, %v1465
        %v1467 = vpop.f32.mrb[0].mxu0
        %v1468 = vadd.f32 0.0, %v1467
        %v1469 = vpop.f32.mrb[0].mxu0
        %v1470 = vadd.f32 0.0, %v1469
        %1471 = vmatprep.mubr.bf16.mxu0 0
        %1472 = vmatmul.mubr.bf16.gmra.mrb[0].mxu0 %v1364
        %v1473 = vpop.f32.mrb[0].mxu0
        %v1474 = vadd.f32 0.0, %v1473
        %v1475 = vpop.f32.mrb[0].mxu0
        %v1476 = vadd.f32 0.0, %v1475
        %v1477 = vpop.f32.mrb[0].mxu0
        %v1478 = vadd.f32 0.0, %v1477
        %v1479 = vpop.f32.mrb[0].mxu0
        %v1480 = vadd.f32 0.0, %v1479
        %1481 = vmatprep.mubr.bf16.mxu0 0
        %1482 = vmatmul.mubr.bf16.gmra.mrb[0].mxu0 %v1367
        %v1483 = vpop.f32.mrb[0].mxu0
        %v1484 = vadd.f32 0.0, %v1483
        %v1485 = vpop.f32.mrb[0].mxu0
        %v1486 = vadd.f32 0.0, %v1485
        %v1487 = vpop.f32.mrb[0].mxu0
        %v1488 = vadd.f32 0.0, %v1487
        %v1489 = vpop.f32.mrb[0].mxu0
        %v1490 = vadd.f32 0.0, %v1489
        %1491 = vmatprep.mubr.bf16.mxu0 0
        %1492 = vmatmul.mubr.bf16.gmra.mrb[0].mxu0 %v1370
        %v1493 = vpop.f32.mrb[0].mxu0
        %v1494 = vadd.f32 0.0, %v1493
        %v1495 = vpop.f32.mrb[0].mxu0
        %v1496 = vadd.f32 0.0, %v1495
        %v1497 = vpop.f32.mrb[0].mxu0
        %v1498 = vadd.f32 0.0, %v1497
        %v1499 = vpop.f32.mrb[0].mxu0
        %v1500 = vadd.f32 0.0, %v1499
        %1501 = vmatprep.mubr.bf16.mxu0 0
        %1502 = vmatmul.mubr.bf16.gmra.mrb[0].mxu0 %v1373
        %v1503 = vpop.f32.mrb[0].mxu0
        %v1504 = vadd.f32 0.0, %v1503
        %v1505 = vpop.f32.mrb[0].mxu0
        %v1506 = vadd.f32 0.0, %v1505
        %v1507 = vpop.f32.mrb[0].mxu0
        %v1508 = vadd.f32 0.0, %v1507
        %v1509 = vpop.f32.mrb[0].mxu0
        %v1510 = vadd.f32 0.0, %v1509
        %1511 = vmatprep.mubr.bf16.mxu0 0
        %1512 = vmatmul.mubr.bf16.gmra.mrb[0].mxu0 %v1376
        %v1513 = vpop.f32.mrb[0].mxu0
        %v1514 = vadd.f32 0.0, %v1513
        %v1515 = vpop.f32.mrb[0].mxu0
        %v1516 = vadd.f32 0.0, %v1515
        %v1517 = vpop.f32.mrb[0].mxu0
        %v1518 = vadd.f32 0.0, %v1517
        %v1519 = vpop.f32.mrb[0].mxu0
        %v1520 = vadd.f32 0.0, %v1519
        %1521 = vmatprep.mubr.bf16.mxu0 0
        %1522 = vmatmul.mubr.bf16.gmra.mrb[0].mxu0 %v1379
        %v1523 = vpop.f32.mrb[0].mxu0
        %v1524 = vadd.f32 0.0, %v1523
        %v1525 = vpop.f32.mrb[0].mxu0
        %v1526 = vadd.f32 0.0, %v1525
        %v1527 = vpop.f32.mrb[0].mxu0
        %v1528 = vadd.f32 0.0, %v1527
        %v1529 = vpop.f32.mrb[0].mxu0
        %v1530 = vadd.f32 0.0, %v1529
        %1531 = vmatprep.mubr.bf16.mxu0 0
        %1532 = vmatmul.mubr.bf16.gmra.mrb[0].mxu0 %v1382
        %v1533 = vpop.f32.mrb[0].mxu0
        %v1534 = vadd.f32 0.0, %v1533
        %v1535 = vpop.f32.mrb[0].mxu0
        %v1536 = vadd.f32 0.0, %v1535
        %v1537 = vpop.f32.mrb[0].mxu0
        %v1538 = vadd.f32 0.0, %v1537
        %v1539 = vpop.f32.mrb[0].mxu0
        %v1540 = vadd.f32 0.0, %v1539
        %1541 = vmatprep.mubr.bf16.mxu0 0
        %1542 = vmatmul.mubr.bf16.gmra.mrb[0].mxu0 %v1385
        %v1543 = vpop.f32.mrb[0].mxu0
        %v1544 = vadd.f32 0.0, %v1543
        %v1545 = vpop.f32.mrb[0].mxu0
        %v1546 = vadd.f32 0.0, %v1545
        %v1547 = vpop.f32.mrb[0].mxu0
        %v1548 = vadd.f32 0.0, %v1547
        %v1549 = vpop.f32.mrb[0].mxu0
        %v1550 = vadd.f32 0.0, %v1549
        %1551 = vmatprep.mubr.bf16.mxu0 0
        %1552 = vmatmul.mubr.bf16.gmra.mrb[0].mxu0 %v1388
        %v1553 = vpop.f32.mrb[0].mxu0
        %v1554 = vadd.f32 0.0, %v1553
        %v1555 = vpop.f32.mrb[0].mxu0
        %v1556 = vadd.f32 0.0, %v1555
        %v1557 = vpop.f32.mrb[0].mxu0
        %v1558 = vadd.f32 0.0, %v1557
        %v1559 = vpop.f32.mrb[0].mxu0
        %v1560 = vadd.f32 0.0, %v1559
        %1561 = vmatprep.mubr.bf16.mxu0 0
        %1562 = vmatmul.mubr.bf16.gmra.mrb[0].mxu0 %v1391
        %v1563 = vpop.f32.mrb[0].mxu0
        %v1564 = vadd.f32 0.0, %v1563
        %v1565 = vpop.f32.mrb[0].mxu0
        %v1566 = vadd.f32 0.0, %v1565
        %v1567 = vpop.f32.mrb[0].mxu0
        %v1568 = vadd.f32 0.0, %v1567
        %v1569 = vpop.f32.mrb[0].mxu0
        %v1570 = vadd.f32 0.0, %v1569
        %1571 = vmatprep.mubr.bf16.mxu0 0
        %1572 = vmatmul.mubr.bf16.gmra.mrb[0].mxu0 %v1394
        %v1573 = vpop.f32.mrb[0].mxu0
        %v1574 = vadd.f32 0.0, %v1573
        %v1575 = vpop.f32.mrb[0].mxu0
        %v1576 = vadd.f32 0.0, %v1575
        %v1577 = vpop.f32.mrb[0].mxu0
        %v1578 = vadd.f32 0.0, %v1577
        %v1579 = vpop.f32.mrb[0].mxu0
        %v1580 = vadd.f32 0.0, %v1579
        %1581 = vmatprep.mubr.bf16.mxu0 0
        %1582 = vmatmul.mubr.bf16.gmra.mrb[0].mxu0 %v1397
        %v1583 = vpop.f32.mrb[0].mxu0
        %v1584 = vadd.f32 0.0, %v1583
        %v1585 = vpop.f32.mrb[0].mxu0
        %v1586 = vadd.f32 0.0, %v1585
        %v1587 = vpop.f32.mrb[0].mxu0
        %v1588 = vadd.f32 0.0, %v1587
        %v1589 = vpop.f32.mrb[0].mxu0
        %v1590 = vadd.f32 0.0, %v1589
        %1591 = vdwg.mxu0
        %1592 = vxpose.xlu0.c.b16.start [1/8] %v736, 128
        %1593 = vxpose.xlu0.c.b16.cont [2/8] %v738, 128
        %1594 = vxpose.xlu0.c.b16.cont [3/8] 0, 128
        %1595 = vxpose.xlu0.c.b16.cont [4/8] 0, 128
        %1596 = vxpose.xlu0.c.b16.cont [5/8] 0, 128
        %1597 = vxpose.xlu0.c.b16.cont [6/8] 0, 128
        %1598 = vxpose.xlu0.c.b16.cont [7/8] 0, 128
        %1599 = vxpose.xlu0.c.b16.end [8/8] 0, 128
        %v1600 = vpop.trf.xlu0
        %v1601 = vpop.trf.xlu0
        %v1602 = vpop.trf.xlu0
        %v1603 = vpop.trf.xlu0
        %v1604 = vpop.trf.xlu0
        %v1605 = vpop.trf.xlu0
        %v1606 = vpop.trf.xlu0
        %v1607 = vpop.trf.xlu0
        %1608 = vxpose.xlu0.c.b16.start [1/8] %v737, 128
        %1609 = vxpose.xlu0.c.b16.cont [2/8] %v739, 128
        %1610 = vxpose.xlu0.c.b16.cont [3/8] 0, 128
        %1611 = vxpose.xlu0.c.b16.cont [4/8] 0, 128
        %1612 = vxpose.xlu0.c.b16.cont [5/8] 0, 128
        %1613 = vxpose.xlu0.c.b16.cont [6/8] 0, 128
        %1614 = vxpose.xlu0.c.b16.cont [7/8] 0, 128
        %1615 = vxpose.xlu0.c.b16.end [8/8] 0, 128
        %v1616 = vpop.trf.xlu0
        %v1617 = vpop.trf.xlu0
        %v1618 = vpop.trf.xlu0
        %v1619 = vpop.trf.xlu0
        %v1620 = vpop.trf.xlu0
        %v1621 = vpop.trf.xlu0
        %v1622 = vpop.trf.xlu0
        %v1623 = vpop.trf.xlu0
        %v1625 = vsel %vm804, %v1600, 0
        %v1628 = vsel %vm804, %v1601, 0
        %v1631 = vsel %vm804, %v1602, 0
        %v1634 = vsel %vm804, %v1603, 0
        %v1637 = vsel %vm804, %v1604, 0
        %v1640 = vsel %vm804, %v1605, 0
        %v1643 = vsel %vm804, %v1606, 0
        %v1646 = vsel %vm804, %v1607, 0
        %v1649 = vsel %vm804, %v1616, 0
        %v1652 = vsel %vm804, %v1617, 0
        %v1655 = vsel %vm804, %v1618, 0
        %v1658 = vsel %vm804, %v1619, 0
        %v1661 = vsel %vm804, %v1620, 0
        %v1664 = vsel %vm804, %v1621, 0
        %v1667 = vsel %vm804, %v1622, 0
        %v1670 = vsel %vm804, %v1623, 0
        %1672 = vmatprep.subr.bf16.mxu0 %v753
        %1673 = vmatpush1.bf16.msra.mxu0 %v752
        %1674 = vmatprep.subr.bf16.mxu0 %v755
        %1675 = vmatpush1.bf16.msra.mxu0 %v754
        %1676 = vmatprep.subr.bf16.mxu0 0
        %1677 = vmatpush1.bf16.msra.mxu0 0
        %1678 = vmatprep.subr.bf16.mxu0 0
        %1679 = vmatpush1.bf16.msra.mxu0 0
        %1680 = vmatprep.subr.bf16.mxu0 0
        %1681 = vmatpush1.bf16.msra.mxu0 0
        %1682 = vmatprep.subr.bf16.mxu0 0
        %1683 = vmatpush1.bf16.msra.mxu0 0
        %1684 = vmatprep.subr.bf16.mxu0 0
        %1685 = vmatpush1.bf16.msra.mxu0 0
        %1686 = vmatprep.subr.bf16.mxu0 0
        %1687 = vmatpush1.bf16.msra.mxu0 0
        %1688 = vmatprep.subr.bf16.mxu0 0
        %1689 = vmatpush1.bf16.msra.mxu0 0
        %1690 = vmatprep.subr.bf16.mxu0 0
        %1691 = vmatpush1.bf16.msra.mxu0 0
        %1692 = vmatprep.subr.bf16.mxu0 0
        %1693 = vmatpush1.bf16.msra.mxu0 0
        %1694 = vmatprep.subr.bf16.mxu0 0
        %1695 = vmatpush1.bf16.msra.mxu0 0
        %1696 = vmatprep.subr.bf16.mxu0 0
        %1697 = vmatpush1.bf16.msra.mxu0 0
        %1698 = vmatprep.subr.bf16.mxu0 0
        %1699 = vmatpush1.bf16.msra.mxu0 0
        %1700 = vmatprep.subr.bf16.mxu0 0
        %1701 = vmatpush1.bf16.msra.mxu0 0
        %1702 = vmatprep.subr.bf16.mxu0 0
        %1703 = vmatpush1.bf16.msra.mxu0 0
        %1704 = vmatprep.mubr.bf16.mxu0 0
        %1705 = vmatmul.mubr.bf16.gmra.mrb[0].mxu0 %v1625
        %v1706 = vpop.f32.mrb[0].mxu0
        %v1707 = vadd.f32 0.0, %v1706
        %v1708 = vpop.f32.mrb[0].mxu0
        %v1709 = vadd.f32 0.0, %v1708
        %v1710 = vpop.f32.mrb[0].mxu0
        %v1711 = vadd.f32 0.0, %v1710
        %v1712 = vpop.f32.mrb[0].mxu0
        %v1713 = vadd.f32 0.0, %v1712
        %1714 = vmatprep.mubr.bf16.mxu0 0
        %1715 = vmatmul.mubr.bf16.gmra.mrb[0].mxu0 %v1628
        %v1716 = vpop.f32.mrb[0].mxu0
        %v1717 = vadd.f32 0.0, %v1716
        %v1718 = vpop.f32.mrb[0].mxu0
        %v1719 = vadd.f32 0.0, %v1718
        %v1720 = vpop.f32.mrb[0].mxu0
        %v1721 = vadd.f32 0.0, %v1720
        %v1722 = vpop.f32.mrb[0].mxu0
        %v1723 = vadd.f32 0.0, %v1722
        %1724 = vmatprep.mubr.bf16.mxu0 0
        %1725 = vmatmul.mubr.bf16.gmra.mrb[0].mxu0 %v1631
        %v1726 = vpop.f32.mrb[0].mxu0
        %v1727 = vadd.f32 0.0, %v1726
        %v1728 = vpop.f32.mrb[0].mxu0
        %v1729 = vadd.f32 0.0, %v1728
        %v1730 = vpop.f32.mrb[0].mxu0
        %v1731 = vadd.f32 0.0, %v1730
        %v1732 = vpop.f32.mrb[0].mxu0
        %v1733 = vadd.f32 0.0, %v1732
        %1734 = vmatprep.mubr.bf16.mxu0 0
        %1735 = vmatmul.mubr.bf16.gmra.mrb[0].mxu0 %v1634
        %v1736 = vpop.f32.mrb[0].mxu0
        %v1737 = vadd.f32 0.0, %v1736
        %v1738 = vpop.f32.mrb[0].mxu0
        %v1739 = vadd.f32 0.0, %v1738
        %v1740 = vpop.f32.mrb[0].mxu0
        %v1741 = vadd.f32 0.0, %v1740
        %v1742 = vpop.f32.mrb[0].mxu0
        %v1743 = vadd.f32 0.0, %v1742
        %1744 = vmatprep.mubr.bf16.mxu0 0
        %1745 = vmatmul.mubr.bf16.gmra.mrb[0].mxu0 %v1637
        %v1746 = vpop.f32.mrb[0].mxu0
        %v1747 = vadd.f32 0.0, %v1746
        %v1748 = vpop.f32.mrb[0].mxu0
        %v1749 = vadd.f32 0.0, %v1748
        %v1750 = vpop.f32.mrb[0].mxu0
        %v1751 = vadd.f32 0.0, %v1750
        %v1752 = vpop.f32.mrb[0].mxu0
        %v1753 = vadd.f32 0.0, %v1752
        %1754 = vmatprep.mubr.bf16.mxu0 0
        %1755 = vmatmul.mubr.bf16.gmra.mrb[0].mxu0 %v1640
        %v1756 = vpop.f32.mrb[0].mxu0
        %v1757 = vadd.f32 0.0, %v1756
        %v1758 = vpop.f32.mrb[0].mxu0
        %v1759 = vadd.f32 0.0, %v1758
        %v1760 = vpop.f32.mrb[0].mxu0
        %v1761 = vadd.f32 0.0, %v1760
        %v1762 = vpop.f32.mrb[0].mxu0
        %v1763 = vadd.f32 0.0, %v1762
        %1764 = vmatprep.mubr.bf16.mxu0 0
        %1765 = vmatmul.mubr.bf16.gmra.mrb[0].mxu0 %v1643
        %v1766 = vpop.f32.mrb[0].mxu0
        %v1767 = vadd.f32 0.0, %v1766
        %v1768 = vpop.f32.mrb[0].mxu0
        %v1769 = vadd.f32 0.0, %v1768
        %v1770 = vpop.f32.mrb[0].mxu0
        %v1771 = vadd.f32 0.0, %v1770
        %v1772 = vpop.f32.mrb[0].mxu0
        %v1773 = vadd.f32 0.0, %v1772
        %1774 = vmatprep.mubr.bf16.mxu0 0
        %1775 = vmatmul.mubr.bf16.gmra.mrb[0].mxu0 %v1646
        %v1776 = vpop.f32.mrb[0].mxu0
        %v1777 = vadd.f32 0.0, %v1776
        %v1778 = vpop.f32.mrb[0].mxu0
        %v1779 = vadd.f32 0.0, %v1778
        %v1780 = vpop.f32.mrb[0].mxu0
        %v1781 = vadd.f32 0.0, %v1780
        %v1782 = vpop.f32.mrb[0].mxu0
        %v1783 = vadd.f32 0.0, %v1782
        %1784 = vmatprep.mubr.bf16.mxu0 0
        %1785 = vmatmul.mubr.bf16.gmra.mrb[0].mxu0 %v1649
        %v1786 = vpop.f32.mrb[0].mxu0
        %v1787 = vadd.f32 0.0, %v1786
        %v1788 = vpop.f32.mrb[0].mxu0
        %v1789 = vadd.f32 0.0, %v1788
        %v1790 = vpop.f32.mrb[0].mxu0
        %v1791 = vadd.f32 0.0, %v1790
        %v1792 = vpop.f32.mrb[0].mxu0
        %v1793 = vadd.f32 0.0, %v1792
        %1794 = vmatprep.mubr.bf16.mxu0 0
        %1795 = vmatmul.mubr.bf16.gmra.mrb[0].mxu0 %v1652
        %v1796 = vpop.f32.mrb[0].mxu0
        %v1797 = vadd.f32 0.0, %v1796
        %v1798 = vpop.f32.mrb[0].mxu0
        %v1799 = vadd.f32 0.0, %v1798
        %v1800 = vpop.f32.mrb[0].mxu0
        %v1801 = vadd.f32 0.0, %v1800
        %v1802 = vpop.f32.mrb[0].mxu0
        %v1803 = vadd.f32 0.0, %v1802
        %1804 = vmatprep.mubr.bf16.mxu0 0
        %1805 = vmatmul.mubr.bf16.gmra.mrb[0].mxu0 %v1655
        %v1806 = vpop.f32.mrb[0].mxu0
        %v1807 = vadd.f32 0.0, %v1806
        %v1808 = vpop.f32.mrb[0].mxu0
        %v1809 = vadd.f32 0.0, %v1808
        %v1810 = vpop.f32.mrb[0].mxu0
        %v1811 = vadd.f32 0.0, %v1810
        %v1812 = vpop.f32.mrb[0].mxu0
        %v1813 = vadd.f32 0.0, %v1812
        %1814 = vmatprep.mubr.bf16.mxu0 0
        %1815 = vmatmul.mubr.bf16.gmra.mrb[0].mxu0 %v1658
        %v1816 = vpop.f32.mrb[0].mxu0
        %v1817 = vadd.f32 0.0, %v1816
        %v1818 = vpop.f32.mrb[0].mxu0
        %v1819 = vadd.f32 0.0, %v1818
        %v1820 = vpop.f32.mrb[0].mxu0
        %v1821 = vadd.f32 0.0, %v1820
        %v1822 = vpop.f32.mrb[0].mxu0
        %v1823 = vadd.f32 0.0, %v1822
        %1824 = vmatprep.mubr.bf16.mxu0 0
        %1825 = vmatmul.mubr.bf16.gmra.mrb[0].mxu0 %v1661
        %v1826 = vpop.f32.mrb[0].mxu0
        %v1827 = vadd.f32 0.0, %v1826
        %v1828 = vpop.f32.mrb[0].mxu0
        %v1829 = vadd.f32 0.0, %v1828
        %v1830 = vpop.f32.mrb[0].mxu0
        %v1831 = vadd.f32 0.0, %v1830
        %v1832 = vpop.f32.mrb[0].mxu0
        %v1833 = vadd.f32 0.0, %v1832
        %1834 = vmatprep.mubr.bf16.mxu0 0
        %1835 = vmatmul.mubr.bf16.gmra.mrb[0].mxu0 %v1664
        %v1836 = vpop.f32.mrb[0].mxu0
        %v1837 = vadd.f32 0.0, %v1836
        %v1838 = vpop.f32.mrb[0].mxu0
        %v1839 = vadd.f32 0.0, %v1838
        %v1840 = vpop.f32.mrb[0].mxu0
        %v1841 = vadd.f32 0.0, %v1840
        %v1842 = vpop.f32.mrb[0].mxu0
        %v1843 = vadd.f32 0.0, %v1842
        %1844 = vmatprep.mubr.bf16.mxu0 0
        %1845 = vmatmul.mubr.bf16.gmra.mrb[0].mxu0 %v1667
        %v1846 = vpop.f32.mrb[0].mxu0
        %v1847 = vadd.f32 0.0, %v1846
        %v1848 = vpop.f32.mrb[0].mxu0
        %v1849 = vadd.f32 0.0, %v1848
        %v1850 = vpop.f32.mrb[0].mxu0
        %v1851 = vadd.f32 0.0, %v1850
        %v1852 = vpop.f32.mrb[0].mxu0
        %v1853 = vadd.f32 0.0, %v1852
        %1854 = vmatprep.mubr.bf16.mxu0 0
        %1855 = vmatmul.mubr.bf16.gmra.mrb[0].mxu0 %v1670
        %v1856 = vpop.f32.mrb[0].mxu0
        %v1857 = vadd.f32 0.0, %v1856
        %v1858 = vpop.f32.mrb[0].mxu0
        %v1859 = vadd.f32 0.0, %v1858
        %v1860 = vpop.f32.mrb[0].mxu0
        %v1861 = vadd.f32 0.0, %v1860
        %v1862 = vpop.f32.mrb[0].mxu0
        %v1863 = vadd.f32 0.0, %v1862
        %1864 = vdwg.mxu0
        %v1865 = vmax.f32 %v888, %v890
        %1866 = vmax.xlane.f32.xlu0 %v1865
        %v1867 = vpop.xlane.xlu0 %1866
        %v1868 = vmax.f32 %v892, %v894
        %1869 = vmax.xlane.f32.xlu0 %v1868
        %v1870 = vpop.xlane.xlu0 %1869
        %v1871 = vmax.f32 %v898, %v900
        %1872 = vmax.xlane.f32.xlu0 %v1871
        %v1873 = vpop.xlane.xlu0 %1872
        %v1874 = vmax.f32 %v902, %v904
        %1875 = vmax.xlane.f32.xlu0 %v1874
        %v1876 = vpop.xlane.xlu0 %1875
        %v1877 = vmax.f32 %v908, %v910
        %1878 = vmax.xlane.f32.xlu0 %v1877
        %v1879 = vpop.xlane.xlu0 %1878
        %v1880 = vmax.f32 %v912, %v914
        %1881 = vmax.xlane.f32.xlu0 %v1880
        %v1882 = vpop.xlane.xlu0 %1881
        %v1883 = vmax.f32 %v918, %v920
        %1884 = vmax.xlane.f32.xlu0 %v1883
        %v1885 = vpop.xlane.xlu0 %1884
        %v1886 = vmax.f32 %v922, %v924
        %1887 = vmax.xlane.f32.xlu0 %v1886
        %v1888 = vpop.xlane.xlu0 %1887
        %v1889 = vmax.f32 %v928, %v930
        %1890 = vmax.xlane.f32.xlu0 %v1889
        %v1891 = vpop.xlane.xlu0 %1890
        %v1892 = vmax.f32 %v932, %v934
        %1893 = vmax.xlane.f32.xlu0 %v1892
        %v1894 = vpop.xlane.xlu0 %1893
        %v1895 = vmax.f32 %v938, %v940
        %1896 = vmax.xlane.f32.xlu0 %v1895
        %v1897 = vpop.xlane.xlu0 %1896
        %v1898 = vmax.f32 %v942, %v944
        %1899 = vmax.xlane.f32.xlu0 %v1898
        %v1900 = vpop.xlane.xlu0 %1899
        %v1901 = vmax.f32 %v948, %v950
        %1902 = vmax.xlane.f32.xlu0 %v1901
        %v1903 = vpop.xlane.xlu0 %1902
        %v1904 = vmax.f32 %v952, %v954
        %1905 = vmax.xlane.f32.xlu0 %v1904
        %v1906 = vpop.xlane.xlu0 %1905
        %v1907 = vmax.f32 %v958, %v960
        %1908 = vmax.xlane.f32.xlu0 %v1907
        %v1909 = vpop.xlane.xlu0 %1908
        %v1910 = vmax.f32 %v962, %v964
        %1911 = vmax.xlane.f32.xlu0 %v1910
        %v1912 = vpop.xlane.xlu0 %1911
        %v1913 = vmax.f32 %v968, %v970
        %1914 = vmax.xlane.f32.xlu0 %v1913
        %v1915 = vpop.xlane.xlu0 %1914
        %v1916 = vmax.f32 %v972, %v974
        %1917 = vmax.xlane.f32.xlu0 %v1916
        %v1918 = vpop.xlane.xlu0 %1917
        %v1919 = vmax.f32 %v978, %v980
        %1920 = vmax.xlane.f32.xlu0 %v1919
        %v1921 = vpop.xlane.xlu0 %1920
        %v1922 = vmax.f32 %v982, %v984
        %1923 = vmax.xlane.f32.xlu0 %v1922
        %v1924 = vpop.xlane.xlu0 %1923
        %v1925 = vmax.f32 %v988, %v990
        %1926 = vmax.xlane.f32.xlu0 %v1925
        %v1927 = vpop.xlane.xlu0 %1926
        %v1928 = vmax.f32 %v992, %v994
        %1929 = vmax.xlane.f32.xlu0 %v1928
        %v1930 = vpop.xlane.xlu0 %1929
        %v1931 = vmax.f32 %v998, %v1000
        %1932 = vmax.xlane.f32.xlu0 %v1931
        %v1933 = vpop.xlane.xlu0 %1932
        %v1934 = vmax.f32 %v1002, %v1004
        %1935 = vmax.xlane.f32.xlu0 %v1934
        %v1936 = vpop.xlane.xlu0 %1935
        %v1937 = vmax.f32 %v1008, %v1010
        %1938 = vmax.xlane.f32.xlu0 %v1937
        %v1939 = vpop.xlane.xlu0 %1938
        %v1940 = vmax.f32 %v1012, %v1014
        %1941 = vmax.xlane.f32.xlu0 %v1940
        %v1942 = vpop.xlane.xlu0 %1941
        %v1943 = vmax.f32 %v1018, %v1020
        %1944 = vmax.xlane.f32.xlu0 %v1943
        %v1945 = vpop.xlane.xlu0 %1944
        %v1946 = vmax.f32 %v1022, %v1024
        %1947 = vmax.xlane.f32.xlu0 %v1946
        %v1948 = vpop.xlane.xlu0 %1947
        %v1949 = vmax.f32 %v1028, %v1030
        %1950 = vmax.xlane.f32.xlu0 %v1949
        %v1951 = vpop.xlane.xlu0 %1950
        %v1952 = vmax.f32 %v1032, %v1034
        %1953 = vmax.xlane.f32.xlu0 %v1952
        %v1954 = vpop.xlane.xlu0 %1953
        %v1955 = vmax.f32 %v1038, %v1040
        %1956 = vmax.xlane.f32.xlu0 %v1955
        %v1957 = vpop.xlane.xlu0 %1956
        %v1958 = vmax.f32 %v1042, %v1044
        %1959 = vmax.xlane.f32.xlu0 %v1958
        %v1960 = vpop.xlane.xlu0 %1959
        %v1961 = vmax.f32 %v1161, %v1163
        %1962 = vmax.xlane.f32.xlu0 %v1961
        %v1963 = vpop.xlane.xlu0 %1962
        %v1964 = vmax.f32 %v1165, %v1167
        %1965 = vmax.xlane.f32.xlu0 %v1964
        %v1966 = vpop.xlane.xlu0 %1965
        %v1967 = vmax.f32 %v1171, %v1173
        %1968 = vmax.xlane.f32.xlu0 %v1967
        %v1969 = vpop.xlane.xlu0 %1968
        %v1970 = vmax.f32 %v1175, %v1177
        %1971 = vmax.xlane.f32.xlu0 %v1970
        %v1972 = vpop.xlane.xlu0 %1971
        %v1973 = vmax.f32 %v1181, %v1183
        %1974 = vmax.xlane.f32.xlu0 %v1973
        %v1975 = vpop.xlane.xlu0 %1974
        %v1976 = vmax.f32 %v1185, %v1187
        %1977 = vmax.xlane.f32.xlu0 %v1976
        %v1978 = vpop.xlane.xlu0 %1977
        %v1979 = vmax.f32 %v1191, %v1193
        %1980 = vmax.xlane.f32.xlu0 %v1979
        %v1981 = vpop.xlane.xlu0 %1980
        %v1982 = vmax.f32 %v1195, %v1197
        %1983 = vmax.xlane.f32.xlu0 %v1982
        %v1984 = vpop.xlane.xlu0 %1983
        %v1985 = vmax.f32 %v1201, %v1203
        %1986 = vmax.xlane.f32.xlu0 %v1985
        %v1987 = vpop.xlane.xlu0 %1986
        %v1988 = vmax.f32 %v1205, %v1207
        %1989 = vmax.xlane.f32.xlu0 %v1988
        %v1990 = vpop.xlane.xlu0 %1989
        %v1991 = vmax.f32 %v1211, %v1213
        %1992 = vmax.xlane.f32.xlu0 %v1991
        %v1993 = vpop.xlane.xlu0 %1992
        %v1994 = vmax.f32 %v1215, %v1217
        %1995 = vmax.xlane.f32.xlu0 %v1994
        %v1996 = vpop.xlane.xlu0 %1995
        %v1997 = vmax.f32 %v1221, %v1223
        %1998 = vmax.xlane.f32.xlu0 %v1997
        %v1999 = vpop.xlane.xlu0 %1998
        %v2000 = vmax.f32 %v1225, %v1227
        %2001 = vmax.xlane.f32.xlu0 %v2000
        %v2002 = vpop.xlane.xlu0 %2001
        %v2003 = vmax.f32 %v1231, %v1233
        %2004 = vmax.xlane.f32.xlu0 %v2003
        %v2005 = vpop.xlane.xlu0 %2004
        %v2006 = vmax.f32 %v1235, %v1237
        %2007 = vmax.xlane.f32.xlu0 %v2006
        %v2008 = vpop.xlane.xlu0 %2007
        %v2009 = vmax.f32 %v1241, %v1243
        %2010 = vmax.xlane.f32.xlu0 %v2009
        %v2011 = vpop.xlane.xlu0 %2010
        %v2012 = vmax.f32 %v1245, %v1247
        %2013 = vmax.xlane.f32.xlu0 %v2012
        %v2014 = vpop.xlane.xlu0 %2013
        %v2015 = vmax.f32 %v1251, %v1253
        %2016 = vmax.xlane.f32.xlu0 %v2015
        %v2017 = vpop.xlane.xlu0 %2016
        %v2018 = vmax.f32 %v1255, %v1257
        %2019 = vmax.xlane.f32.xlu0 %v2018
        %v2020 = vpop.xlane.xlu0 %2019
        %v2021 = vmax.f32 %v1261, %v1263
        %2022 = vmax.xlane.f32.xlu0 %v2021
        %v2023 = vpop.xlane.xlu0 %2022
        %v2024 = vmax.f32 %v1265, %v1267
        %2025 = vmax.xlane.f32.xlu0 %v2024
        %v2026 = vpop.xlane.xlu0 %2025
        %v2027 = vmax.f32 %v1271, %v1273
        %2028 = vmax.xlane.f32.xlu0 %v2027
        %v2029 = vpop.xlane.xlu0 %2028
        %v2030 = vmax.f32 %v1275, %v1277
        %2031 = vmax.xlane.f32.xlu0 %v2030
        %v2032 = vpop.xlane.xlu0 %2031
        %v2033 = vmax.f32 %v1281, %v1283
        %2034 = vmax.xlane.f32.xlu0 %v2033
        %v2035 = vpop.xlane.xlu0 %2034
        %v2036 = vmax.f32 %v1285, %v1287
        %2037 = vmax.xlane.f32.xlu0 %v2036
        %v2038 = vpop.xlane.xlu0 %2037
        %v2039 = vmax.f32 %v1291, %v1293
        %2040 = vmax.xlane.f32.xlu0 %v2039
        %v2041 = vpop.xlane.xlu0 %2040
        %v2042 = vmax.f32 %v1295, %v1297
        %2043 = vmax.xlane.f32.xlu0 %v2042
        %v2044 = vpop.xlane.xlu0 %2043
        %v2045 = vmax.f32 %v1301, %v1303
        %2046 = vmax.xlane.f32.xlu0 %v2045
        %v2047 = vpop.xlane.xlu0 %2046
        %v2048 = vmax.f32 %v1305, %v1307
        %2049 = vmax.xlane.f32.xlu0 %v2048
        %v2050 = vpop.xlane.xlu0 %2049
        %v2051 = vmax.f32 %v1311, %v1313
        %2052 = vmax.xlane.f32.xlu0 %v2051
        %v2053 = vpop.xlane.xlu0 %2052
        %v2054 = vmax.f32 %v1315, %v1317
        %2055 = vmax.xlane.f32.xlu0 %v2054
        %v2056 = vpop.xlane.xlu0 %2055
        %v2057 = vmax.f32 %v1434, %v1436
        %2058 = vmax.xlane.f32.xlu0 %v2057
        %v2059 = vpop.xlane.xlu0 %2058
        %v2060 = vmax.f32 %v1438, %v1440
        %2061 = vmax.xlane.f32.xlu0 %v2060
        %v2062 = vpop.xlane.xlu0 %2061
        %v2063 = vmax.f32 %v1444, %v1446
        %2064 = vmax.xlane.f32.xlu0 %v2063
        %v2065 = vpop.xlane.xlu0 %2064
        %v2066 = vmax.f32 %v1448, %v1450
        %2067 = vmax.xlane.f32.xlu0 %v2066
        %v2068 = vpop.xlane.xlu0 %2067
        %v2069 = vmax.f32 %v1454, %v1456
        %2070 = vmax.xlane.f32.xlu0 %v2069
        %v2071 = vpop.xlane.xlu0 %2070
        %v2072 = vmax.f32 %v1458, %v1460
        %2073 = vmax.xlane.f32.xlu0 %v2072
        %v2074 = vpop.xlane.xlu0 %2073
        %v2075 = vmax.f32 %v1464, %v1466
        %2076 = vmax.xlane.f32.xlu0 %v2075
        %v2077 = vpop.xlane.xlu0 %2076
        %v2078 = vmax.f32 %v1468, %v1470
        %2079 = vmax.xlane.f32.xlu0 %v2078
        %v2080 = vpop.xlane.xlu0 %2079
        %v2081 = vmax.f32 %v1474, %v1476
        %2082 = vmax.xlane.f32.xlu0 %v2081
        %v2083 = vpop.xlane.xlu0 %2082
        %v2084 = vmax.f32 %v1478, %v1480
        %2085 = vmax.xlane.f32.xlu0 %v2084
        %v2086 = vpop.xlane.xlu0 %2085
        %v2087 = vmax.f32 %v1484, %v1486
        %2088 = vmax.xlane.f32.xlu0 %v2087
        %v2089 = vpop.xlane.xlu0 %2088
        %v2090 = vmax.f32 %v1488, %v1490
        %2091 = vmax.xlane.f32.xlu0 %v2090
        %v2092 = vpop.xlane.xlu0 %2091
        %v2093 = vmax.f32 %v1494, %v1496
        %2094 = vmax.xlane.f32.xlu0 %v2093
        %v2095 = vpop.xlane.xlu0 %2094
        %v2096 = vmax.f32 %v1498, %v1500
        %2097 = vmax.xlane.f32.xlu0 %v2096
        %v2098 = vpop.xlane.xlu0 %2097
        %v2099 = vmax.f32 %v1504, %v1506
        %2100 = vmax.xlane.f32.xlu0 %v2099
        %v2101 = vpop.xlane.xlu0 %2100
        %v2102 = vmax.f32 %v1508, %v1510
        %2103 = vmax.xlane.f32.xlu0 %v2102
        %v2104 = vpop.xlane.xlu0 %2103
        %v2105 = vmax.f32 %v1514, %v1516
        %2106 = vmax.xlane.f32.xlu0 %v2105
        %v2107 = vpop.xlane.xlu0 %2106
        %v2108 = vmax.f32 %v1518, %v1520
        %2109 = vmax.xlane.f32.xlu0 %v2108
        %v2110 = vpop.xlane.xlu0 %2109
        %v2111 = vmax.f32 %v1524, %v1526
        %2112 = vmax.xlane.f32.xlu0 %v2111
        %v2113 = vpop.xlane.xlu0 %2112
        %v2114 = vmax.f32 %v1528, %v1530
        %2115 = vmax.xlane.f32.xlu0 %v2114
        %v2116 = vpop.xlane.xlu0 %2115
        %v2117 = vmax.f32 %v1534, %v1536
        %2118 = vmax.xlane.f32.xlu0 %v2117
        %v2119 = vpop.xlane.xlu0 %2118
        %v2120 = vmax.f32 %v1538, %v1540
        %2121 = vmax.xlane.f32.xlu0 %v2120
        %v2122 = vpop.xlane.xlu0 %2121
        %v2123 = vmax.f32 %v1544, %v1546
        %2124 = vmax.xlane.f32.xlu0 %v2123
        %v2125 = vpop.xlane.xlu0 %2124
        %v2126 = vmax.f32 %v1548, %v1550
        %2127 = vmax.xlane.f32.xlu0 %v2126
        %v2128 = vpop.xlane.xlu0 %2127
        %v2129 = vmax.f32 %v1554, %v1556
        %2130 = vmax.xlane.f32.xlu0 %v2129
        %v2131 = vpop.xlane.xlu0 %2130
        %v2132 = vmax.f32 %v1558, %v1560
        %2133 = vmax.xlane.f32.xlu0 %v2132
        %v2134 = vpop.xlane.xlu0 %2133
        %v2135 = vmax.f32 %v1564, %v1566
        %2136 = vmax.xlane.f32.xlu0 %v2135
        %v2137 = vpop.xlane.xlu0 %2136
        %v2138 = vmax.f32 %v1568, %v1570
        %2139 = vmax.xlane.f32.xlu0 %v2138
        %v2140 = vpop.xlane.xlu0 %2139
        %v2141 = vmax.f32 %v1574, %v1576
        %2142 = vmax.xlane.f32.xlu0 %v2141
        %v2143 = vpop.xlane.xlu0 %2142
        %v2144 = vmax.f32 %v1578, %v1580
        %2145 = vmax.xlane.f32.xlu0 %v2144
        %v2146 = vpop.xlane.xlu0 %2145
        %v2147 = vmax.f32 %v1584, %v1586
        %2148 = vmax.xlane.f32.xlu0 %v2147
        %v2149 = vpop.xlane.xlu0 %2148
        %v2150 = vmax.f32 %v1588, %v1590
        %2151 = vmax.xlane.f32.xlu0 %v2150
        %v2152 = vpop.xlane.xlu0 %2151
        %v2153 = vmax.f32 %v1707, %v1709
        %2154 = vmax.xlane.f32.xlu0 %v2153
        %v2155 = vpop.xlane.xlu0 %2154
        %v2156 = vmax.f32 %v1711, %v1713
        %2157 = vmax.xlane.f32.xlu0 %v2156
        %v2158 = vpop.xlane.xlu0 %2157
        %v2159 = vmax.f32 %v1717, %v1719
        %2160 = vmax.xlane.f32.xlu0 %v2159
        %v2161 = vpop.xlane.xlu0 %2160
        %v2162 = vmax.f32 %v1721, %v1723
        %2163 = vmax.xlane.f32.xlu0 %v2162
        %v2164 = vpop.xlane.xlu0 %2163
        %v2165 = vmax.f32 %v1727, %v1729
        %2166 = vmax.xlane.f32.xlu0 %v2165
        %v2167 = vpop.xlane.xlu0 %2166
        %v2168 = vmax.f32 %v1731, %v1733
        %2169 = vmax.xlane.f32.xlu0 %v2168
        %v2170 = vpop.xlane.xlu0 %2169
        %v2171 = vmax.f32 %v1737, %v1739
        %2172 = vmax.xlane.f32.xlu0 %v2171
        %v2173 = vpop.xlane.xlu0 %2172
        %v2174 = vmax.f32 %v1741, %v1743
        %2175 = vmax.xlane.f32.xlu0 %v2174
        %v2176 = vpop.xlane.xlu0 %2175
        %v2177 = vmax.f32 %v1747, %v1749
        %2178 = vmax.xlane.f32.xlu0 %v2177
        %v2179 = vpop.xlane.xlu0 %2178
        %v2180 = vmax.f32 %v1751, %v1753
        %2181 = vmax.xlane.f32.xlu0 %v2180
        %v2182 = vpop.xlane.xlu0 %2181
        %v2183 = vmax.f32 %v1757, %v1759
        %2184 = vmax.xlane.f32.xlu0 %v2183
        %v2185 = vpop.xlane.xlu0 %2184
        %v2186 = vmax.f32 %v1761, %v1763
        %2187 = vmax.xlane.f32.xlu0 %v2186
        %v2188 = vpop.xlane.xlu0 %2187
        %v2189 = vmax.f32 %v1767, %v1769
        %2190 = vmax.xlane.f32.xlu0 %v2189
        %v2191 = vpop.xlane.xlu0 %2190
        %v2192 = vmax.f32 %v1771, %v1773
        %2193 = vmax.xlane.f32.xlu0 %v2192
        %v2194 = vpop.xlane.xlu0 %2193
        %v2195 = vmax.f32 %v1777, %v1779
        %2196 = vmax.xlane.f32.xlu0 %v2195
        %v2197 = vpop.xlane.xlu0 %2196
        %v2198 = vmax.f32 %v1781, %v1783
        %2199 = vmax.xlane.f32.xlu0 %v2198
        %v2200 = vpop.xlane.xlu0 %2199
        %v2201 = vmax.f32 %v1787, %v1789
        %2202 = vmax.xlane.f32.xlu0 %v2201
        %v2203 = vpop.xlane.xlu0 %2202
        %v2204 = vmax.f32 %v1791, %v1793
        %2205 = vmax.xlane.f32.xlu0 %v2204
        %v2206 = vpop.xlane.xlu0 %2205
        %v2207 = vmax.f32 %v1797, %v1799
        %2208 = vmax.xlane.f32.xlu0 %v2207
        %v2209 = vpop.xlane.xlu0 %2208
        %v2210 = vmax.f32 %v1801, %v1803
        %2211 = vmax.xlane.f32.xlu0 %v2210
        %v2212 = vpop.xlane.xlu0 %2211
        %v2213 = vmax.f32 %v1807, %v1809
        %2214 = vmax.xlane.f32.xlu0 %v2213
        %v2215 = vpop.xlane.xlu0 %2214
        %v2216 = vmax.f32 %v1811, %v1813
        %2217 = vmax.xlane.f32.xlu0 %v2216
        %v2218 = vpop.xlane.xlu0 %2217
        %v2219 = vmax.f32 %v1817, %v1819
        %2220 = vmax.xlane.f32.xlu0 %v2219
        %v2221 = vpop.xlane.xlu0 %2220
        %v2222 = vmax.f32 %v1821, %v1823
        %2223 = vmax.xlane.f32.xlu0 %v2222
        %v2224 = vpop.xlane.xlu0 %2223
        %v2225 = vmax.f32 %v1827, %v1829
        %2226 = vmax.xlane.f32.xlu0 %v2225
        %v2227 = vpop.xlane.xlu0 %2226
        %v2228 = vmax.f32 %v1831, %v1833
        %2229 = vmax.xlane.f32.xlu0 %v2228
        %v2230 = vpop.xlane.xlu0 %2229
        %v2231 = vmax.f32 %v1837, %v1839
        %2232 = vmax.xlane.f32.xlu0 %v2231
        %v2233 = vpop.xlane.xlu0 %2232
        %v2234 = vmax.f32 %v1841, %v1843
        %2235 = vmax.xlane.f32.xlu0 %v2234
        %v2236 = vpop.xlane.xlu0 %2235
        %v2237 = vmax.f32 %v1847, %v1849
        %2238 = vmax.xlane.f32.xlu0 %v2237
        %v2239 = vpop.xlane.xlu0 %2238
        %v2240 = vmax.f32 %v1851, %v1853
        %2241 = vmax.xlane.f32.xlu0 %v2240
        %v2242 = vpop.xlane.xlu0 %2241
        %v2243 = vmax.f32 %v1857, %v1859
        %2244 = vmax.xlane.f32.xlu0 %v2243
        %v2245 = vpop.xlane.xlu0 %2244
        %v2246 = vmax.f32 %v1861, %v1863
        %2247 = vmax.xlane.f32.xlu0 %v2246
        %v2248 = vpop.xlane.xlu0 %2247
        %v2249 = vsub.f32 %v888, %v1867
        %v2250 = vsub.f32 %v890, %v1867
        %v2251 = vsub.f32 %v892, %v1870
        %v2252 = vsub.f32 %v894, %v1870
        %v2253 = vsub.f32 %v898, %v1873
        %v2254 = vsub.f32 %v900, %v1873
        %v2255 = vsub.f32 %v902, %v1876
        %v2256 = vsub.f32 %v904, %v1876
        %v2257 = vsub.f32 %v908, %v1879
        %v2258 = vsub.f32 %v910, %v1879
        %v2259 = vsub.f32 %v912, %v1882
        %v2260 = vsub.f32 %v914, %v1882
        %v2261 = vsub.f32 %v918, %v1885
        %v2262 = vsub.f32 %v920, %v1885
        %v2263 = vsub.f32 %v922, %v1888
        %v2264 = vsub.f32 %v924, %v1888
        %v2265 = vsub.f32 %v928, %v1891
        %v2266 = vsub.f32 %v930, %v1891
        %v2267 = vsub.f32 %v932, %v1894
        %v2268 = vsub.f32 %v934, %v1894
        %v2269 = vsub.f32 %v938, %v1897
        %v2270 = vsub.f32 %v940, %v1897
        %v2271 = vsub.f32 %v942, %v1900
        %v2272 = vsub.f32 %v944, %v1900
        %v2273 = vsub.f32 %v948, %v1903
        %v2274 = vsub.f32 %v950, %v1903
        %v2275 = vsub.f32 %v952, %v1906
        %v2276 = vsub.f32 %v954, %v1906
        %v2277 = vsub.f32 %v958, %v1909
        %v2278 = vsub.f32 %v960, %v1909
        %v2279 = vsub.f32 %v962, %v1912
        %v2280 = vsub.f32 %v964, %v1912
        %v2281 = vsub.f32 %v968, %v1915
        %v2282 = vsub.f32 %v970, %v1915
        %v2283 = vsub.f32 %v972, %v1918
        %v2284 = vsub.f32 %v974, %v1918
        %v2285 = vsub.f32 %v978, %v1921
        %v2286 = vsub.f32 %v980, %v1921
        %v2287 = vsub.f32 %v982, %v1924
        %v2288 = vsub.f32 %v984, %v1924
        %v2289 = vsub.f32 %v988, %v1927
        %v2290 = vsub.f32 %v990, %v1927
        %v2291 = vsub.f32 %v992, %v1930
        %v2292 = vsub.f32 %v994, %v1930
        %v2293 = vsub.f32 %v998, %v1933
        %v2294 = vsub.f32 %v1000, %v1933
        %v2295 = vsub.f32 %v1002, %v1936
        %v2296 = vsub.f32 %v1004, %v1936
        %v2297 = vsub.f32 %v1008, %v1939
        %v2298 = vsub.f32 %v1010, %v1939
        %v2299 = vsub.f32 %v1012, %v1942
        %v2300 = vsub.f32 %v1014, %v1942
        %v2301 = vsub.f32 %v1018, %v1945
        %v2302 = vsub.f32 %v1020, %v1945
        %v2303 = vsub.f32 %v1022, %v1948
        %v2304 = vsub.f32 %v1024, %v1948
        %v2305 = vsub.f32 %v1028, %v1951
        %v2306 = vsub.f32 %v1030, %v1951
        %v2307 = vsub.f32 %v1032, %v1954
        %v2308 = vsub.f32 %v1034, %v1954
        %v2309 = vsub.f32 %v1038, %v1957
        %v2310 = vsub.f32 %v1040, %v1957
        %v2311 = vsub.f32 %v1042, %v1960
        %v2312 = vsub.f32 %v1044, %v1960
        %v2313 = vsub.f32 %v1161, %v1963
        %v2314 = vsub.f32 %v1163, %v1963
        %v2315 = vsub.f32 %v1165, %v1966
        %v2316 = vsub.f32 %v1167, %v1966
        %v2317 = vsub.f32 %v1171, %v1969
        %v2318 = vsub.f32 %v1173, %v1969
        %v2319 = vsub.f32 %v1175, %v1972
        %v2320 = vsub.f32 %v1177, %v1972
        %v2321 = vsub.f32 %v1181, %v1975
        %v2322 = vsub.f32 %v1183, %v1975
        %v2323 = vsub.f32 %v1185, %v1978
        %v2324 = vsub.f32 %v1187, %v1978
        %v2325 = vsub.f32 %v1191, %v1981
        %v2326 = vsub.f32 %v1193, %v1981
        %v2327 = vsub.f32 %v1195, %v1984
        %v2328 = vsub.f32 %v1197, %v1984
        %v2329 = vsub.f32 %v1201, %v1987
        %v2330 = vsub.f32 %v1203, %v1987
        %v2331 = vsub.f32 %v1205, %v1990
        %v2332 = vsub.f32 %v1207, %v1990
        %v2333 = vsub.f32 %v1211, %v1993
        %v2334 = vsub.f32 %v1213, %v1993
        %v2335 = vsub.f32 %v1215, %v1996
        %v2336 = vsub.f32 %v1217, %v1996
        %v2337 = vsub.f32 %v1221, %v1999
        %v2338 = vsub.f32 %v1223, %v1999
        %v2339 = vsub.f32 %v1225, %v2002
        %v2340 = vsub.f32 %v1227, %v2002
        %v2341 = vsub.f32 %v1231, %v2005
        %v2342 = vsub.f32 %v1233, %v2005
        %v2343 = vsub.f32 %v1235, %v2008
        %v2344 = vsub.f32 %v1237, %v2008
        %v2345 = vsub.f32 %v1241, %v2011
        %v2346 = vsub.f32 %v1243, %v2011
        %v2347 = vsub.f32 %v1245, %v2014
        %v2348 = vsub.f32 %v1247, %v2014
        %v2349 = vsub.f32 %v1251, %v2017
        %v2350 = vsub.f32 %v1253, %v2017
        %v2351 = vsub.f32 %v1255, %v2020
        %v2352 = vsub.f32 %v1257, %v2020
        %v2353 = vsub.f32 %v1261, %v2023
        %v2354 = vsub.f32 %v1263, %v2023
        %v2355 = vsub.f32 %v1265, %v2026
        %v2356 = vsub.f32 %v1267, %v2026
        %v2357 = vsub.f32 %v1271, %v2029
        %v2358 = vsub.f32 %v1273, %v2029
        %v2359 = vsub.f32 %v1275, %v2032
        %v2360 = vsub.f32 %v1277, %v2032
        %v2361 = vsub.f32 %v1281, %v2035
        %v2362 = vsub.f32 %v1283, %v2035
        %v2363 = vsub.f32 %v1285, %v2038
        %v2364 = vsub.f32 %v1287, %v2038
        %v2365 = vsub.f32 %v1291, %v2041
        %v2366 = vsub.f32 %v1293, %v2041
        %v2367 = vsub.f32 %v1295, %v2044
        %v2368 = vsub.f32 %v1297, %v2044
        %v2369 = vsub.f32 %v1301, %v2047
        %v2370 = vsub.f32 %v1303, %v2047
        %v2371 = vsub.f32 %v1305, %v2050
        %v2372 = vsub.f32 %v1307, %v2050
        %v2373 = vsub.f32 %v1311, %v2053
        %v2374 = vsub.f32 %v1313, %v2053
        %v2375 = vsub.f32 %v1315, %v2056
        %v2376 = vsub.f32 %v1317, %v2056
        %v2377 = vsub.f32 %v1434, %v2059
        %v2378 = vsub.f32 %v1436, %v2059
        %v2379 = vsub.f32 %v1438, %v2062
        %v2380 = vsub.f32 %v1440, %v2062
        %v2381 = vsub.f32 %v1444, %v2065
        %v2382 = vsub.f32 %v1446, %v2065
        %v2383 = vsub.f32 %v1448, %v2068
        %v2384 = vsub.f32 %v1450, %v2068
        %v2385 = vsub.f32 %v1454, %v2071
        %v2386 = vsub.f32 %v1456, %v2071
        %v2387 = vsub.f32 %v1458, %v2074
        %v2388 = vsub.f32 %v1460, %v2074
        %v2389 = vsub.f32 %v1464, %v2077
        %v2390 = vsub.f32 %v1466, %v2077
        %v2391 = vsub.f32 %v1468, %v2080
        %v2392 = vsub.f32 %v1470, %v2080
        %v2393 = vsub.f32 %v1474, %v2083
        %v2394 = vsub.f32 %v1476, %v2083
        %v2395 = vsub.f32 %v1478, %v2086
        %v2396 = vsub.f32 %v1480, %v2086
        %v2397 = vsub.f32 %v1484, %v2089
        %v2398 = vsub.f32 %v1486, %v2089
        %v2399 = vsub.f32 %v1488, %v2092
        %v2400 = vsub.f32 %v1490, %v2092
        %v2401 = vsub.f32 %v1494, %v2095
        %v2402 = vsub.f32 %v1496, %v2095
        %v2403 = vsub.f32 %v1498, %v2098
        %v2404 = vsub.f32 %v1500, %v2098
        %v2405 = vsub.f32 %v1504, %v2101
        %v2406 = vsub.f32 %v1506, %v2101
        %v2407 = vsub.f32 %v1508, %v2104
        %v2408 = vsub.f32 %v1510, %v2104
        %v2409 = vsub.f32 %v1514, %v2107
        %v2410 = vsub.f32 %v1516, %v2107
        %v2411 = vsub.f32 %v1518, %v2110
        %v2412 = vsub.f32 %v1520, %v2110
        %v2413 = vsub.f32 %v1524, %v2113
        %v2414 = vsub.f32 %v1526, %v2113
        %v2415 = vsub.f32 %v1528, %v2116
        %v2416 = vsub.f32 %v1530, %v2116
        %v2417 = vsub.f32 %v1534, %v2119
        %v2418 = vsub.f32 %v1536, %v2119
        %v2419 = vsub.f32 %v1538, %v2122
        %v2420 = vsub.f32 %v1540, %v2122
        %v2421 = vsub.f32 %v1544, %v2125
        %v2422 = vsub.f32 %v1546, %v2125
        %v2423 = vsub.f32 %v1548, %v2128
        %v2424 = vsub.f32 %v1550, %v2128
        %v2425 = vsub.f32 %v1554, %v2131
        %v2426 = vsub.f32 %v1556, %v2131
        %v2427 = vsub.f32 %v1558, %v2134
        %v2428 = vsub.f32 %v1560, %v2134
        %v2429 = vsub.f32 %v1564, %v2137
        %v2430 = vsub.f32 %v1566, %v2137
        %v2431 = vsub.f32 %v1568, %v2140
        %v2432 = vsub.f32 %v1570, %v2140
        %v2433 = vsub.f32 %v1574, %v2143
        %v2434 = vsub.f32 %v1576, %v2143
        %v2435 = vsub.f32 %v1578, %v2146
        %v2436 = vsub.f32 %v1580, %v2146
        %v2437 = vsub.f32 %v1584, %v2149
        %v2438 = vsub.f32 %v1586, %v2149
        %v2439 = vsub.f32 %v1588, %v2152
        %v2440 = vsub.f32 %v1590, %v2152
        %v2441 = vsub.f32 %v1707, %v2155
        %v2442 = vsub.f32 %v1709, %v2155
        %v2443 = vsub.f32 %v1711, %v2158
        %v2444 = vsub.f32 %v1713, %v2158
        %v2445 = vsub.f32 %v1717, %v2161
        %v2446 = vsub.f32 %v1719, %v2161
        %v2447 = vsub.f32 %v1721, %v2164
        %v2448 = vsub.f32 %v1723, %v2164
        %v2449 = vsub.f32 %v1727, %v2167
        %v2450 = vsub.f32 %v1729, %v2167
        %v2451 = vsub.f32 %v1731, %v2170
        %v2452 = vsub.f32 %v1733, %v2170
        %v2453 = vsub.f32 %v1737, %v2173
        %v2454 = vsub.f32 %v1739, %v2173
        %v2455 = vsub.f32 %v1741, %v2176
        %v2456 = vsub.f32 %v1743, %v2176
        %v2457 = vsub.f32 %v1747, %v2179
        %v2458 = vsub.f32 %v1749, %v2179
        %v2459 = vsub.f32 %v1751, %v2182
        %v2460 = vsub.f32 %v1753, %v2182
        %v2461 = vsub.f32 %v1757, %v2185
        %v2462 = vsub.f32 %v1759, %v2185
        %v2463 = vsub.f32 %v1761, %v2188
        %v2464 = vsub.f32 %v1763, %v2188
        %v2465 = vsub.f32 %v1767, %v2191
        %v2466 = vsub.f32 %v1769, %v2191
        %v2467 = vsub.f32 %v1771, %v2194
        %v2468 = vsub.f32 %v1773, %v2194
        %v2469 = vsub.f32 %v1777, %v2197
        %v2470 = vsub.f32 %v1779, %v2197
        %v2471 = vsub.f32 %v1781, %v2200
        %v2472 = vsub.f32 %v1783, %v2200
        %v2473 = vsub.f32 %v1787, %v2203
        %v2474 = vsub.f32 %v1789, %v2203
        %v2475 = vsub.f32 %v1791, %v2206
        %v2476 = vsub.f32 %v1793, %v2206
        %v2477 = vsub.f32 %v1797, %v2209
        %v2478 = vsub.f32 %v1799, %v2209
        %v2479 = vsub.f32 %v1801, %v2212
        %v2480 = vsub.f32 %v1803, %v2212
        %v2481 = vsub.f32 %v1807, %v2215
        %v2482 = vsub.f32 %v1809, %v2215
        %v2483 = vsub.f32 %v1811, %v2218
        %v2484 = vsub.f32 %v1813, %v2218
        %v2485 = vsub.f32 %v1817, %v2221
        %v2486 = vsub.f32 %v1819, %v2221
        %v2487 = vsub.f32 %v1821, %v2224
        %v2488 = vsub.f32 %v1823, %v2224
        %v2489 = vsub.f32 %v1827, %v2227
        %v2490 = vsub.f32 %v1829, %v2227
        %v2491 = vsub.f32 %v1831, %v2230
        %v2492 = vsub.f32 %v1833, %v2230
        %v2493 = vsub.f32 %v1837, %v2233
        %v2494 = vsub.f32 %v1839, %v2233
        %v2495 = vsub.f32 %v1841, %v2236
        %v2496 = vsub.f32 %v1843, %v2236
        %v2497 = vsub.f32 %v1847, %v2239
        %v2498 = vsub.f32 %v1849, %v2239
        %v2499 = vsub.f32 %v1851, %v2242
        %v2500 = vsub.f32 %v1853, %v2242
        %v2501 = vsub.f32 %v1857, %v2245
        %v2502 = vsub.f32 %v1859, %v2245
        %v2503 = vsub.f32 %v1861, %v2248
        %v2504 = vsub.f32 %v1863, %v2248
        %v2505 = vmul.f32 %v2249, 1.442695
        %v2506 = vpow.pop %v2505
        %v2507 = vmul.f32 %v2250, 1.442695
        %v2508 = vpow.pop %v2507
        %v2509 = vmul.f32 %v2251, 1.442695
        %v2510 = vpow.pop %v2509
        %v2511 = vmul.f32 %v2252, 1.442695
        %v2512 = vpow.pop %v2511
        %v2513 = vmul.f32 %v2253, 1.442695
        %v2514 = vpow.pop %v2513
        %v2515 = vmul.f32 %v2254, 1.442695
        %v2516 = vpow.pop %v2515
        %v2517 = vmul.f32 %v2255, 1.442695
        %v2518 = vpow.pop %v2517
        %v2519 = vmul.f32 %v2256, 1.442695
        %v2520 = vpow.pop %v2519
        %v2521 = vmul.f32 %v2257, 1.442695
        %v2522 = vpow.pop %v2521
        %v2523 = vmul.f32 %v2258, 1.442695
        %v2524 = vpow.pop %v2523
        %v2525 = vmul.f32 %v2259, 1.442695
        %v2526 = vpow.pop %v2525
        %v2527 = vmul.f32 %v2260, 1.442695
        %v2528 = vpow.pop %v2527
        %v2529 = vmul.f32 %v2261, 1.442695
        %v2530 = vpow.pop %v2529
        %v2531 = vmul.f32 %v2262, 1.442695
        %v2532 = vpow.pop %v2531
        %v2533 = vmul.f32 %v2263, 1.442695
        %v2534 = vpow.pop %v2533
        %v2535 = vmul.f32 %v2264, 1.442695
        %v2536 = vpow.pop %v2535
        %v2537 = vmul.f32 %v2265, 1.442695
        %v2538 = vpow.pop %v2537
        %v2539 = vmul.f32 %v2266, 1.442695
        %v2540 = vpow.pop %v2539
        %v2541 = vmul.f32 %v2267, 1.442695
        %v2542 = vpow.pop %v2541
        %v2543 = vmul.f32 %v2268, 1.442695
        %v2544 = vpow.pop %v2543
        %v2545 = vmul.f32 %v2269, 1.442695
        %v2546 = vpow.pop %v2545
        %v2547 = vmul.f32 %v2270, 1.442695
        %v2548 = vpow.pop %v2547
        %v2549 = vmul.f32 %v2271, 1.442695
        %v2550 = vpow.pop %v2549
        %v2551 = vmul.f32 %v2272, 1.442695
        %v2552 = vpow.pop %v2551
        %v2553 = vmul.f32 %v2273, 1.442695
        %v2554 = vpow.pop %v2553
        %v2555 = vmul.f32 %v2274, 1.442695
        %v2556 = vpow.pop %v2555
        %v2557 = vmul.f32 %v2275, 1.442695
        %v2558 = vpow.pop %v2557
        %v2559 = vmul.f32 %v2276, 1.442695
        %v2560 = vpow.pop %v2559
        %v2561 = vmul.f32 %v2277, 1.442695
        %v2562 = vpow.pop %v2561
        %v2563 = vmul.f32 %v2278, 1.442695
        %v2564 = vpow.pop %v2563
        %v2565 = vmul.f32 %v2279, 1.442695
        %v2566 = vpow.pop %v2565
        %v2567 = vmul.f32 %v2280, 1.442695
        %v2568 = vpow.pop %v2567
        %v2569 = vmul.f32 %v2281, 1.442695
        %v2570 = vpow.pop %v2569
        %v2571 = vmul.f32 %v2282, 1.442695
        %v2572 = vpow.pop %v2571
        %v2573 = vmul.f32 %v2283, 1.442695
        %v2574 = vpow.pop %v2573
        %v2575 = vmul.f32 %v2284, 1.442695
        %v2576 = vpow.pop %v2575
        %v2577 = vmul.f32 %v2285, 1.442695
        %v2578 = vpow.pop %v2577
        %v2579 = vmul.f32 %v2286, 1.442695
        %v2580 = vpow.pop %v2579
        %v2581 = vmul.f32 %v2287, 1.442695
        %v2582 = vpow.pop %v2581
        %v2583 = vmul.f32 %v2288, 1.442695
        %v2584 = vpow.pop %v2583
        %v2585 = vmul.f32 %v2289, 1.442695
        %v2586 = vpow.pop %v2585
        %v2587 = vmul.f32 %v2290, 1.442695
        %v2588 = vpow.pop %v2587
        %v2589 = vmul.f32 %v2291, 1.442695
        %v2590 = vpow.pop %v2589
        %v2591 = vmul.f32 %v2292, 1.442695
        %v2592 = vpow.pop %v2591
        %v2593 = vmul.f32 %v2293, 1.442695
        %v2594 = vpow.pop %v2593
        %v2595 = vmul.f32 %v2294, 1.442695
        %v2596 = vpow.pop %v2595
        %v2597 = vmul.f32 %v2295, 1.442695
        %v2598 = vpow.pop %v2597
        %v2599 = vmul.f32 %v2296, 1.442695
        %v2600 = vpow.pop %v2599
        %v2601 = vmul.f32 %v2297, 1.442695
        %v2602 = vpow.pop %v2601
        %v2603 = vmul.f32 %v2298, 1.442695
        %v2604 = vpow.pop %v2603
        %v2605 = vmul.f32 %v2299, 1.442695
        %v2606 = vpow.pop %v2605
        %v2607 = vmul.f32 %v2300, 1.442695
        %v2608 = vpow.pop %v2607
        %v2609 = vmul.f32 %v2301, 1.442695
        %v2610 = vpow.pop %v2609
        %v2611 = vmul.f32 %v2302, 1.442695
        %v2612 = vpow.pop %v2611
        %v2613 = vmul.f32 %v2303, 1.442695
        %v2614 = vpow.pop %v2613
        %v2615 = vmul.f32 %v2304, 1.442695
        %v2616 = vpow.pop %v2615
        %v2617 = vmul.f32 %v2305, 1.442695
        %v2618 = vpow.pop %v2617
        %v2619 = vmul.f32 %v2306, 1.442695
        %v2620 = vpow.pop %v2619
        %v2621 = vmul.f32 %v2307, 1.442695
        %v2622 = vpow.pop %v2621
        %v2623 = vmul.f32 %v2308, 1.442695
        %v2624 = vpow.pop %v2623
        %v2625 = vmul.f32 %v2309, 1.442695
        %v2626 = vpow.pop %v2625
        %v2627 = vmul.f32 %v2310, 1.442695
        %v2628 = vpow.pop %v2627
        %v2629 = vmul.f32 %v2311, 1.442695
        %v2630 = vpow.pop %v2629
        %v2631 = vmul.f32 %v2312, 1.442695
        %v2632 = vpow.pop %v2631
        %v2633 = vmul.f32 %v2313, 1.442695
        %v2634 = vpow.pop %v2633
        %v2635 = vmul.f32 %v2314, 1.442695
        %v2636 = vpow.pop %v2635
        %v2637 = vmul.f32 %v2315, 1.442695
        %v2638 = vpow.pop %v2637
        %v2639 = vmul.f32 %v2316, 1.442695
        %v2640 = vpow.pop %v2639
        %v2641 = vmul.f32 %v2317, 1.442695
        %v2642 = vpow.pop %v2641
        %v2643 = vmul.f32 %v2318, 1.442695
        %v2644 = vpow.pop %v2643
        %v2645 = vmul.f32 %v2319, 1.442695
        %v2646 = vpow.pop %v2645
        %v2647 = vmul.f32 %v2320, 1.442695
        %v2648 = vpow.pop %v2647
        %v2649 = vmul.f32 %v2321, 1.442695
        %v2650 = vpow.pop %v2649
        %v2651 = vmul.f32 %v2322, 1.442695
        %v2652 = vpow.pop %v2651
        %v2653 = vmul.f32 %v2323, 1.442695
        %v2654 = vpow.pop %v2653
        %v2655 = vmul.f32 %v2324, 1.442695
        %v2656 = vpow.pop %v2655
        %v2657 = vmul.f32 %v2325, 1.442695
        %v2658 = vpow.pop %v2657
        %v2659 = vmul.f32 %v2326, 1.442695
        %v2660 = vpow.pop %v2659
        %v2661 = vmul.f32 %v2327, 1.442695
        %v2662 = vpow.pop %v2661
        %v2663 = vmul.f32 %v2328, 1.442695
        %v2664 = vpow.pop %v2663
        %v2665 = vmul.f32 %v2329, 1.442695
        %v2666 = vpow.pop %v2665
        %v2667 = vmul.f32 %v2330, 1.442695
        %v2668 = vpow.pop %v2667
        %v2669 = vmul.f32 %v2331, 1.442695
        %v2670 = vpow.pop %v2669
        %v2671 = vmul.f32 %v2332, 1.442695
        %v2672 = vpow.pop %v2671
        %v2673 = vmul.f32 %v2333, 1.442695
        %v2674 = vpow.pop %v2673
        %v2675 = vmul.f32 %v2334, 1.442695
        %v2676 = vpow.pop %v2675
        %v2677 = vmul.f32 %v2335, 1.442695
        %v2678 = vpow.pop %v2677
        %v2679 = vmul.f32 %v2336, 1.442695
        %v2680 = vpow.pop %v2679
        %v2681 = vmul.f32 %v2337, 1.442695
        %v2682 = vpow.pop %v2681
        %v2683 = vmul.f32 %v2338, 1.442695
        %v2684 = vpow.pop %v2683
        %v2685 = vmul.f32 %v2339, 1.442695
        %v2686 = vpow.pop %v2685
        %v2687 = vmul.f32 %v2340, 1.442695
        %v2688 = vpow.pop %v2687
        %v2689 = vmul.f32 %v2341, 1.442695
        %v2690 = vpow.pop %v2689
        %v2691 = vmul.f32 %v2342, 1.442695
        %v2692 = vpow.pop %v2691
        %v2693 = vmul.f32 %v2343, 1.442695
        %v2694 = vpow.pop %v2693
        %v2695 = vmul.f32 %v2344, 1.442695
        %v2696 = vpow.pop %v2695
        %v2697 = vmul.f32 %v2345, 1.442695
        %v2698 = vpow.pop %v2697
        %v2699 = vmul.f32 %v2346, 1.442695
        %v2700 = vpow.pop %v2699
        %v2701 = vmul.f32 %v2347, 1.442695
        %v2702 = vpow.pop %v2701
        %v2703 = vmul.f32 %v2348, 1.442695
        %v2704 = vpow.pop %v2703
        %v2705 = vmul.f32 %v2349, 1.442695
        %v2706 = vpow.pop %v2705
        %v2707 = vmul.f32 %v2350, 1.442695
        %v2708 = vpow.pop %v2707
        %v2709 = vmul.f32 %v2351, 1.442695
        %v2710 = vpow.pop %v2709
        %v2711 = vmul.f32 %v2352, 1.442695
        %v2712 = vpow.pop %v2711
        %v2713 = vmul.f32 %v2353, 1.442695
        %v2714 = vpow.pop %v2713
        %v2715 = vmul.f32 %v2354, 1.442695
        %v2716 = vpow.pop %v2715
        %v2717 = vmul.f32 %v2355, 1.442695
        %v2718 = vpow.pop %v2717
        %v2719 = vmul.f32 %v2356, 1.442695
        %v2720 = vpow.pop %v2719
        %v2721 = vmul.f32 %v2357, 1.442695
        %v2722 = vpow.pop %v2721
        %v2723 = vmul.f32 %v2358, 1.442695
        %v2724 = vpow.pop %v2723
        %v2725 = vmul.f32 %v2359, 1.442695
        %v2726 = vpow.pop %v2725
        %v2727 = vmul.f32 %v2360, 1.442695
        %v2728 = vpow.pop %v2727
        %v2729 = vmul.f32 %v2361, 1.442695
        %v2730 = vpow.pop %v2729
        %v2731 = vmul.f32 %v2362, 1.442695
        %v2732 = vpow.pop %v2731
        %v2733 = vmul.f32 %v2363, 1.442695
        %v2734 = vpow.pop %v2733
        %v2735 = vmul.f32 %v2364, 1.442695
        %v2736 = vpow.pop %v2735
        %v2737 = vmul.f32 %v2365, 1.442695
        %v2738 = vpow.pop %v2737
        %v2739 = vmul.f32 %v2366, 1.442695
        %v2740 = vpow.pop %v2739
        %v2741 = vmul.f32 %v2367, 1.442695
        %v2742 = vpow.pop %v2741
        %v2743 = vmul.f32 %v2368, 1.442695
        %v2744 = vpow.pop %v2743
        %v2745 = vmul.f32 %v2369, 1.442695
        %v2746 = vpow.pop %v2745
        %v2747 = vmul.f32 %v2370, 1.442695
        %v2748 = vpow.pop %v2747
        %v2749 = vmul.f32 %v2371, 1.442695
        %v2750 = vpow.pop %v2749
        %v2751 = vmul.f32 %v2372, 1.442695
        %v2752 = vpow.pop %v2751
        %v2753 = vmul.f32 %v2373, 1.442695
        %v2754 = vpow.pop %v2753
        %v2755 = vmul.f32 %v2374, 1.442695
        %v2756 = vpow.pop %v2755
        %v2757 = vmul.f32 %v2375, 1.442695
        %v2758 = vpow.pop %v2757
        %v2759 = vmul.f32 %v2376, 1.442695
        %v2760 = vpow.pop %v2759
        %v2761 = vmul.f32 %v2377, 1.442695
        %v2762 = vpow.pop %v2761
        %v2763 = vmul.f32 %v2378, 1.442695
        %v2764 = vpow.pop %v2763
        %v2765 = vmul.f32 %v2379, 1.442695
        %v2766 = vpow.pop %v2765
        %v2767 = vmul.f32 %v2380, 1.442695
        %v2768 = vpow.pop %v2767
        %v2769 = vmul.f32 %v2381, 1.442695
        %v2770 = vpow.pop %v2769
        %v2771 = vmul.f32 %v2382, 1.442695
        %v2772 = vpow.pop %v2771
        %v2773 = vmul.f32 %v2383, 1.442695
        %v2774 = vpow.pop %v2773
        %v2775 = vmul.f32 %v2384, 1.442695
        %v2776 = vpow.pop %v2775
        %v2777 = vmul.f32 %v2385, 1.442695
        %v2778 = vpow.pop %v2777
        %v2779 = vmul.f32 %v2386, 1.442695
        %v2780 = vpow.pop %v2779
        %v2781 = vmul.f32 %v2387, 1.442695
        %v2782 = vpow.pop %v2781
        %v2783 = vmul.f32 %v2388, 1.442695
        %v2784 = vpow.pop %v2783
        %v2785 = vmul.f32 %v2389, 1.442695
        %v2786 = vpow.pop %v2785
        %v2787 = vmul.f32 %v2390, 1.442695
        %v2788 = vpow.pop %v2787
        %v2789 = vmul.f32 %v2391, 1.442695
        %v2790 = vpow.pop %v2789
        %v2791 = vmul.f32 %v2392, 1.442695
        %v2792 = vpow.pop %v2791
        %v2793 = vmul.f32 %v2393, 1.442695
        %v2794 = vpow.pop %v2793
        %v2795 = vmul.f32 %v2394, 1.442695
        %v2796 = vpow.pop %v2795
        %v2797 = vmul.f32 %v2395, 1.442695
        %v2798 = vpow.pop %v2797
        %v2799 = vmul.f32 %v2396, 1.442695
        %v2800 = vpow.pop %v2799
        %v2801 = vmul.f32 %v2397, 1.442695
        %v2802 = vpow.pop %v2801
        %v2803 = vmul.f32 %v2398, 1.442695
        %v2804 = vpow.pop %v2803
        %v2805 = vmul.f32 %v2399, 1.442695
        %v2806 = vpow.pop %v2805
        %v2807 = vmul.f32 %v2400, 1.442695
        %v2808 = vpow.pop %v2807
        %v2809 = vmul.f32 %v2401, 1.442695
        %v2810 = vpow.pop %v2809
        %v2811 = vmul.f32 %v2402, 1.442695
        %v2812 = vpow.pop %v2811
        %v2813 = vmul.f32 %v2403, 1.442695
        %v2814 = vpow.pop %v2813
        %v2815 = vmul.f32 %v2404, 1.442695
        %v2816 = vpow.pop %v2815
        %v2817 = vmul.f32 %v2405, 1.442695
        %v2818 = vpow.pop %v2817
        %v2819 = vmul.f32 %v2406, 1.442695
        %v2820 = vpow.pop %v2819
        %v2821 = vmul.f32 %v2407, 1.442695
        %v2822 = vpow.pop %v2821
        %v2823 = vmul.f32 %v2408, 1.442695
        %v2824 = vpow.pop %v2823
        %v2825 = vmul.f32 %v2409, 1.442695
        %v2826 = vpow.pop %v2825
        %v2827 = vmul.f32 %v2410, 1.442695
        %v2828 = vpow.pop %v2827
        %v2829 = vmul.f32 %v2411, 1.442695
        %v2830 = vpow.pop %v2829
        %v2831 = vmul.f32 %v2412, 1.442695
        %v2832 = vpow.pop %v2831
        %v2833 = vmul.f32 %v2413, 1.442695
        %v2834 = vpow.pop %v2833
        %v2835 = vmul.f32 %v2414, 1.442695
        %v2836 = vpow.pop %v2835
        %v2837 = vmul.f32 %v2415, 1.442695
        %v2838 = vpow.pop %v2837
        %v2839 = vmul.f32 %v2416, 1.442695
        %v2840 = vpow.pop %v2839
        %v2841 = vmul.f32 %v2417, 1.442695
        %v2842 = vpow.pop %v2841
        %v2843 = vmul.f32 %v2418, 1.442695
        %v2844 = vpow.pop %v2843
        %v2845 = vmul.f32 %v2419, 1.442695
        %v2846 = vpow.pop %v2845
        %v2847 = vmul.f32 %v2420, 1.442695
        %v2848 = vpow.pop %v2847
        %v2849 = vmul.f32 %v2421, 1.442695
        %v2850 = vpow.pop %v2849
        %v2851 = vmul.f32 %v2422, 1.442695
        %v2852 = vpow.pop %v2851
        %v2853 = vmul.f32 %v2423, 1.442695
        %v2854 = vpow.pop %v2853
        %v2855 = vmul.f32 %v2424, 1.442695
        %v2856 = vpow.pop %v2855
        %v2857 = vmul.f32 %v2425, 1.442695
        %v2858 = vpow.pop %v2857
        %v2859 = vmul.f32 %v2426, 1.442695
        %v2860 = vpow.pop %v2859
        %v2861 = vmul.f32 %v2427, 1.442695
        %v2862 = vpow.pop %v2861
        %v2863 = vmul.f32 %v2428, 1.442695
        %v2864 = vpow.pop %v2863
        %v2865 = vmul.f32 %v2429, 1.442695
        %v2866 = vpow.pop %v2865
        %v2867 = vmul.f32 %v2430, 1.442695
        %v2868 = vpow.pop %v2867
        %v2869 = vmul.f32 %v2431, 1.442695
        %v2870 = vpow.pop %v2869
        %v2871 = vmul.f32 %v2432, 1.442695
        %v2872 = vpow.pop %v2871
        %v2873 = vmul.f32 %v2433, 1.442695
        %v2874 = vpow.pop %v2873
        %v2875 = vmul.f32 %v2434, 1.442695
        %v2876 = vpow.pop %v2875
        %v2877 = vmul.f32 %v2435, 1.442695
        %v2878 = vpow.pop %v2877
        %v2879 = vmul.f32 %v2436, 1.442695
        %v2880 = vpow.pop %v2879
        %v2881 = vmul.f32 %v2437, 1.442695
        %v2882 = vpow.pop %v2881
        %v2883 = vmul.f32 %v2438, 1.442695
        %v2884 = vpow.pop %v2883
        %v2885 = vmul.f32 %v2439, 1.442695
        %v2886 = vpow.pop %v2885
        %v2887 = vmul.f32 %v2440, 1.442695
        %v2888 = vpow.pop %v2887
        %v2889 = vmul.f32 %v2441, 1.442695
        %v2890 = vpow.pop %v2889
        %v2891 = vmul.f32 %v2442, 1.442695
        %v2892 = vpow.pop %v2891
        %v2893 = vmul.f32 %v2443, 1.442695
        %v2894 = vpow.pop %v2893
        %v2895 = vmul.f32 %v2444, 1.442695
        %v2896 = vpow.pop %v2895
        %v2897 = vmul.f32 %v2445, 1.442695
        %v2898 = vpow.pop %v2897
        %v2899 = vmul.f32 %v2446, 1.442695
        %v2900 = vpow.pop %v2899
        %v2901 = vmul.f32 %v2447, 1.442695
        %v2902 = vpow.pop %v2901
        %v2903 = vmul.f32 %v2448, 1.442695
        %v2904 = vpow.pop %v2903
        %v2905 = vmul.f32 %v2449, 1.442695
        %v2906 = vpow.pop %v2905
        %v2907 = vmul.f32 %v2450, 1.442695
        %v2908 = vpow.pop %v2907
        %v2909 = vmul.f32 %v2451, 1.442695
        %v2910 = vpow.pop %v2909
        %v2911 = vmul.f32 %v2452, 1.442695
        %v2912 = vpow.pop %v2911
        %v2913 = vmul.f32 %v2453, 1.442695
        %v2914 = vpow.pop %v2913
        %v2915 = vmul.f32 %v2454, 1.442695
        %v2916 = vpow.pop %v2915
        %v2917 = vmul.f32 %v2455, 1.442695
        %v2918 = vpow.pop %v2917
        %v2919 = vmul.f32 %v2456, 1.442695
        %v2920 = vpow.pop %v2919
        %v2921 = vmul.f32 %v2457, 1.442695
        %v2922 = vpow.pop %v2921
        %v2923 = vmul.f32 %v2458, 1.442695
        %v2924 = vpow.pop %v2923
        %v2925 = vmul.f32 %v2459, 1.442695
        %v2926 = vpow.pop %v2925
        %v2927 = vmul.f32 %v2460, 1.442695
        %v2928 = vpow.pop %v2927
        %v2929 = vmul.f32 %v2461, 1.442695
        %v2930 = vpow.pop %v2929
        %v2931 = vmul.f32 %v2462, 1.442695
        %v2932 = vpow.pop %v2931
        %v2933 = vmul.f32 %v2463, 1.442695
        %v2934 = vpow.pop %v2933
        %v2935 = vmul.f32 %v2464, 1.442695
        %v2936 = vpow.pop %v2935
        %v2937 = vmul.f32 %v2465, 1.442695
        %v2938 = vpow.pop %v2937
        %v2939 = vmul.f32 %v2466, 1.442695
        %v2940 = vpow.pop %v2939
        %v2941 = vmul.f32 %v2467, 1.442695
        %v2942 = vpow.pop %v2941
        %v2943 = vmul.f32 %v2468, 1.442695
        %v2944 = vpow.pop %v2943
        %v2945 = vmul.f32 %v2469, 1.442695
        %v2946 = vpow.pop %v2945
        %v2947 = vmul.f32 %v2470, 1.442695
        %v2948 = vpow.pop %v2947
        %v2949 = vmul.f32 %v2471, 1.442695
        %v2950 = vpow.pop %v2949
        %v2951 = vmul.f32 %v2472, 1.442695
        %v2952 = vpow.pop %v2951
        %v2953 = vmul.f32 %v2473, 1.442695
        %v2954 = vpow.pop %v2953
        %v2955 = vmul.f32 %v2474, 1.442695
        %v2956 = vpow.pop %v2955
        %v2957 = vmul.f32 %v2475, 1.442695
        %v2958 = vpow.pop %v2957
        %v2959 = vmul.f32 %v2476, 1.442695
        %v2960 = vpow.pop %v2959
        %v2961 = vmul.f32 %v2477, 1.442695
        %v2962 = vpow.pop %v2961
        %v2963 = vmul.f32 %v2478, 1.442695
        %v2964 = vpow.pop %v2963
        %v2965 = vmul.f32 %v2479, 1.442695
        %v2966 = vpow.pop %v2965
        %v2967 = vmul.f32 %v2480, 1.442695
        %v2968 = vpow.pop %v2967
        %v2969 = vmul.f32 %v2481, 1.442695
        %v2970 = vpow.pop %v2969
        %v2971 = vmul.f32 %v2482, 1.442695
        %v2972 = vpow.pop %v2971
        %v2973 = vmul.f32 %v2483, 1.442695
        %v2974 = vpow.pop %v2973
        %v2975 = vmul.f32 %v2484, 1.442695
        %v2976 = vpow.pop %v2975
        %v2977 = vmul.f32 %v2485, 1.442695
        %v2978 = vpow.pop %v2977
        %v2979 = vmul.f32 %v2486, 1.442695
        %v2980 = vpow.pop %v2979
        %v2981 = vmul.f32 %v2487, 1.442695
        %v2982 = vpow.pop %v2981
        %v2983 = vmul.f32 %v2488, 1.442695
        %v2984 = vpow.pop %v2983
        %v2985 = vmul.f32 %v2489, 1.442695
        %v2986 = vpow.pop %v2985
        %v2987 = vmul.f32 %v2490, 1.442695
        %v2988 = vpow.pop %v2987
        %v2989 = vmul.f32 %v2491, 1.442695
        %v2990 = vpow.pop %v2989
        %v2991 = vmul.f32 %v2492, 1.442695
        %v2992 = vpow.pop %v2991
        %v2993 = vmul.f32 %v2493, 1.442695
        %v2994 = vpow.pop %v2993
        %v2995 = vmul.f32 %v2494, 1.442695
        %v2996 = vpow.pop %v2995
        %v2997 = vmul.f32 %v2495, 1.442695
        %v2998 = vpow.pop %v2997
        %v2999 = vmul.f32 %v2496, 1.442695
        %v3000 = vpow.pop %v2999
        %v3001 = vmul.f32 %v2497, 1.442695
        %v3002 = vpow.pop %v3001
        %v3003 = vmul.f32 %v2498, 1.442695
        %v3004 = vpow.pop %v3003
        %v3005 = vmul.f32 %v2499, 1.442695
        %v3006 = vpow.pop %v3005
        %v3007 = vmul.f32 %v2500, 1.442695
        %v3008 = vpow.pop %v3007
        %v3009 = vmul.f32 %v2501, 1.442695
        %v3010 = vpow.pop %v3009
        %v3011 = vmul.f32 %v2502, 1.442695
        %v3012 = vpow.pop %v3011
        %v3013 = vmul.f32 %v2503, 1.442695
        %v3014 = vpow.pop %v3013
        %v3015 = vmul.f32 %v2504, 1.442695
        %v3016 = vpow.pop %v3015
        %v3017 = vadd.f32 %v2506, %v2508
        %3018 = vadd.xlane.f32.xlu0 %v3017
        %v3019 = vpop.xlane.xlu0 %3018
        %v3020 = vadd.f32 %v2510, %v2512
        %3021 = vadd.xlane.f32.xlu0 %v3020
        %v3022 = vpop.xlane.xlu0 %3021
        %v3023 = vadd.f32 %v2514, %v2516
        %3024 = vadd.xlane.f32.xlu0 %v3023
        %v3025 = vpop.xlane.xlu0 %3024
        %v3026 = vadd.f32 %v2518, %v2520
        %3027 = vadd.xlane.f32.xlu0 %v3026
        %v3028 = vpop.xlane.xlu0 %3027
        %v3029 = vadd.f32 %v2522, %v2524
        %3030 = vadd.xlane.f32.xlu0 %v3029
        %v3031 = vpop.xlane.xlu0 %3030
        %v3032 = vadd.f32 %v2526, %v2528
        %3033 = vadd.xlane.f32.xlu0 %v3032
        %v3034 = vpop.xlane.xlu0 %3033
        %v3035 = vadd.f32 %v2530, %v2532
        %3036 = vadd.xlane.f32.xlu0 %v3035
        %v3037 = vpop.xlane.xlu0 %3036
        %v3038 = vadd.f32 %v2534, %v2536
        %3039 = vadd.xlane.f32.xlu0 %v3038
        %v3040 = vpop.xlane.xlu0 %3039
        %v3041 = vadd.f32 %v2538, %v2540
        %3042 = vadd.xlane.f32.xlu0 %v3041
        %v3043 = vpop.xlane.xlu0 %3042
        %v3044 = vadd.f32 %v2542, %v2544
        %3045 = vadd.xlane.f32.xlu0 %v3044
        %v3046 = vpop.xlane.xlu0 %3045
        %v3047 = vadd.f32 %v2546, %v2548
        %3048 = vadd.xlane.f32.xlu0 %v3047
        %v3049 = vpop.xlane.xlu0 %3048
        %v3050 = vadd.f32 %v2550, %v2552
        %3051 = vadd.xlane.f32.xlu0 %v3050
        %v3052 = vpop.xlane.xlu0 %3051
        %v3053 = vadd.f32 %v2554, %v2556
        %3054 = vadd.xlane.f32.xlu0 %v3053
        %v3055 = vpop.xlane.xlu0 %3054
        %v3056 = vadd.f32 %v2558, %v2560
        %3057 = vadd.xlane.f32.xlu0 %v3056
        %v3058 = vpop.xlane.xlu0 %3057
        %v3059 = vadd.f32 %v2562, %v2564
        %3060 = vadd.xlane.f32.xlu0 %v3059
        %v3061 = vpop.xlane.xlu0 %3060
        %v3062 = vadd.f32 %v2566, %v2568
        %3063 = vadd.xlane.f32.xlu0 %v3062
        %v3064 = vpop.xlane.xlu0 %3063
        %v3065 = vadd.f32 %v2570, %v2572
        %3066 = vadd.xlane.f32.xlu0 %v3065
        %v3067 = vpop.xlane.xlu0 %3066
        %v3068 = vadd.f32 %v2574, %v2576
        %3069 = vadd.xlane.f32.xlu0 %v3068
        %v3070 = vpop.xlane.xlu0 %3069
        %v3071 = vadd.f32 %v2578, %v2580
        %3072 = vadd.xlane.f32.xlu0 %v3071
        %v3073 = vpop.xlane.xlu0 %3072
        %v3074 = vadd.f32 %v2582, %v2584
        %3075 = vadd.xlane.f32.xlu0 %v3074
        %v3076 = vpop.xlane.xlu0 %3075
        %v3077 = vadd.f32 %v2586, %v2588
        %3078 = vadd.xlane.f32.xlu0 %v3077
        %v3079 = vpop.xlane.xlu0 %3078
        %v3080 = vadd.f32 %v2590, %v2592
        %3081 = vadd.xlane.f32.xlu0 %v3080
        %v3082 = vpop.xlane.xlu0 %3081
        %v3083 = vadd.f32 %v2594, %v2596
        %3084 = vadd.xlane.f32.xlu0 %v3083
        %v3085 = vpop.xlane.xlu0 %3084
        %v3086 = vadd.f32 %v2598, %v2600
        %3087 = vadd.xlane.f32.xlu0 %v3086
        %v3088 = vpop.xlane.xlu0 %3087
        %v3089 = vadd.f32 %v2602, %v2604
        %3090 = vadd.xlane.f32.xlu0 %v3089
        %v3091 = vpop.xlane.xlu0 %3090
        %v3092 = vadd.f32 %v2606, %v2608
        %3093 = vadd.xlane.f32.xlu0 %v3092
        %v3094 = vpop.xlane.xlu0 %3093
        %v3095 = vadd.f32 %v2610, %v2612
        %3096 = vadd.xlane.f32.xlu0 %v3095
        %v3097 = vpop.xlane.xlu0 %3096
        %v3098 = vadd.f32 %v2614, %v2616
        %3099 = vadd.xlane.f32.xlu0 %v3098
        %v3100 = vpop.xlane.xlu0 %3099
        %v3101 = vadd.f32 %v2618, %v2620
        %3102 = vadd.xlane.f32.xlu0 %v3101
        %v3103 = vpop.xlane.xlu0 %3102
        %v3104 = vadd.f32 %v2622, %v2624
        %3105 = vadd.xlane.f32.xlu0 %v3104
        %v3106 = vpop.xlane.xlu0 %3105
        %v3107 = vadd.f32 %v2626, %v2628
        %3108 = vadd.xlane.f32.xlu0 %v3107
        %v3109 = vpop.xlane.xlu0 %3108
        %v3110 = vadd.f32 %v2630, %v2632
        %3111 = vadd.xlane.f32.xlu0 %v3110
        %v3112 = vpop.xlane.xlu0 %3111
        %v3113 = vadd.f32 %v2634, %v2636
        %3114 = vadd.xlane.f32.xlu0 %v3113
        %v3115 = vpop.xlane.xlu0 %3114
        %v3116 = vadd.f32 %v2638, %v2640
        %3117 = vadd.xlane.f32.xlu0 %v3116
        %v3118 = vpop.xlane.xlu0 %3117
        %v3119 = vadd.f32 %v2642, %v2644
        %3120 = vadd.xlane.f32.xlu0 %v3119
        %v3121 = vpop.xlane.xlu0 %3120
        %v3122 = vadd.f32 %v2646, %v2648
        %3123 = vadd.xlane.f32.xlu0 %v3122
        %v3124 = vpop.xlane.xlu0 %3123
        %v3125 = vadd.f32 %v2650, %v2652
        %3126 = vadd.xlane.f32.xlu0 %v3125
        %v3127 = vpop.xlane.xlu0 %3126
        %v3128 = vadd.f32 %v2654, %v2656
        %3129 = vadd.xlane.f32.xlu0 %v3128
        %v3130 = vpop.xlane.xlu0 %3129
        %v3131 = vadd.f32 %v2658, %v2660
        %3132 = vadd.xlane.f32.xlu0 %v3131
        %v3133 = vpop.xlane.xlu0 %3132
        %v3134 = vadd.f32 %v2662, %v2664
        %3135 = vadd.xlane.f32.xlu0 %v3134
        %v3136 = vpop.xlane.xlu0 %3135
        %v3137 = vadd.f32 %v2666, %v2668
        %3138 = vadd.xlane.f32.xlu0 %v3137
        %v3139 = vpop.xlane.xlu0 %3138
        %v3140 = vadd.f32 %v2670, %v2672
        %3141 = vadd.xlane.f32.xlu0 %v3140
        %v3142 = vpop.xlane.xlu0 %3141
        %v3143 = vadd.f32 %v2674, %v2676
        %3144 = vadd.xlane.f32.xlu0 %v3143
        %v3145 = vpop.xlane.xlu0 %3144
        %v3146 = vadd.f32 %v2678, %v2680
        %3147 = vadd.xlane.f32.xlu0 %v3146
        %v3148 = vpop.xlane.xlu0 %3147
        %v3149 = vadd.f32 %v2682, %v2684
        %3150 = vadd.xlane.f32.xlu0 %v3149
        %v3151 = vpop.xlane.xlu0 %3150
        %v3152 = vadd.f32 %v2686, %v2688
        %3153 = vadd.xlane.f32.xlu0 %v3152
        %v3154 = vpop.xlane.xlu0 %3153
        %v3155 = vadd.f32 %v2690, %v2692
        %3156 = vadd.xlane.f32.xlu0 %v3155
        %v3157 = vpop.xlane.xlu0 %3156
        %v3158 = vadd.f32 %v2694, %v2696
        %3159 = vadd.xlane.f32.xlu0 %v3158
        %v3160 = vpop.xlane.xlu0 %3159
        %v3161 = vadd.f32 %v2698, %v2700
        %3162 = vadd.xlane.f32.xlu0 %v3161
        %v3163 = vpop.xlane.xlu0 %3162
        %v3164 = vadd.f32 %v2702, %v2704
        %3165 = vadd.xlane.f32.xlu0 %v3164
        %v3166 = vpop.xlane.xlu0 %3165
        %v3167 = vadd.f32 %v2706, %v2708
        %3168 = vadd.xlane.f32.xlu0 %v3167
        %v3169 = vpop.xlane.xlu0 %3168
        %v3170 = vadd.f32 %v2710, %v2712
        %3171 = vadd.xlane.f32.xlu0 %v3170
        %v3172 = vpop.xlane.xlu0 %3171
        %v3173 = vadd.f32 %v2714, %v2716
        %3174 = vadd.xlane.f32.xlu0 %v3173
        %v3175 = vpop.xlane.xlu0 %3174
        %v3176 = vadd.f32 %v2718, %v2720
        %3177 = vadd.xlane.f32.xlu0 %v3176
        %v3178 = vpop.xlane.xlu0 %3177
        %v3179 = vadd.f32 %v2722, %v2724
        %3180 = vadd.xlane.f32.xlu0 %v3179
        %v3181 = vpop.xlane.xlu0 %3180
        %v3182 = vadd.f32 %v2726, %v2728
        %3183 = vadd.xlane.f32.xlu0 %v3182
        %v3184 = vpop.xlane.xlu0 %3183
        %v3185 = vadd.f32 %v2730, %v2732
        %3186 = vadd.xlane.f32.xlu0 %v3185
        %v3187 = vpop.xlane.xlu0 %3186
        %v3188 = vadd.f32 %v2734, %v2736
        %3189 = vadd.xlane.f32.xlu0 %v3188
        %v3190 = vpop.xlane.xlu0 %3189
        %v3191 = vadd.f32 %v2738, %v2740
        %3192 = vadd.xlane.f32.xlu0 %v3191
        %v3193 = vpop.xlane.xlu0 %3192
        %v3194 = vadd.f32 %v2742, %v2744
        %3195 = vadd.xlane.f32.xlu0 %v3194
        %v3196 = vpop.xlane.xlu0 %3195
        %v3197 = vadd.f32 %v2746, %v2748
        %3198 = vadd.xlane.f32.xlu0 %v3197
        %v3199 = vpop.xlane.xlu0 %3198
        %v3200 = vadd.f32 %v2750, %v2752
        %3201 = vadd.xlane.f32.xlu0 %v3200
        %v3202 = vpop.xlane.xlu0 %3201
        %v3203 = vadd.f32 %v2754, %v2756
        %3204 = vadd.xlane.f32.xlu0 %v3203
        %v3205 = vpop.xlane.xlu0 %3204
        %v3206 = vadd.f32 %v2758, %v2760
        %3207 = vadd.xlane.f32.xlu0 %v3206
        %v3208 = vpop.xlane.xlu0 %3207
        %v3209 = vadd.f32 %v2762, %v2764
        %3210 = vadd.xlane.f32.xlu0 %v3209
        %v3211 = vpop.xlane.xlu0 %3210
        %v3212 = vadd.f32 %v2766, %v2768
        %3213 = vadd.xlane.f32.xlu0 %v3212
        %v3214 = vpop.xlane.xlu0 %3213
        %v3215 = vadd.f32 %v2770, %v2772
        %3216 = vadd.xlane.f32.xlu0 %v3215
        %v3217 = vpop.xlane.xlu0 %3216
        %v3218 = vadd.f32 %v2774, %v2776
        %3219 = vadd.xlane.f32.xlu0 %v3218
        %v3220 = vpop.xlane.xlu0 %3219
        %v3221 = vadd.f32 %v2778, %v2780
        %3222 = vadd.xlane.f32.xlu0 %v3221
        %v3223 = vpop.xlane.xlu0 %3222
        %v3224 = vadd.f32 %v2782, %v2784
        %3225 = vadd.xlane.f32.xlu0 %v3224
        %v3226 = vpop.xlane.xlu0 %3225
        %v3227 = vadd.f32 %v2786, %v2788
        %3228 = vadd.xlane.f32.xlu0 %v3227
        %v3229 = vpop.xlane.xlu0 %3228
        %v3230 = vadd.f32 %v2790, %v2792
        %3231 = vadd.xlane.f32.xlu0 %v3230
        %v3232 = vpop.xlane.xlu0 %3231
        %v3233 = vadd.f32 %v2794, %v2796
        %3234 = vadd.xlane.f32.xlu0 %v3233
        %v3235 = vpop.xlane.xlu0 %3234
        %v3236 = vadd.f32 %v2798, %v2800
        %3237 = vadd.xlane.f32.xlu0 %v3236
        %v3238 = vpop.xlane.xlu0 %3237
        %v3239 = vadd.f32 %v2802, %v2804
        %3240 = vadd.xlane.f32.xlu0 %v3239
        %v3241 = vpop.xlane.xlu0 %3240
        %v3242 = vadd.f32 %v2806, %v2808
        %3243 = vadd.xlane.f32.xlu0 %v3242
        %v3244 = vpop.xlane.xlu0 %3243
        %v3245 = vadd.f32 %v2810, %v2812
        %3246 = vadd.xlane.f32.xlu0 %v3245
        %v3247 = vpop.xlane.xlu0 %3246
        %v3248 = vadd.f32 %v2814, %v2816
        %3249 = vadd.xlane.f32.xlu0 %v3248
        %v3250 = vpop.xlane.xlu0 %3249
        %v3251 = vadd.f32 %v2818, %v2820
        %3252 = vadd.xlane.f32.xlu0 %v3251
        %v3253 = vpop.xlane.xlu0 %3252
        %v3254 = vadd.f32 %v2822, %v2824
        %3255 = vadd.xlane.f32.xlu0 %v3254
        %v3256 = vpop.xlane.xlu0 %3255
        %v3257 = vadd.f32 %v2826, %v2828
        %3258 = vadd.xlane.f32.xlu0 %v3257
        %v3259 = vpop.xlane.xlu0 %3258
        %v3260 = vadd.f32 %v2830, %v2832
        %3261 = vadd.xlane.f32.xlu0 %v3260
        %v3262 = vpop.xlane.xlu0 %3261
        %v3263 = vadd.f32 %v2834, %v2836
        %3264 = vadd.xlane.f32.xlu0 %v3263
        %v3265 = vpop.xlane.xlu0 %3264
        %v3266 = vadd.f32 %v2838, %v2840
        %3267 = vadd.xlane.f32.xlu0 %v3266
        %v3268 = vpop.xlane.xlu0 %3267
        %v3269 = vadd.f32 %v2842, %v2844
        %3270 = vadd.xlane.f32.xlu0 %v3269
        %v3271 = vpop.xlane.xlu0 %3270
        %v3272 = vadd.f32 %v2846, %v2848
        %3273 = vadd.xlane.f32.xlu0 %v3272
        %v3274 = vpop.xlane.xlu0 %3273
        %v3275 = vadd.f32 %v2850, %v2852
        %3276 = vadd.xlane.f32.xlu0 %v3275
        %v3277 = vpop.xlane.xlu0 %3276
        %v3278 = vadd.f32 %v2854, %v2856
        %3279 = vadd.xlane.f32.xlu0 %v3278
        %v3280 = vpop.xlane.xlu0 %3279
        %v3281 = vadd.f32 %v2858, %v2860
        %3282 = vadd.xlane.f32.xlu0 %v3281
        %v3283 = vpop.xlane.xlu0 %3282
        %v3284 = vadd.f32 %v2862, %v2864
        %3285 = vadd.xlane.f32.xlu0 %v3284
        %v3286 = vpop.xlane.xlu0 %3285
        %v3287 = vadd.f32 %v2866, %v2868
        %3288 = vadd.xlane.f32.xlu0 %v3287
        %v3289 = vpop.xlane.xlu0 %3288
        %v3290 = vadd.f32 %v2870, %v2872
        %3291 = vadd.xlane.f32.xlu0 %v3290
        %v3292 = vpop.xlane.xlu0 %3291
        %v3293 = vadd.f32 %v2874, %v2876
        %3294 = vadd.xlane.f32.xlu0 %v3293
        %v3295 = vpop.xlane.xlu0 %3294
        %v3296 = vadd.f32 %v2878, %v2880
        %3297 = vadd.xlane.f32.xlu0 %v3296
        %v3298 = vpop.xlane.xlu0 %3297
        %v3299 = vadd.f32 %v2882, %v2884
        %3300 = vadd.xlane.f32.xlu0 %v3299
        %v3301 = vpop.xlane.xlu0 %3300
        %v3302 = vadd.f32 %v2886, %v2888
        %3303 = vadd.xlane.f32.xlu0 %v3302
        %v3304 = vpop.xlane.xlu0 %3303
        %v3305 = vadd.f32 %v2890, %v2892
        %3306 = vadd.xlane.f32.xlu0 %v3305
        %v3307 = vpop.xlane.xlu0 %3306
        %v3308 = vadd.f32 %v2894, %v2896
        %3309 = vadd.xlane.f32.xlu0 %v3308
        %v3310 = vpop.xlane.xlu0 %3309
        %v3311 = vadd.f32 %v2898, %v2900
        %3312 = vadd.xlane.f32.xlu0 %v3311
        %v3313 = vpop.xlane.xlu0 %3312
        %v3314 = vadd.f32 %v2902, %v2904
        %3315 = vadd.xlane.f32.xlu0 %v3314
        %v3316 = vpop.xlane.xlu0 %3315
        %v3317 = vadd.f32 %v2906, %v2908
        %3318 = vadd.xlane.f32.xlu0 %v3317
        %v3319 = vpop.xlane.xlu0 %3318
        %v3320 = vadd.f32 %v2910, %v2912
        %3321 = vadd.xlane.f32.xlu0 %v3320
        %v3322 = vpop.xlane.xlu0 %3321
        %v3323 = vadd.f32 %v2914, %v2916
        %3324 = vadd.xlane.f32.xlu0 %v3323
        %v3325 = vpop.xlane.xlu0 %3324
        %v3326 = vadd.f32 %v2918, %v2920
        %3327 = vadd.xlane.f32.xlu0 %v3326
        %v3328 = vpop.xlane.xlu0 %3327
        %v3329 = vadd.f32 %v2922, %v2924
        %3330 = vadd.xlane.f32.xlu0 %v3329
        %v3331 = vpop.xlane.xlu0 %3330
        %v3332 = vadd.f32 %v2926, %v2928
        %3333 = vadd.xlane.f32.xlu0 %v3332
        %v3334 = vpop.xlane.xlu0 %3333
        %v3335 = vadd.f32 %v2930, %v2932
        %3336 = vadd.xlane.f32.xlu0 %v3335
        %v3337 = vpop.xlane.xlu0 %3336
        %v3338 = vadd.f32 %v2934, %v2936
        %3339 = vadd.xlane.f32.xlu0 %v3338
        %v3340 = vpop.xlane.xlu0 %3339
        %v3341 = vadd.f32 %v2938, %v2940
        %3342 = vadd.xlane.f32.xlu0 %v3341
        %v3343 = vpop.xlane.xlu0 %3342
        %v3344 = vadd.f32 %v2942, %v2944
        %3345 = vadd.xlane.f32.xlu0 %v3344
        %v3346 = vpop.xlane.xlu0 %3345
        %v3347 = vadd.f32 %v2946, %v2948
        %3348 = vadd.xlane.f32.xlu0 %v3347
        %v3349 = vpop.xlane.xlu0 %3348
        %v3350 = vadd.f32 %v2950, %v2952
        %3351 = vadd.xlane.f32.xlu0 %v3350
        %v3352 = vpop.xlane.xlu0 %3351
        %v3353 = vadd.f32 %v2954, %v2956
        %3354 = vadd.xlane.f32.xlu0 %v3353
        %v3355 = vpop.xlane.xlu0 %3354
        %v3356 = vadd.f32 %v2958, %v2960
        %3357 = vadd.xlane.f32.xlu0 %v3356
        %v3358 = vpop.xlane.xlu0 %3357
        %v3359 = vadd.f32 %v2962, %v2964
        %3360 = vadd.xlane.f32.xlu0 %v3359
        %v3361 = vpop.xlane.xlu0 %3360
        %v3362 = vadd.f32 %v2966, %v2968
        %3363 = vadd.xlane.f32.xlu0 %v3362
        %v3364 = vpop.xlane.xlu0 %3363
        %v3365 = vadd.f32 %v2970, %v2972
        %3366 = vadd.xlane.f32.xlu0 %v3365
        %v3367 = vpop.xlane.xlu0 %3366
        %v3368 = vadd.f32 %v2974, %v2976
        %3369 = vadd.xlane.f32.xlu0 %v3368
        %v3370 = vpop.xlane.xlu0 %3369
        %v3371 = vadd.f32 %v2978, %v2980
        %3372 = vadd.xlane.f32.xlu0 %v3371
        %v3373 = vpop.xlane.xlu0 %3372
        %v3374 = vadd.f32 %v2982, %v2984
        %3375 = vadd.xlane.f32.xlu0 %v3374
        %v3376 = vpop.xlane.xlu0 %3375
        %v3377 = vadd.f32 %v2986, %v2988
        %3378 = vadd.xlane.f32.xlu0 %v3377
        %v3379 = vpop.xlane.xlu0 %3378
        %v3380 = vadd.f32 %v2990, %v2992
        %3381 = vadd.xlane.f32.xlu0 %v3380
        %v3382 = vpop.xlane.xlu0 %3381
        %v3383 = vadd.f32 %v2994, %v2996
        %3384 = vadd.xlane.f32.xlu0 %v3383
        %v3385 = vpop.xlane.xlu0 %3384
        %v3386 = vadd.f32 %v2998, %v3000
        %3387 = vadd.xlane.f32.xlu0 %v3386
        %v3388 = vpop.xlane.xlu0 %3387
        %v3389 = vadd.f32 %v3002, %v3004
        %3390 = vadd.xlane.f32.xlu0 %v3389
        %v3391 = vpop.xlane.xlu0 %3390
        %v3392 = vadd.f32 %v3006, %v3008
        %3393 = vadd.xlane.f32.xlu0 %v3392
        %v3394 = vpop.xlane.xlu0 %3393
        %v3395 = vadd.f32 %v3010, %v3012
        %3396 = vadd.xlane.f32.xlu0 %v3395
        %v3397 = vpop.xlane.xlu0 %3396
        %v3398 = vadd.f32 %v3014, %v3016
        %3399 = vadd.xlane.f32.xlu0 %v3398
        %v3400 = vpop.xlane.xlu0 %3399
        %v3401 = vpack.c.bf16 %v2510, %v2506
        %v3402 = vpack.c.bf16 %v2512, %v2508
        %v3403 = vpack.c.bf16 %v2518, %v2514
        %v3404 = vpack.c.bf16 %v2520, %v2516
        %v3405 = vpack.c.bf16 %v2526, %v2522
        %v3406 = vpack.c.bf16 %v2528, %v2524
        %v3407 = vpack.c.bf16 %v2534, %v2530
        %v3408 = vpack.c.bf16 %v2536, %v2532
        %v3409 = vpack.c.bf16 %v2542, %v2538
        %v3410 = vpack.c.bf16 %v2544, %v2540
        %v3411 = vpack.c.bf16 %v2550, %v2546
        %v3412 = vpack.c.bf16 %v2552, %v2548
        %v3413 = vpack.c.bf16 %v2558, %v2554
        %v3414 = vpack.c.bf16 %v2560, %v2556
        %v3415 = vpack.c.bf16 %v2566, %v2562
        %v3416 = vpack.c.bf16 %v2568, %v2564
        %v3417 = vpack.c.bf16 %v2574, %v2570
        %v3418 = vpack.c.bf16 %v2576, %v2572
        %v3419 = vpack.c.bf16 %v2582, %v2578
        %v3420 = vpack.c.bf16 %v2584, %v2580
        %v3421 = vpack.c.bf16 %v2590, %v2586
        %v3422 = vpack.c.bf16 %v2592, %v2588
        %v3423 = vpack.c.bf16 %v2598, %v2594
        %v3424 = vpack.c.bf16 %v2600, %v2596
        %v3425 = vpack.c.bf16 %v2606, %v2602
        %v3426 = vpack.c.bf16 %v2608, %v2604
        %v3427 = vpack.c.bf16 %v2614, %v2610
        %v3428 = vpack.c.bf16 %v2616, %v2612
        %v3429 = vpack.c.bf16 %v2622, %v2618
        %v3430 = vpack.c.bf16 %v2624, %v2620
        %v3431 = vpack.c.bf16 %v2630, %v2626
        %v3432 = vpack.c.bf16 %v2632, %v2628
        %v3433 = vpack.c.bf16 %v2638, %v2634
        %v3434 = vpack.c.bf16 %v2640, %v2636
        %v3435 = vpack.c.bf16 %v2646, %v2642
        %v3436 = vpack.c.bf16 %v2648, %v2644
        %v3437 = vpack.c.bf16 %v2654, %v2650
        %v3438 = vpack.c.bf16 %v2656, %v2652
        %v3439 = vpack.c.bf16 %v2662, %v2658
        %v3440 = vpack.c.bf16 %v2664, %v2660
        %v3441 = vpack.c.bf16 %v2670, %v2666
        %v3442 = vpack.c.bf16 %v2672, %v2668
        %v3443 = vpack.c.bf16 %v2678, %v2674
        %v3444 = vpack.c.bf16 %v2680, %v2676
        %v3445 = vpack.c.bf16 %v2686, %v2682
        %v3446 = vpack.c.bf16 %v2688, %v2684
        %v3447 = vpack.c.bf16 %v2694, %v2690
        %v3448 = vpack.c.bf16 %v2696, %v2692
        %v3449 = vpack.c.bf16 %v2702, %v2698
        %v3450 = vpack.c.bf16 %v2704, %v2700
        %v3451 = vpack.c.bf16 %v2710, %v2706
        %v3452 = vpack.c.bf16 %v2712, %v2708
        %v3453 = vpack.c.bf16 %v2718, %v2714
        %v3454 = vpack.c.bf16 %v2720, %v2716
        %v3455 = vpack.c.bf16 %v2726, %v2722
        %v3456 = vpack.c.bf16 %v2728, %v2724
        %v3457 = vpack.c.bf16 %v2734, %v2730
        %v3458 = vpack.c.bf16 %v2736, %v2732
        %v3459 = vpack.c.bf16 %v2742, %v2738
        %v3460 = vpack.c.bf16 %v2744, %v2740
        %v3461 = vpack.c.bf16 %v2750, %v2746
        %v3462 = vpack.c.bf16 %v2752, %v2748
        %v3463 = vpack.c.bf16 %v2758, %v2754
        %v3464 = vpack.c.bf16 %v2760, %v2756
        %v3465 = vpack.c.bf16 %v2766, %v2762
        %v3466 = vpack.c.bf16 %v2768, %v2764
        %v3467 = vpack.c.bf16 %v2774, %v2770
        %v3468 = vpack.c.bf16 %v2776, %v2772
        %v3469 = vpack.c.bf16 %v2782, %v2778
        %v3470 = vpack.c.bf16 %v2784, %v2780
        %v3471 = vpack.c.bf16 %v2790, %v2786
        %v3472 = vpack.c.bf16 %v2792, %v2788
        %v3473 = vpack.c.bf16 %v2798, %v2794
        %v3474 = vpack.c.bf16 %v2800, %v2796
        %v3475 = vpack.c.bf16 %v2806, %v2802
        %v3476 = vpack.c.bf16 %v2808, %v2804
        %v3477 = vpack.c.bf16 %v2814, %v2810
        %v3478 = vpack.c.bf16 %v2816, %v2812
        %v3479 = vpack.c.bf16 %v2822, %v2818
        %v3480 = vpack.c.bf16 %v2824, %v2820
        %v3481 = vpack.c.bf16 %v2830, %v2826
        %v3482 = vpack.c.bf16 %v2832, %v2828
        %v3483 = vpack.c.bf16 %v2838, %v2834
        %v3484 = vpack.c.bf16 %v2840, %v2836
        %v3485 = vpack.c.bf16 %v2846, %v2842
        %v3486 = vpack.c.bf16 %v2848, %v2844
        %v3487 = vpack.c.bf16 %v2854, %v2850
        %v3488 = vpack.c.bf16 %v2856, %v2852
        %v3489 = vpack.c.bf16 %v2862, %v2858
        %v3490 = vpack.c.bf16 %v2864, %v2860
        %v3491 = vpack.c.bf16 %v2870, %v2866
        %v3492 = vpack.c.bf16 %v2872, %v2868
        %v3493 = vpack.c.bf16 %v2878, %v2874
        %v3494 = vpack.c.bf16 %v2880, %v2876
        %v3495 = vpack.c.bf16 %v2886, %v2882
        %v3496 = vpack.c.bf16 %v2888, %v2884
        %v3497 = vpack.c.bf16 %v2894, %v2890
        %v3498 = vpack.c.bf16 %v2896, %v2892
        %v3499 = vpack.c.bf16 %v2902, %v2898
        %v3500 = vpack.c.bf16 %v2904, %v2900
        %v3501 = vpack.c.bf16 %v2910, %v2906
        %v3502 = vpack.c.bf16 %v2912, %v2908
        %v3503 = vpack.c.bf16 %v2918, %v2914
        %v3504 = vpack.c.bf16 %v2920, %v2916
        %v3505 = vpack.c.bf16 %v2926, %v2922
        %v3506 = vpack.c.bf16 %v2928, %v2924
        %v3507 = vpack.c.bf16 %v2934, %v2930
        %v3508 = vpack.c.bf16 %v2936, %v2932
        %v3509 = vpack.c.bf16 %v2942, %v2938
        %v3510 = vpack.c.bf16 %v2944, %v2940
        %v3511 = vpack.c.bf16 %v2950, %v2946
        %v3512 = vpack.c.bf16 %v2952, %v2948
        %v3513 = vpack.c.bf16 %v2958, %v2954
        %v3514 = vpack.c.bf16 %v2960, %v2956
        %v3515 = vpack.c.bf16 %v2966, %v2962
        %v3516 = vpack.c.bf16 %v2968, %v2964
        %v3517 = vpack.c.bf16 %v2974, %v2970
        %v3518 = vpack.c.bf16 %v2976, %v2972
        %v3519 = vpack.c.bf16 %v2982, %v2978
        %v3520 = vpack.c.bf16 %v2984, %v2980
        %v3521 = vpack.c.bf16 %v2990, %v2986
        %v3522 = vpack.c.bf16 %v2992, %v2988
        %v3523 = vpack.c.bf16 %v2998, %v2994
        %v3524 = vpack.c.bf16 %v3000, %v2996
        %v3525 = vpack.c.bf16 %v3006, %v3002
        %v3526 = vpack.c.bf16 %v3008, %v3004
        %v3527 = vpack.c.bf16 %v3014, %v3010
        %v3528 = vpack.c.bf16 %v3016, %v3012
        %3529 = vmatprep.subr.bf16.mxu0 %v3402
        %3530 = vmatpush1.bf16.xpose.msra.mxu0 %v3401
        %3531 = vmatprep.subr.bf16.mxu0 %v3404
        %3532 = vmatpush1.bf16.xpose.msra.mxu0 %v3403
        %3533 = vmatprep.subr.bf16.mxu0 %v3406
        %3534 = vmatpush1.bf16.xpose.msra.mxu0 %v3405
        %3535 = vmatprep.subr.bf16.mxu0 %v3408
        %3536 = vmatpush1.bf16.xpose.msra.mxu0 %v3407
        %3537 = vmatprep.subr.bf16.mxu0 %v3410
        %3538 = vmatpush1.bf16.xpose.msra.mxu0 %v3409
        %3539 = vmatprep.subr.bf16.mxu0 %v3412
        %3540 = vmatpush1.bf16.xpose.msra.mxu0 %v3411
        %3541 = vmatprep.subr.bf16.mxu0 %v3414
        %3542 = vmatpush1.bf16.xpose.msra.mxu0 %v3413
        %3543 = vmatprep.subr.bf16.mxu0 %v3416
        %3544 = vmatpush1.bf16.xpose.msra.mxu0 %v3415
        %3545 = vmatprep.subr.bf16.mxu0 %v3418
        %3546 = vmatpush1.bf16.xpose.msra.mxu0 %v3417
        %3547 = vmatprep.subr.bf16.mxu0 %v3420
        %3548 = vmatpush1.bf16.xpose.msra.mxu0 %v3419
        %3549 = vmatprep.subr.bf16.mxu0 %v3422
        %3550 = vmatpush1.bf16.xpose.msra.mxu0 %v3421
        %3551 = vmatprep.subr.bf16.mxu0 %v3424
        %3552 = vmatpush1.bf16.xpose.msra.mxu0 %v3423
        %3553 = vmatprep.subr.bf16.mxu0 %v3426
        %3554 = vmatpush1.bf16.xpose.msra.mxu0 %v3425
        %3555 = vmatprep.subr.bf16.mxu0 %v3428
        %3556 = vmatpush1.bf16.xpose.msra.mxu0 %v3427
        %3557 = vmatprep.subr.bf16.mxu0 %v3430
        %3558 = vmatpush1.bf16.xpose.msra.mxu0 %v3429
        %3559 = vmatprep.subr.bf16.mxu0 %v3432
        %3560 = vmatpush1.bf16.xpose.msra.mxu0 %v3431
        %3561 = vmatprep.mubr.bf16.mxu0 %v757
        %3562 = vmatmul.mubr.bf16.gmra.mrb[0].mxu0 %v756
        %v3563 = vpop.f32.mrb[0].mxu0
        %v3564 = vadd.f32 0.0, %v3563
        %v3565 = vpop.f32.mrb[0].mxu0
        %v3566 = vadd.f32 0.0, %v3565
        %v3567 = vpop.f32.mrb[0].mxu0
        %v3568 = vadd.f32 0.0, %v3567
        %v3569 = vpop.f32.mrb[0].mxu0
        %v3570 = vadd.f32 0.0, %v3569
        %3571 = vmatprep.mubr.bf16.mxu0 %v759
        %3572 = vmatmul.mubr.bf16.gmra.mrb[0].mxu0 %v758
        %v3573 = vpop.f32.mrb[0].mxu0
        %v3574 = vadd.f32 0.0, %v3573
        %v3575 = vpop.f32.mrb[0].mxu0
        %v3576 = vadd.f32 0.0, %v3575
        %v3577 = vpop.f32.mrb[0].mxu0
        %v3578 = vadd.f32 0.0, %v3577
        %v3579 = vpop.f32.mrb[0].mxu0
        %v3580 = vadd.f32 0.0, %v3579
        %3581 = vdwg.mxu0
        %3582 = vmatprep.subr.bf16.mxu0 %v3434
        %3583 = vmatpush1.bf16.xpose.msra.mxu0 %v3433
        %3584 = vmatprep.subr.bf16.mxu0 %v3436
        %3585 = vmatpush1.bf16.xpose.msra.mxu0 %v3435
        %3586 = vmatprep.subr.bf16.mxu0 %v3438
        %3587 = vmatpush1.bf16.xpose.msra.mxu0 %v3437
        %3588 = vmatprep.subr.bf16.mxu0 %v3440
        %3589 = vmatpush1.bf16.xpose.msra.mxu0 %v3439
        %3590 = vmatprep.subr.bf16.mxu0 %v3442
        %3591 = vmatpush1.bf16.xpose.msra.mxu0 %v3441
        %3592 = vmatprep.subr.bf16.mxu0 %v3444
        %3593 = vmatpush1.bf16.xpose.msra.mxu0 %v3443
        %3594 = vmatprep.subr.bf16.mxu0 %v3446
        %3595 = vmatpush1.bf16.xpose.msra.mxu0 %v3445
        %3596 = vmatprep.subr.bf16.mxu0 %v3448
        %3597 = vmatpush1.bf16.xpose.msra.mxu0 %v3447
        %3598 = vmatprep.subr.bf16.mxu0 %v3450
        %3599 = vmatpush1.bf16.xpose.msra.mxu0 %v3449
        %3600 = vmatprep.subr.bf16.mxu0 %v3452
        %3601 = vmatpush1.bf16.xpose.msra.mxu0 %v3451
        %3602 = vmatprep.subr.bf16.mxu0 %v3454
        %3603 = vmatpush1.bf16.xpose.msra.mxu0 %v3453
        %3604 = vmatprep.subr.bf16.mxu0 %v3456
        %3605 = vmatpush1.bf16.xpose.msra.mxu0 %v3455
        %3606 = vmatprep.subr.bf16.mxu0 %v3458
        %3607 = vmatpush1.bf16.xpose.msra.mxu0 %v3457
        %3608 = vmatprep.subr.bf16.mxu0 %v3460
        %3609 = vmatpush1.bf16.xpose.msra.mxu0 %v3459
        %3610 = vmatprep.subr.bf16.mxu0 %v3462
        %3611 = vmatpush1.bf16.xpose.msra.mxu0 %v3461
        %3612 = vmatprep.subr.bf16.mxu0 %v3464
        %3613 = vmatpush1.bf16.xpose.msra.mxu0 %v3463
        %3614 = vmatprep.mubr.bf16.mxu0 %v761
        %3615 = vmatmul.mubr.bf16.gmra.mrb[0].mxu0 %v760
        %v3616 = vpop.f32.mrb[0].mxu0
        %v3617 = vadd.f32 0.0, %v3616
        %v3618 = vpop.f32.mrb[0].mxu0
        %v3619 = vadd.f32 0.0, %v3618
        %v3620 = vpop.f32.mrb[0].mxu0
        %v3621 = vadd.f32 0.0, %v3620
        %v3622 = vpop.f32.mrb[0].mxu0
        %v3623 = vadd.f32 0.0, %v3622
        %3624 = vmatprep.mubr.bf16.mxu0 %v763
        %3625 = vmatmul.mubr.bf16.gmra.mrb[0].mxu0 %v762
        %v3626 = vpop.f32.mrb[0].mxu0
        %v3627 = vadd.f32 0.0, %v3626
        %v3628 = vpop.f32.mrb[0].mxu0
        %v3629 = vadd.f32 0.0, %v3628
        %v3630 = vpop.f32.mrb[0].mxu0
        %v3631 = vadd.f32 0.0, %v3630
        %v3632 = vpop.f32.mrb[0].mxu0
        %v3633 = vadd.f32 0.0, %v3632
        %3634 = vdwg.mxu0
        %3635 = vmatprep.subr.bf16.mxu0 %v3466
        %3636 = vmatpush1.bf16.xpose.msra.mxu0 %v3465
        %3637 = vmatprep.subr.bf16.mxu0 %v3468
        %3638 = vmatpush1.bf16.xpose.msra.mxu0 %v3467
        %3639 = vmatprep.subr.bf16.mxu0 %v3470
        %3640 = vmatpush1.bf16.xpose.msra.mxu0 %v3469
        %3641 = vmatprep.subr.bf16.mxu0 %v3472
        %3642 = vmatpush1.bf16.xpose.msra.mxu0 %v3471
        %3643 = vmatprep.subr.bf16.mxu0 %v3474
        %3644 = vmatpush1.bf16.xpose.msra.mxu0 %v3473
        %3645 = vmatprep.subr.bf16.mxu0 %v3476
        %3646 = vmatpush1.bf16.xpose.msra.mxu0 %v3475
        %3647 = vmatprep.subr.bf16.mxu0 %v3478
        %3648 = vmatpush1.bf16.xpose.msra.mxu0 %v3477
        %3649 = vmatprep.subr.bf16.mxu0 %v3480
        %3650 = vmatpush1.bf16.xpose.msra.mxu0 %v3479
        %3651 = vmatprep.subr.bf16.mxu0 %v3482
        %3652 = vmatpush1.bf16.xpose.msra.mxu0 %v3481
        %3653 = vmatprep.subr.bf16.mxu0 %v3484
        %3654 = vmatpush1.bf16.xpose.msra.mxu0 %v3483
        %3655 = vmatprep.subr.bf16.mxu0 %v3486
        %3656 = vmatpush1.bf16.xpose.msra.mxu0 %v3485
        %3657 = vmatprep.subr.bf16.mxu0 %v3488
        %3658 = vmatpush1.bf16.xpose.msra.mxu0 %v3487
        %3659 = vmatprep.subr.bf16.mxu0 %v3490
        %3660 = vmatpush1.bf16.xpose.msra.mxu0 %v3489
        %3661 = vmatprep.subr.bf16.mxu0 %v3492
        %3662 = vmatpush1.bf16.xpose.msra.mxu0 %v3491
        %3663 = vmatprep.subr.bf16.mxu0 %v3494
        %3664 = vmatpush1.bf16.xpose.msra.mxu0 %v3493
        %3665 = vmatprep.subr.bf16.mxu0 %v3496
        %3666 = vmatpush1.bf16.xpose.msra.mxu0 %v3495
        %3667 = vmatprep.mubr.bf16.mxu0 %v765
        %3668 = vmatmul.mubr.bf16.gmra.mrb[0].mxu0 %v764
        %v3669 = vpop.f32.mrb[0].mxu0
        %v3670 = vadd.f32 0.0, %v3669
        %v3671 = vpop.f32.mrb[0].mxu0
        %v3672 = vadd.f32 0.0, %v3671
        %v3673 = vpop.f32.mrb[0].mxu0
        %v3674 = vadd.f32 0.0, %v3673
        %v3675 = vpop.f32.mrb[0].mxu0
        %v3676 = vadd.f32 0.0, %v3675
        %3677 = vmatprep.mubr.bf16.mxu0 %v767
        %3678 = vmatmul.mubr.bf16.gmra.mrb[0].mxu0 %v766
        %v3679 = vpop.f32.mrb[0].mxu0
        %v3680 = vadd.f32 0.0, %v3679
        %v3681 = vpop.f32.mrb[0].mxu0
        %v3682 = vadd.f32 0.0, %v3681
        %v3683 = vpop.f32.mrb[0].mxu0
        %v3684 = vadd.f32 0.0, %v3683
        %v3685 = vpop.f32.mrb[0].mxu0
        %v3686 = vadd.f32 0.0, %v3685
        %3687 = vdwg.mxu0
        %3688 = vmatprep.subr.bf16.mxu0 %v3498
        %3689 = vmatpush1.bf16.xpose.msra.mxu0 %v3497
        %3690 = vmatprep.subr.bf16.mxu0 %v3500
        %3691 = vmatpush1.bf16.xpose.msra.mxu0 %v3499
        %3692 = vmatprep.subr.bf16.mxu0 %v3502
        %3693 = vmatpush1.bf16.xpose.msra.mxu0 %v3501
        %3694 = vmatprep.subr.bf16.mxu0 %v3504
        %3695 = vmatpush1.bf16.xpose.msra.mxu0 %v3503
        %3696 = vmatprep.subr.bf16.mxu0 %v3506
        %3697 = vmatpush1.bf16.xpose.msra.mxu0 %v3505
        %3698 = vmatprep.subr.bf16.mxu0 %v3508
        %3699 = vmatpush1.bf16.xpose.msra.mxu0 %v3507
        %3700 = vmatprep.subr.bf16.mxu0 %v3510
        %3701 = vmatpush1.bf16.xpose.msra.mxu0 %v3509
        %3702 = vmatprep.subr.bf16.mxu0 %v3512
        %3703 = vmatpush1.bf16.xpose.msra.mxu0 %v3511
        %3704 = vmatprep.subr.bf16.mxu0 %v3514
        %3705 = vmatpush1.bf16.xpose.msra.mxu0 %v3513
        %3706 = vmatprep.subr.bf16.mxu0 %v3516
        %3707 = vmatpush1.bf16.xpose.msra.mxu0 %v3515
        %3708 = vmatprep.subr.bf16.mxu0 %v3518
        %3709 = vmatpush1.bf16.xpose.msra.mxu0 %v3517
        %3710 = vmatprep.subr.bf16.mxu0 %v3520
        %3711 = vmatpush1.bf16.xpose.msra.mxu0 %v3519
        %3712 = vmatprep.subr.bf16.mxu0 %v3522
        %3713 = vmatpush1.bf16.xpose.msra.mxu0 %v3521
        %3714 = vmatprep.subr.bf16.mxu0 %v3524
        %3715 = vmatpush1.bf16.xpose.msra.mxu0 %v3523
        %3716 = vmatprep.subr.bf16.mxu0 %v3526
        %3717 = vmatpush1.bf16.xpose.msra.mxu0 %v3525
        %3718 = vmatprep.subr.bf16.mxu0 %v3528
        %3719 = vmatpush1.bf16.xpose.msra.mxu0 %v3527
        %3720 = vmatprep.mubr.bf16.mxu0 %v769
        %3721 = vmatmul.mubr.bf16.gmra.mrb[0].mxu0 %v768
        %v3722 = vpop.f32.mrb[0].mxu0
        %v3723 = vadd.f32 0.0, %v3722
        %v3724 = vpop.f32.mrb[0].mxu0
        %v3725 = vadd.f32 0.0, %v3724
        %v3726 = vpop.f32.mrb[0].mxu0
        %v3727 = vadd.f32 0.0, %v3726
        %v3728 = vpop.f32.mrb[0].mxu0
        %v3729 = vadd.f32 0.0, %v3728
        %3730 = vmatprep.mubr.bf16.mxu0 %v771
        %3731 = vmatmul.mubr.bf16.gmra.mrb[0].mxu0 %v770
        %v3732 = vpop.f32.mrb[0].mxu0
        %v3733 = vadd.f32 0.0, %v3732
        %v3734 = vpop.f32.mrb[0].mxu0
        %v3735 = vadd.f32 0.0, %v3734
        %v3736 = vpop.f32.mrb[0].mxu0
        %v3737 = vadd.f32 0.0, %v3736
        %v3738 = vpop.f32.mrb[0].mxu0
        %v3739 = vadd.f32 0.0, %v3738
        %3740 = vdwg.mxu0
        %v3741 = vrcp.pop %v3019
        %v3742 = vrcp.pop %v3022
        %v3743 = vrcp.pop %v3025
        %v3744 = vrcp.pop %v3028
        %v3745 = vrcp.pop %v3031
        %v3746 = vrcp.pop %v3034
        %v3747 = vrcp.pop %v3037
        %v3748 = vrcp.pop %v3040
        %v3749 = vrcp.pop %v3043
        %v3750 = vrcp.pop %v3046
        %v3751 = vrcp.pop %v3049
        %v3752 = vrcp.pop %v3052
        %v3753 = vrcp.pop %v3055
        %v3754 = vrcp.pop %v3058
        %v3755 = vrcp.pop %v3061
        %v3756 = vrcp.pop %v3064
        %v3757 = vrcp.pop %v3067
        %v3758 = vrcp.pop %v3070
        %v3759 = vrcp.pop %v3073
        %v3760 = vrcp.pop %v3076
        %v3761 = vrcp.pop %v3079
        %v3762 = vrcp.pop %v3082
        %v3763 = vrcp.pop %v3085
        %v3764 = vrcp.pop %v3088
        %v3765 = vrcp.pop %v3091
        %v3766 = vrcp.pop %v3094
        %v3767 = vrcp.pop %v3097
        %v3768 = vrcp.pop %v3100
        %v3769 = vrcp.pop %v3103
        %v3770 = vrcp.pop %v3106
        %v3771 = vrcp.pop %v3109
        %v3772 = vrcp.pop %v3112
        %v3773 = vrcp.pop %v3115
        %v3774 = vrcp.pop %v3118
        %v3775 = vrcp.pop %v3121
        %v3776 = vrcp.pop %v3124
        %v3777 = vrcp.pop %v3127
        %v3778 = vrcp.pop %v3130
        %v3779 = vrcp.pop %v3133
        %v3780 = vrcp.pop %v3136
        %v3781 = vrcp.pop %v3139
        %v3782 = vrcp.pop %v3142
        %v3783 = vrcp.pop %v3145
        %v3784 = vrcp.pop %v3148
        %v3785 = vrcp.pop %v3151
        %v3786 = vrcp.pop %v3154
        %v3787 = vrcp.pop %v3157
        %v3788 = vrcp.pop %v3160
        %v3789 = vrcp.pop %v3163
        %v3790 = vrcp.pop %v3166
        %v3791 = vrcp.pop %v3169
        %v3792 = vrcp.pop %v3172
        %v3793 = vrcp.pop %v3175
        %v3794 = vrcp.pop %v3178
        %v3795 = vrcp.pop %v3181
        %v3796 = vrcp.pop %v3184
        %v3797 = vrcp.pop %v3187
        %v3798 = vrcp.pop %v3190
        %v3799 = vrcp.pop %v3193
        %v3800 = vrcp.pop %v3196
        %v3801 = vrcp.pop %v3199
        %v3802 = vrcp.pop %v3202
        %v3803 = vrcp.pop %v3205
        %v3804 = vrcp.pop %v3208
        %v3805 = vrcp.pop %v3211
        %v3806 = vrcp.pop %v3214
        %v3807 = vrcp.pop %v3217
        %v3808 = vrcp.pop %v3220
        %v3809 = vrcp.pop %v3223
        %v3810 = vrcp.pop %v3226
        %v3811 = vrcp.pop %v3229
        %v3812 = vrcp.pop %v3232
        %v3813 = vrcp.pop %v3235
        %v3814 = vrcp.pop %v3238
        %v3815 = vrcp.pop %v3241
        %v3816 = vrcp.pop %v3244
        %v3817 = vrcp.pop %v3247
        %v3818 = vrcp.pop %v3250
        %v3819 = vrcp.pop %v3253
        %v3820 = vrcp.pop %v3256
        %v3821 = vrcp.pop %v3259
        %v3822 = vrcp.pop %v3262
        %v3823 = vrcp.pop %v3265
        %v3824 = vrcp.pop %v3268
        %v3825 = vrcp.pop %v3271
        %v3826 = vrcp.pop %v3274
        %v3827 = vrcp.pop %v3277
        %v3828 = vrcp.pop %v3280
        %v3829 = vrcp.pop %v3283
        %v3830 = vrcp.pop %v3286
        %v3831 = vrcp.pop %v3289
        %v3832 = vrcp.pop %v3292
        %v3833 = vrcp.pop %v3295
        %v3834 = vrcp.pop %v3298
        %v3835 = vrcp.pop %v3301
        %v3836 = vrcp.pop %v3304
        %v3837 = vrcp.pop %v3307
        %v3838 = vrcp.pop %v3310
        %v3839 = vrcp.pop %v3313
        %v3840 = vrcp.pop %v3316
        %v3841 = vrcp.pop %v3319
        %v3842 = vrcp.pop %v3322
        %v3843 = vrcp.pop %v3325
        %v3844 = vrcp.pop %v3328
        %v3845 = vrcp.pop %v3331
        %v3846 = vrcp.pop %v3334
        %v3847 = vrcp.pop %v3337
        %v3848 = vrcp.pop %v3340
        %v3849 = vrcp.pop %v3343
        %v3850 = vrcp.pop %v3346
        %v3851 = vrcp.pop %v3349
        %v3852 = vrcp.pop %v3352
        %v3853 = vrcp.pop %v3355
        %v3854 = vrcp.pop %v3358
        %v3855 = vrcp.pop %v3361
        %v3856 = vrcp.pop %v3364
        %v3857 = vrcp.pop %v3367
        %v3858 = vrcp.pop %v3370
        %v3859 = vrcp.pop %v3373
        %v3860 = vrcp.pop %v3376
        %v3861 = vrcp.pop %v3379
        %v3862 = vrcp.pop %v3382
        %v3863 = vrcp.pop %v3385
        %v3864 = vrcp.pop %v3388
        %v3865 = vrcp.pop %v3391
        %v3866 = vrcp.pop %v3394
        %v3867 = vrcp.pop %v3397
        %v3868 = vrcp.pop %v3400
        %3869 = vxpose.xlu0.b32.start [1/16] %v3741, 128
        %3870 = vxpose.xlu0.b32.cont [2/16] %v3742, 128
        %3871 = vxpose.xlu0.b32.cont [3/16] %v3743, 128
        %3872 = vxpose.xlu0.b32.cont [4/16] %v3744, 128
        %3873 = vxpose.xlu0.b32.cont [5/16] %v3745, 128
        %3874 = vxpose.xlu0.b32.cont [6/16] %v3746, 128
        %3875 = vxpose.xlu0.b32.cont [7/16] %v3747, 128
        %3876 = vxpose.xlu0.b32.cont [8/16] %v3748, 128
        %3877 = vxpose.xlu0.b32.cont [9/16] %v3749, 128
        %3878 = vxpose.xlu0.b32.cont [10/16] %v3750, 128
        %3879 = vxpose.xlu0.b32.cont [11/16] %v3751, 128
        %3880 = vxpose.xlu0.b32.cont [12/16] %v3752, 128
        %3881 = vxpose.xlu0.b32.cont [13/16] %v3753, 128
        %3882 = vxpose.xlu0.b32.cont [14/16] %v3754, 128
        %3883 = vxpose.xlu0.b32.cont [15/16] %v3755, 128
        %3884 = vxpose.xlu0.b32.end [16/16] %v3756, 128
        %v3885 = vpop.trf.xlu0
        %v3886 = vpop.trf.xlu0
        %v3887 = vpop.trf.xlu0
        %v3888 = vpop.trf.xlu0
        %v3889 = vpop.trf.xlu0
        %v3890 = vpop.trf.xlu0
        %v3891 = vpop.trf.xlu0
        %v3892 = vpop.trf.xlu0
        %v3893 = vpop.trf.xlu0
        %v3894 = vpop.trf.xlu0
        %v3895 = vpop.trf.xlu0
        %v3896 = vpop.trf.xlu0
        %v3897 = vpop.trf.xlu0
        %v3898 = vpop.trf.xlu0
        %v3899 = vpop.trf.xlu0
        %v3900 = vpop.trf.xlu0
        %3901 = vxpose.xlu0.b32.start [1/16] %v3757, 128
        %3902 = vxpose.xlu0.b32.cont [2/16] %v3758, 128
        %3903 = vxpose.xlu0.b32.cont [3/16] %v3759, 128
        %3904 = vxpose.xlu0.b32.cont [4/16] %v3760, 128
        %3905 = vxpose.xlu0.b32.cont [5/16] %v3761, 128
        %3906 = vxpose.xlu0.b32.cont [6/16] %v3762, 128
        %3907 = vxpose.xlu0.b32.cont [7/16] %v3763, 128
        %3908 = vxpose.xlu0.b32.cont [8/16] %v3764, 128
        %3909 = vxpose.xlu0.b32.cont [9/16] %v3765, 128
        %3910 = vxpose.xlu0.b32.cont [10/16] %v3766, 128
        %3911 = vxpose.xlu0.b32.cont [11/16] %v3767, 128
        %3912 = vxpose.xlu0.b32.cont [12/16] %v3768, 128
        %3913 = vxpose.xlu0.b32.cont [13/16] %v3769, 128
        %3914 = vxpose.xlu0.b32.cont [14/16] %v3770, 128
        %3915 = vxpose.xlu0.b32.cont [15/16] %v3771, 128
        %3916 = vxpose.xlu0.b32.end [16/16] %v3772, 128
        %v3917 = vpop.trf.xlu0
        %v3918 = vpop.trf.xlu0
        %v3919 = vpop.trf.xlu0
        %v3920 = vpop.trf.xlu0
        %v3921 = vpop.trf.xlu0
        %v3922 = vpop.trf.xlu0
        %v3923 = vpop.trf.xlu0
        %v3924 = vpop.trf.xlu0
        %v3925 = vpop.trf.xlu0
        %v3926 = vpop.trf.xlu0
        %v3927 = vpop.trf.xlu0
        %v3928 = vpop.trf.xlu0
        %v3929 = vpop.trf.xlu0
        %v3930 = vpop.trf.xlu0
        %v3931 = vpop.trf.xlu0
        %v3932 = vpop.trf.xlu0
        %3933 = vxpose.xlu0.b32.start [1/16] %v3773, 128
        %3934 = vxpose.xlu0.b32.cont [2/16] %v3774, 128
        %3935 = vxpose.xlu0.b32.cont [3/16] %v3775, 128
        %3936 = vxpose.xlu0.b32.cont [4/16] %v3776, 128
        %3937 = vxpose.xlu0.b32.cont [5/16] %v3777, 128
        %3938 = vxpose.xlu0.b32.cont [6/16] %v3778, 128
        %3939 = vxpose.xlu0.b32.cont [7/16] %v3779, 128
        %3940 = vxpose.xlu0.b32.cont [8/16] %v3780, 128
        %3941 = vxpose.xlu0.b32.cont [9/16] %v3781, 128
        %3942 = vxpose.xlu0.b32.cont [10/16] %v3782, 128
        %3943 = vxpose.xlu0.b32.cont [11/16] %v3783, 128
        %3944 = vxpose.xlu0.b32.cont [12/16] %v3784, 128
        %3945 = vxpose.xlu0.b32.cont [13/16] %v3785, 128
        %3946 = vxpose.xlu0.b32.cont [14/16] %v3786, 128
        %3947 = vxpose.xlu0.b32.cont [15/16] %v3787, 128
        %3948 = vxpose.xlu0.b32.end [16/16] %v3788, 128
        %v3949 = vpop.trf.xlu0
        %v3950 = vpop.trf.xlu0
        %v3951 = vpop.trf.xlu0
        %v3952 = vpop.trf.xlu0
        %v3953 = vpop.trf.xlu0
        %v3954 = vpop.trf.xlu0
        %v3955 = vpop.trf.xlu0
        %v3956 = vpop.trf.xlu0
        %v3957 = vpop.trf.xlu0
        %v3958 = vpop.trf.xlu0
        %v3959 = vpop.trf.xlu0
        %v3960 = vpop.trf.xlu0
        %v3961 = vpop.trf.xlu0
        %v3962 = vpop.trf.xlu0
        %v3963 = vpop.trf.xlu0
        %v3964 = vpop.trf.xlu0
        %3965 = vxpose.xlu0.b32.start [1/16] %v3789, 128
        %3966 = vxpose.xlu0.b32.cont [2/16] %v3790, 128
        %3967 = vxpose.xlu0.b32.cont [3/16] %v3791, 128
        %3968 = vxpose.xlu0.b32.cont [4/16] %v3792, 128
        %3969 = vxpose.xlu0.b32.cont [5/16] %v3793, 128
        %3970 = vxpose.xlu0.b32.cont [6/16] %v3794, 128
        %3971 = vxpose.xlu0.b32.cont [7/16] %v3795, 128
        %3972 = vxpose.xlu0.b32.cont [8/16] %v3796, 128
        %3973 = vxpose.xlu0.b32.cont [9/16] %v3797, 128
        %3974 = vxpose.xlu0.b32.cont [10/16] %v3798, 128
        %3975 = vxpose.xlu0.b32.cont [11/16] %v3799, 128
        %3976 = vxpose.xlu0.b32.cont [12/16] %v3800, 128
        %3977 = vxpose.xlu0.b32.cont [13/16] %v3801, 128
        %3978 = vxpose.xlu0.b32.cont [14/16] %v3802, 128
        %3979 = vxpose.xlu0.b32.cont [15/16] %v3803, 128
        %3980 = vxpose.xlu0.b32.end [16/16] %v3804, 128
        %v3981 = vpop.trf.xlu0
        %v3982 = vpop.trf.xlu0
        %v3983 = vpop.trf.xlu0
        %v3984 = vpop.trf.xlu0
        %v3985 = vpop.trf.xlu0
        %v3986 = vpop.trf.xlu0
        %v3987 = vpop.trf.xlu0
        %v3988 = vpop.trf.xlu0
        %v3989 = vpop.trf.xlu0
        %v3990 = vpop.trf.xlu0
        %v3991 = vpop.trf.xlu0
        %v3992 = vpop.trf.xlu0
        %v3993 = vpop.trf.xlu0
        %v3994 = vpop.trf.xlu0
        %v3995 = vpop.trf.xlu0
        %v3996 = vpop.trf.xlu0
        %3997 = vxpose.xlu0.b32.start [1/16] %v3805, 128
        %3998 = vxpose.xlu0.b32.cont [2/16] %v3806, 128
        %3999 = vxpose.xlu0.b32.cont [3/16] %v3807, 128
        %4000 = vxpose.xlu0.b32.cont [4/16] %v3808, 128
        %4001 = vxpose.xlu0.b32.cont [5/16] %v3809, 128
        %4002 = vxpose.xlu0.b32.cont [6/16] %v3810, 128
        %4003 = vxpose.xlu0.b32.cont [7/16] %v3811, 128
        %4004 = vxpose.xlu0.b32.cont [8/16] %v3812, 128
        %4005 = vxpose.xlu0.b32.cont [9/16] %v3813, 128
        %4006 = vxpose.xlu0.b32.cont [10/16] %v3814, 128
        %4007 = vxpose.xlu0.b32.cont [11/16] %v3815, 128
        %4008 = vxpose.xlu0.b32.cont [12/16] %v3816, 128
        %4009 = vxpose.xlu0.b32.cont [13/16] %v3817, 128
        %4010 = vxpose.xlu0.b32.cont [14/16] %v3818, 128
        %4011 = vxpose.xlu0.b32.cont [15/16] %v3819, 128
        %4012 = vxpose.xlu0.b32.end [16/16] %v3820, 128
        %v4013 = vpop.trf.xlu0
        %v4014 = vpop.trf.xlu0
        %v4015 = vpop.trf.xlu0
        %v4016 = vpop.trf.xlu0
        %v4017 = vpop.trf.xlu0
        %v4018 = vpop.trf.xlu0
        %v4019 = vpop.trf.xlu0
        %v4020 = vpop.trf.xlu0
        %v4021 = vpop.trf.xlu0
        %v4022 = vpop.trf.xlu0
        %v4023 = vpop.trf.xlu0
        %v4024 = vpop.trf.xlu0
        %v4025 = vpop.trf.xlu0
        %v4026 = vpop.trf.xlu0
        %v4027 = vpop.trf.xlu0
        %v4028 = vpop.trf.xlu0
        %4029 = vxpose.xlu0.b32.start [1/16] %v3821, 128
        %4030 = vxpose.xlu0.b32.cont [2/16] %v3822, 128
        %4031 = vxpose.xlu0.b32.cont [3/16] %v3823, 128
        %4032 = vxpose.xlu0.b32.cont [4/16] %v3824, 128
        %4033 = vxpose.xlu0.b32.cont [5/16] %v3825, 128
        %4034 = vxpose.xlu0.b32.cont [6/16] %v3826, 128
        %4035 = vxpose.xlu0.b32.cont [7/16] %v3827, 128
        %4036 = vxpose.xlu0.b32.cont [8/16] %v3828, 128
        %4037 = vxpose.xlu0.b32.cont [9/16] %v3829, 128
        %4038 = vxpose.xlu0.b32.cont [10/16] %v3830, 128
        %4039 = vxpose.xlu0.b32.cont [11/16] %v3831, 128
        %4040 = vxpose.xlu0.b32.cont [12/16] %v3832, 128
        %4041 = vxpose.xlu0.b32.cont [13/16] %v3833, 128
        %4042 = vxpose.xlu0.b32.cont [14/16] %v3834, 128
        %4043 = vxpose.xlu0.b32.cont [15/16] %v3835, 128
        %4044 = vxpose.xlu0.b32.end [16/16] %v3836, 128
        %v4045 = vpop.trf.xlu0
        %v4046 = vpop.trf.xlu0
        %v4047 = vpop.trf.xlu0
        %v4048 = vpop.trf.xlu0
        %v4049 = vpop.trf.xlu0
        %v4050 = vpop.trf.xlu0
        %v4051 = vpop.trf.xlu0
        %v4052 = vpop.trf.xlu0
        %v4053 = vpop.trf.xlu0
        %v4054 = vpop.trf.xlu0
        %v4055 = vpop.trf.xlu0
        %v4056 = vpop.trf.xlu0
        %v4057 = vpop.trf.xlu0
        %v4058 = vpop.trf.xlu0
        %v4059 = vpop.trf.xlu0
        %v4060 = vpop.trf.xlu0
        %4061 = vxpose.xlu0.b32.start [1/16] %v3837, 128
        %4062 = vxpose.xlu0.b32.cont [2/16] %v3838, 128
        %4063 = vxpose.xlu0.b32.cont [3/16] %v3839, 128
        %4064 = vxpose.xlu0.b32.cont [4/16] %v3840, 128
        %4065 = vxpose.xlu0.b32.cont [5/16] %v3841, 128
        %4066 = vxpose.xlu0.b32.cont [6/16] %v3842, 128
        %4067 = vxpose.xlu0.b32.cont [7/16] %v3843, 128
        %4068 = vxpose.xlu0.b32.cont [8/16] %v3844, 128
        %4069 = vxpose.xlu0.b32.cont [9/16] %v3845, 128
        %4070 = vxpose.xlu0.b32.cont [10/16] %v3846, 128
        %4071 = vxpose.xlu0.b32.cont [11/16] %v3847, 128
        %4072 = vxpose.xlu0.b32.cont [12/16] %v3848, 128
        %4073 = vxpose.xlu0.b32.cont [13/16] %v3849, 128
        %4074 = vxpose.xlu0.b32.cont [14/16] %v3850, 128
        %4075 = vxpose.xlu0.b32.cont [15/16] %v3851, 128
        %4076 = vxpose.xlu0.b32.end [16/16] %v3852, 128
        %v4077 = vpop.trf.xlu0
        %v4078 = vpop.trf.xlu0
        %v4079 = vpop.trf.xlu0
        %v4080 = vpop.trf.xlu0
        %v4081 = vpop.trf.xlu0
        %v4082 = vpop.trf.xlu0
        %v4083 = vpop.trf.xlu0
        %v4084 = vpop.trf.xlu0
        %v4085 = vpop.trf.xlu0
        %v4086 = vpop.trf.xlu0
        %v4087 = vpop.trf.xlu0
        %v4088 = vpop.trf.xlu0
        %v4089 = vpop.trf.xlu0
        %v4090 = vpop.trf.xlu0
        %v4091 = vpop.trf.xlu0
        %v4092 = vpop.trf.xlu0
        %4093 = vxpose.xlu0.b32.start [1/16] %v3853, 128
        %4094 = vxpose.xlu0.b32.cont [2/16] %v3854, 128
        %4095 = vxpose.xlu0.b32.cont [3/16] %v3855, 128
        %4096 = vxpose.xlu0.b32.cont [4/16] %v3856, 128
        %4097 = vxpose.xlu0.b32.cont [5/16] %v3857, 128
        %4098 = vxpose.xlu0.b32.cont [6/16] %v3858, 128
        %4099 = vxpose.xlu0.b32.cont [7/16] %v3859, 128
        %4100 = vxpose.xlu0.b32.cont [8/16] %v3860, 128
        %4101 = vxpose.xlu0.b32.cont [9/16] %v3861, 128
        %4102 = vxpose.xlu0.b32.cont [10/16] %v3862, 128
        %4103 = vxpose.xlu0.b32.cont [11/16] %v3863, 128
        %4104 = vxpose.xlu0.b32.cont [12/16] %v3864, 128
        %4105 = vxpose.xlu0.b32.cont [13/16] %v3865, 128
        %4106 = vxpose.xlu0.b32.cont [14/16] %v3866, 128
        %4107 = vxpose.xlu0.b32.cont [15/16] %v3867, 128
        %4108 = vxpose.xlu0.b32.end [16/16] %v3868, 128
        %v4109 = vpop.trf.xlu0
        %v4110 = vpop.trf.xlu0
        %v4111 = vpop.trf.xlu0
        %v4112 = vpop.trf.xlu0
        %v4113 = vpop.trf.xlu0
        %v4114 = vpop.trf.xlu0
        %v4115 = vpop.trf.xlu0
        %v4116 = vpop.trf.xlu0
        %v4117 = vpop.trf.xlu0
        %v4118 = vpop.trf.xlu0
        %v4119 = vpop.trf.xlu0
        %v4120 = vpop.trf.xlu0
        %v4121 = vpop.trf.xlu0
        %v4122 = vpop.trf.xlu0
        %v4123 = vpop.trf.xlu0
        %v4124 = vpop.trf.xlu0
        %v4125 = vlaneseq
        %v4126 = vshrl.u32 %v4125, 7
        %v4127 = vsub.s32 0, %v4126
        %v4128 = vrot.slane %v3885, %v4127
        %v4129 = vlaneseq
        %v4130 = vshrl.u32 %v4129, 7
        %v4131 = vsub.s32 0, %v4130
        %v4132 = vrot.slane %v3917, %v4131
        %v4133 = vlaneseq
        %v4134 = vshrl.u32 %v4133, 7
        %v4135 = vsub.s32 0, %v4134
        %v4136 = vrot.slane %v3949, %v4135
        %v4137 = vlaneseq
        %v4138 = vshrl.u32 %v4137, 7
        %v4139 = vsub.s32 0, %v4138
        %v4140 = vrot.slane %v3981, %v4139
        %v4141 = vlaneseq
        %v4142 = vshrl.u32 %v4141, 7
        %v4143 = vsub.s32 0, %v4142
        %v4144 = vrot.slane %v4013, %v4143
        %v4145 = vlaneseq
        %v4146 = vshrl.u32 %v4145, 7
        %v4147 = vsub.s32 0, %v4146
        %v4148 = vrot.slane %v4045, %v4147
        %v4149 = vlaneseq
        %v4150 = vshrl.u32 %v4149, 7
        %v4151 = vsub.s32 0, %v4150
        %v4152 = vrot.slane %v4077, %v4151
        %v4153 = vlaneseq
        %v4154 = vshrl.u32 %v4153, 7
        %v4155 = vsub.s32 0, %v4154
        %v4156 = vrot.slane %v4109, %v4155
        %v4157 = vmul.f32 %v3564, %v4128
        %v4158 = vmul.f32 %v3566, %v4132
        %v4159 = vmul.f32 %v3568, %v4128
        %v4160 = vmul.f32 %v3570, %v4132
        %v4161 = vmul.f32 %v3574, %v4128
        %v4162 = vmul.f32 %v3576, %v4132
        %v4163 = vmul.f32 %v3578, %v4128
        %v4164 = vmul.f32 %v3580, %v4132
        %v4165 = vmul.f32 %v3617, %v4136
        %v4166 = vmul.f32 %v3619, %v4140
        %v4167 = vmul.f32 %v3621, %v4136
        %v4168 = vmul.f32 %v3623, %v4140
        %v4169 = vmul.f32 %v3627, %v4136
        %v4170 = vmul.f32 %v3629, %v4140
        %v4171 = vmul.f32 %v3631, %v4136
        %v4172 = vmul.f32 %v3633, %v4140
        %v4173 = vmul.f32 %v3670, %v4144
        %v4174 = vmul.f32 %v3672, %v4148
        %v4175 = vmul.f32 %v3674, %v4144
        %v4176 = vmul.f32 %v3676, %v4148
        %v4177 = vmul.f32 %v3680, %v4144
        %v4178 = vmul.f32 %v3682, %v4148
        %v4179 = vmul.f32 %v3684, %v4144
        %v4180 = vmul.f32 %v3686, %v4148
        %v4181 = vmul.f32 %v3723, %v4152
        %v4182 = vmul.f32 %v3725, %v4156
        %v4183 = vmul.f32 %v3727, %v4152
        %v4184 = vmul.f32 %v3729, %v4156
        %v4185 = vmul.f32 %v3733, %v4152
        %v4186 = vmul.f32 %v3735, %v4156
        %v4187 = vmul.f32 %v3737, %v4152
        %v4188 = vmul.f32 %v3739, %v4156
        %v4189 = vpack.c.bf16 %v4159, %v4157
        %v4190 = vpack.c.bf16 %v4160, %v4158
        %v4191 = vpack.c.bf16 %v4163, %v4161
        %v4192 = vpack.c.bf16 %v4164, %v4162
        %v4193 = vpack.c.bf16 %v4167, %v4165
        %v4194 = vpack.c.bf16 %v4168, %v4166
        %v4195 = vpack.c.bf16 %v4171, %v4169
        %v4196 = vpack.c.bf16 %v4172, %v4170
        %v4197 = vpack.c.bf16 %v4175, %v4173
        %v4198 = vpack.c.bf16 %v4176, %v4174
        %v4199 = vpack.c.bf16 %v4179, %v4177
        %v4200 = vpack.c.bf16 %v4180, %v4178
        %v4201 = vpack.c.bf16 %v4183, %v4181
        %v4202 = vpack.c.bf16 %v4184, %v4182
        %v4203 = vpack.c.bf16 %v4187, %v4185
        %v4204 = vpack.c.bf16 %v4188, %v4186
        %v4205 = vld [vmem:[%s2] sm:$0x3]
        %v4206 = vld [vmem:[%s3] sm:$0xf]
        %4208 = vset.pattern.permute.xlu0 0
        %4209 = vperm.xlu0 %4208, %v4206
        %v4210 = vpop.permute.xlu0 %4209
        %4212 = vmatprep.subr.bf16.mxu0 %v4190
        %4213 = vmatpush1.bf16.msra.mxu0 %v4189
        %4214 = vmatprep.subr.bf16.mxu0 %v4192
        %4215 = vmatpush1.bf16.msra.mxu0 %v4191
        %4216 = vmatprep.subr.bf16.mxu0 %v4194
        %4217 = vmatpush1.bf16.msra.mxu0 %v4193
        %4218 = vmatprep.subr.bf16.mxu0 %v4196
        %4219 = vmatpush1.bf16.msra.mxu0 %v4195
        %4220 = vmatprep.subr.bf16.mxu0 %v4198
        %4221 = vmatpush1.bf16.msra.mxu0 %v4197
        %4222 = vmatprep.subr.bf16.mxu0 %v4200
        %4223 = vmatpush1.bf16.msra.mxu0 %v4199
        %4224 = vmatprep.subr.bf16.mxu0 %v4202
        %4225 = vmatpush1.bf16.msra.mxu0 %v4201
        %4226 = vmatprep.subr.bf16.mxu0 %v4204
        %4227 = vmatpush1.bf16.msra.mxu0 %v4203
        %4228 = vmatprep.subr.bf16.mxu0 0
        %4229 = vmatpush1.bf16.msra.mxu0 0
        %4230 = vmatprep.subr.bf16.mxu0 0
        %4231 = vmatpush1.bf16.msra.mxu0 0
        %4232 = vmatprep.subr.bf16.mxu0 0
        %4233 = vmatpush1.bf16.msra.mxu0 0
        %4234 = vmatprep.subr.bf16.mxu0 0
        %4235 = vmatpush1.bf16.msra.mxu0 0
        %4236 = vmatprep.subr.bf16.mxu0 0
        %4237 = vmatpush1.bf16.msra.mxu0 0
        %4238 = vmatprep.subr.bf16.mxu0 0
        %4239 = vmatpush1.bf16.msra.mxu0 0
        %4240 = vmatprep.subr.bf16.mxu0 0
        %4241 = vmatpush1.bf16.msra.mxu0 0
        %4242 = vmatprep.subr.bf16.mxu0 0
        %4243 = vmatpush1.bf16.msra.mxu0 0
        %4244 = vmatprep.mubr.bf16.mxu0 0
        %4245 = vmatmul.mubr.bf16.gmra.mrb[0].mxu0 %v4205
        %v4246 = vpop.f32.mrb[0].mxu0
        %v4247 = vadd.f32 %v4210, %v4246
        %v4248 = vpop.f32.mrb[0].mxu0
        %v4249 = vadd.f32 %v4210, %v4248
        %v4250 = vpop.f32.mrb[0].mxu0
        %v4251 = vpop.f32.mrb[0].mxu0
        %4252 = vdwg.mxu0
        %v4255 = vcombine.low %v4247, %v4249
        %4257 = vst [vmem:[%s190] sm:$0xff] %v4255
        %s4258 = sand.u32 %s115, 1
        %s4259 = scalar_lea.sflag [#allocation3], %s4258
        %s4260 = sand.u32 %s115, 1
        %s4261 = smul.addr %s4260, 8
        %s4262 = scalar_lea.vmem [#allocation2], %s4261
        // Predicated region
        $region37: #{tpu_custom_call.1} parent=35 // pred_check
          %p4263 = pneg %p125
        $region38: #{tpu_custom_call.1} parent=35 // pred_check_branch
          %4265 = sbr.rel (%p4263) target = $region40
        $region39: #{tpu_custom_call.1} parent=35 // pred_region
          %s4267 = ssub.s32 128, 128
          %4268 = vsyncadd %s4259, %s4267
          %s4269 = smul.addr %s18, 2
          %s4270 = smul.addr %s4269, 64
          %s4271 = scalar_lea.hbm %s4, %s4270
          %s4273 = sshll.u32 %s4262, 4
          %s4274 = int_to_ptr.vmem [resolvable:$true] %s4273
          %4276 = dma.vmem_to_hbm [thread:$0]  %s4274, 128, %s4271, %s4259
        $region40: #{tpu_custom_call.1} parent=35 // pred_fallthru
          _
      $region36: #{tpu_custom_call.1} parent=5 // pred_fallthru
        _
      %p4277 = scmp.le.s32.totalorder 2, %s13
      // Predicated region
      $region41: #{tpu_custom_call.1} parent=5 // pred_check
        %p4278 = pneg %p4277
      $region42: #{tpu_custom_call.1} parent=5 // pred_check_branch
        %4280 = sbr.rel (%p4278) target = $region44
      $region43: #{tpu_custom_call.1} parent=5 // pred_region
        %s4281 = ssub.s32 %s13, 2
        // Predicated region
        $region45: #{tpu_custom_call.1} parent=43 // pred_check
          %p4282 = pneg %p131
        $region46: #{tpu_custom_call.1} parent=43 // pred_check_branch
          %4284 = sbr.rel (%p4282) target = $region48
        $region47: #{tpu_custom_call.1} parent=43 // pred_region
          %s4285 = sand.u32 %s116, 1
          %s4286 = scalar_lea.sflag [#allocation3], %s4285
          %s4287 = sand.u32 %s116, 1
          %s4288 = smul.addr %s4287, 8
          %s4289 = scalar_lea.vmem [#allocation2], %s4288
          %4290 = dma.done %s4286, 128
        $region48: #{tpu_custom_call.1} parent=43 // pred_fallthru
          _
      $region44: #{tpu_custom_call.1} parent=5 // pred_fallthru
        _
    $region6: #{tpu_custom_call.1} parent=1 // loop_footer
      %s17 = sadd.s32 1, %s13
    $region7: #{tpu_custom_call.1} parent=1 // loop_footer_branch
      %12 = sbr.rel target = $region3
    $region8: #{tpu_custom_call.1} parent=1 // loop_exit
      _
    %4291 = vsyncpa [#allocation3], 1
    %s4292 = scalar_lea.sflag [#allocation3], 1
    %4293 = vsyncpa %s4292, 1

</llo_original>
